<compile_context>
chip_gen: v7x
topology: tpu7x:2x2x1
jax: 0.10.0
libtpu: 0.0.40
codegen_flags: <defaults>
</compile_context>

<pallas_src>
import functools

import jax
import jax.numpy as jnp
from jax.experimental import pallas as pl
from jax.experimental.pallas import tpu as pltpu

# ----------------------------- config ---------------------------------------
B = 2      # batch (n_cls prompts)
S = 8      # sequence length (n_ctx)
D = 64     # transformer width
H = 4      # attention heads
L = 2      # transformer layers
P = 32     # text_projection output dim
EPS = 1e-5
NEG = -1e30  # causal-mask fill (matches -inf semantics after softmax)


# ----------------------------- kernel ----------------------------------------
def _ln(v, g, b):
    mu = jnp.mean(v, axis=-1, keepdims=True)
    var = jnp.mean((v - mu) ** 2, axis=-1, keepdims=True)
    return (v - mu) * jax.lax.rsqrt(var + EPS) * g + b


def text_encoder_kernel(eot_ref, prompts_ref, pos_ref,
                        ln1g_ref, ln1b_ref, wqkv_ref, bqkv_ref, wo_ref, bo_ref,
                        ln2g_ref, ln2b_ref, wfc_ref, bfc_ref, wpr_ref, bpr_ref,
                        lnfg_ref, lnfb_ref, proj_ref,
                        o_ref, x_scratch, *, heads, layers):
    b, s, d = prompts_ref.shape
    hd = d // heads
    scale = 1.0 / (hd ** 0.5)

    # x = prompts + positional_embedding
    x = prompts_ref[...] + pos_ref[...][None, :, :]            # (B, S, D)
    x2 = x.reshape(b * s, d)                                    # (B*S, D) slab

    # Causal mask, built once for all layers / heads.
    rows_i = jax.lax.broadcasted_iota(jnp.int32, (s, s), 0)
    cols_i = jax.lax.broadcasted_iota(jnp.int32, (s, s), 1)
    mask = jnp.where(cols_i > rows_i, NEG, 0.0).astype(jnp.float32)[None]   # (1, S, S)

    for l in range(layers):                                     # unrolled; weights VMEM-resident
        # ---- attention branch (pre-LN, causal MHA) ----------------------
        xn = _ln(x2, ln1g_ref[l], ln1b_ref[l])
        qkv = jnp.dot(xn, wqkv_ref[l],
                      preferred_element_type=jnp.float32) + bqkv_ref[l]     # (B*S, 3D)
        wo_l = wo_ref[l]                                        # (D, D)
        attn = jnp.zeros((b * s, d), jnp.float32)
        for h in range(heads):
            qh = (qkv[:, h * hd:(h + 1) * hd] * scale).reshape(b, s, hd)
            kh = qkv[:, d + h * hd: d + (h + 1) * hd].reshape(b, s, hd)
            vh = qkv[:, 2 * d + h * hd: 2 * d + (h + 1) * hd].reshape(b, s, hd)
            sc = jnp.einsum('bqe,bke->bqk', qh, kh,
                            preferred_element_type=jnp.float32) + mask       # (B, S, S)
            sc = sc - jnp.max(sc, axis=-1, keepdims=True)
            p = jnp.exp(sc)
            p = p * pl.reciprocal(jnp.sum(p, axis=-1, keepdims=True), approx=True)
            oh = jnp.einsum('bqk,bke->bqe', p, vh,
                            preferred_element_type=jnp.float32)              # (B, S, hd)
            # Fold output projection per head: attn @ Wo == sum_h oh @ Wo[h*hd:(h+1)*hd]
            attn = attn + jnp.dot(oh.reshape(b * s, hd),
                                  wo_l[h * hd:(h + 1) * hd, :],
                                  preferred_element_type=jnp.float32)
        x2 = x2 + attn + bo_ref[l]

        # ---- MLP branch (QuickGELU) --------------------------------------
        xn2 = _ln(x2, ln2g_ref[l], ln2b_ref[l])
        hid = jnp.dot(xn2, wfc_ref[l],
                      preferred_element_type=jnp.float32) + bfc_ref[l]
        hid = hid * jax.nn.sigmoid(1.702 * hid)                 # QuickGELU
        x2 = x2 + jnp.dot(hid, wpr_ref[l],
                          preferred_element_type=jnp.float32) + bpr_ref[l]

    # ---- ln_final + EOT gather + text_projection -------------------------
    x_scratch[...] = x2
    for bi in range(b):
        # Direct dynamic row read using the SMEM EOT index (no one-hot gather).
        row = x_scratch[pl.ds(bi * s + eot_ref[bi], 1), :]       # (1, D)
        xn = _ln(row, lnfg_ref[...], lnfb_ref[...])
        o_ref[pl.ds(bi, 1), :] = jnp.dot(xn, proj_ref[...],
                                         preferred_element_type=jnp.float32)  # (1, 128)


# ----------------------------- wrapper ---------------------------------------
def text_encoder_forward(prompts, tokenized_prompts, params):
    b, s, d = prompts.shape
    p = params['proj'].shape[1]
    p_pad = ((p + 127) // 128) * 128                 # lane-dense final store
    proj_pad = jnp.pad(params['proj'], ((0, 0), (0, p_pad - p)))
    eot_idx = jnp.argmax(tokenized_prompts, axis=-1).astype(jnp.int32)

    # Stack per-layer weights on a leading L axis so the kernel can index them.
    stacked = {k: jnp.stack([lp[k] for lp in params['layers']])
               for k in params['layers'][0]}

    vmem = pl.BlockSpec(memory_space=pltpu.MemorySpace.VMEM)
    smem = pl.BlockSpec(memory_space=pltpu.MemorySpace.SMEM)

    out = pl.pallas_call(
        functools.partial(text_encoder_kernel, heads=H,
                          layers=len(params['layers'])),
        out_shape=jax.ShapeDtypeStruct((b, p_pad), jnp.float32),
        in_specs=[smem] + [vmem] * 17,
        out_specs=vmem,
        scratch_shapes=[pltpu.VMEM((b * s, d), jnp.float32)],
    )(eot_idx, prompts, params['pos'],
      stacked['ln1_g'], stacked['ln1_b'], stacked['wqkv'], stacked['bqkv'],
      stacked['wo'], stacked['bo'], stacked['ln2_g'], stacked['ln2_b'],
      stacked['wfc'], stacked['bfc'], stacked['wpr'], stacked['bpr'],
      params['lnf_g'], params['lnf_b'], proj_pad)
    return out[:, :p]


# ----------------------------- reference (pure JAX) ---------------------------
def reference(prompts, tokenized_prompts, params):
    x = prompts + params['pos'][None]
    hd = D // H
    scale = 1.0 / (hd ** 0.5)
    rows = jnp.arange(S)[:, None]
    cols = jnp.arange(S)[None, :]
    mask = jnp.where(cols > rows, NEG, 0.0).astype(jnp.float32)
    for lp in params['layers']:
        xn = _ln(x, lp['ln1_g'], lp['ln1_b'])
        qkv = xn @ lp['wqkv'] + lp['bqkv']
        q, k, v = qkv[..., :D], qkv[..., D:2 * D], qkv[..., 2 * D:]
        outs = []
        for h in range(H):
            qh = q[..., h * hd:(h + 1) * hd] * scale
            kh = k[..., h * hd:(h + 1) * hd]
            vh = v[..., h * hd:(h + 1) * hd]
            sc = jnp.einsum('bqd,bkd->bqk', qh, kh) + mask[None]
            sc = sc - jnp.max(sc, axis=-1, keepdims=True)
            pr = jnp.exp(sc)
            pr = pr / jnp.sum(pr, axis=-1, keepdims=True)
            outs.append(jnp.einsum('bqk,bkd->bqd', pr, vh))
        attn = jnp.concatenate(outs, axis=-1) @ lp['wo'] + lp['bo']
        x = x + attn
        xn2 = _ln(x, lp['ln2_g'], lp['ln2_b'])
        hdn = xn2 @ lp['wfc'] + lp['bfc']
        hdn = hdn * jax.nn.sigmoid(1.702 * hdn)
        x = x + hdn @ lp['wpr'] + lp['bpr']
    eot = jnp.argmax(tokenized_prompts, axis=-1)
    sel = x[jnp.arange(x.shape[0]), eot]
    sel = _ln(sel, params['lnf_g'][0], params['lnf_b'][0])
    return sel @ params['proj']


# ----------------------------- params ----------------------------------------
def init_params(key):
    # 4 top-level tensors + 12 tensors per layer (plus a few spare keys).
    keys = iter(jax.random.split(key, 12 * L + 8))

    def nrm(shape, sc=0.02):
        return jax.random.normal(next(keys), shape, jnp.float32) * sc

    params = {
        'pos': nrm((S, D), 0.01),
        'lnf_g': 1.0 + nrm((1, D), 0.05),
        'lnf_b': nrm((1, D), 0.05),
        'proj': nrm((D, P)),
        'layers': [],
    }
    for _ in range(L):
        params['layers'].append({
            'ln1_g': 1.0 + nrm((1, D), 0.05),
            'ln1_b': nrm((1, D), 0.05),
            'wqkv': nrm((D, 3 * D)),        # stored as (in, out)
            'bqkv': nrm((1, 3 * D), 0.01),
            'wo':   nrm((D, D)),
            'bo':   nrm((1, D), 0.01),
            'ln2_g': 1.0 + nrm((1, D), 0.05),
            'ln2_b': nrm((1, D), 0.05),
            'wfc':  nrm((D, 4 * D)),
            'bfc':  nrm((1, 4 * D), 0.01),
            'wpr':  nrm((4 * D, D)),
            'bpr':  nrm((1, D), 0.01),
        })
    return params


# ----------------------------- main -------------------------------------------
if __name__ == "__main__":
    key = jax.random.PRNGKey(0)
    k_prompts, k_tok, k_params = jax.random.split(key, 3)

    prompts = jax.random.normal(k_prompts, (B, S, D), jnp.float32)
    tokenized_prompts = jax.random.randint(k_tok, (B, S), 1, 1000).astype(jnp.int32)
    params = init_params(k_params)

    out = text_encoder_forward(prompts, tokenized_prompts, params)
    out = jax.block_until_ready(out)

    ref = reference(prompts, tokenized_prompts, params)
    assert out.shape == (B, P), out.shape
    # tolerance slightly looser than 1e-3 to accommodate the EUP approximate
    # reciprocal used in the softmax denominator.
    err = float(jnp.max(jnp.abs(out - ref)))
    assert err < 2e-3, err

    print("KERNEL_OK")
</pallas_src>

<mosaic_0001>
module attributes {stable_mosaic.version = 11 : i64} {
  func.func @text_encoder_kernel(%arg0: memref<2xi32, #tpu.memory_space<smem>>, %arg1: memref<2x8x64xf32, #tpu.memory_space<vmem>>, %arg2: memref<8x64xf32, #tpu.memory_space<vmem>>, %arg3: memref<2x1x64xf32, #tpu.memory_space<vmem>>, %arg4: memref<2x1x64xf32, #tpu.memory_space<vmem>>, %arg5: memref<2x64x192xf32, #tpu.memory_space<vmem>>, %arg6: memref<2x1x192xf32, #tpu.memory_space<vmem>>, %arg7: memref<2x64x64xf32, #tpu.memory_space<vmem>>, %arg8: memref<2x1x64xf32, #tpu.memory_space<vmem>>, %arg9: memref<2x1x64xf32, #tpu.memory_space<vmem>>, %arg10: memref<2x1x64xf32, #tpu.memory_space<vmem>>, %arg11: memref<2x64x256xf32, #tpu.memory_space<vmem>>, %arg12: memref<2x1x256xf32, #tpu.memory_space<vmem>>, %arg13: memref<2x256x64xf32, #tpu.memory_space<vmem>>, %arg14: memref<2x1x64xf32, #tpu.memory_space<vmem>>, %arg15: memref<1x64xf32, #tpu.memory_space<vmem>>, %arg16: memref<1x64xf32, #tpu.memory_space<vmem>>, %arg17: memref<64x128xf32, #tpu.memory_space<vmem>>, %arg18: memref<2x128xf32, #tpu.memory_space<vmem>>, %arg19: memref<16x64xf32, #tpu.memory_space<vmem>>) attributes {dimension_semantics = [], scalar_prefetch = 0 : i64, scratch_operands = 1 : i64, tpu.core_type = #tpu.core_type<tc>} {
    %c0 = arith.constant 0 : index
    %c0_0 = arith.constant 0 : index
    %c0_1 = arith.constant 0 : index
    %0 = vector.load %arg1[%c0, %c0_0, %c0_1] : memref<2x8x64xf32, #tpu.memory_space<vmem>>, vector<2x8x64xf32>
    %c0_2 = arith.constant 0 : index
    %c0_3 = arith.constant 0 : index
    %1 = vector.load %arg2[%c0_2, %c0_3] : memref<8x64xf32, #tpu.memory_space<vmem>>, vector<8x64xf32>
    %2 = vector.shape_cast %1 : vector<8x64xf32> to vector<1x8x64xf32>
    %3 = vector.broadcast %2 : vector<1x8x64xf32> to vector<2x8x64xf32>
    %4 = arith.addf %0, %3 : vector<2x8x64xf32>
    %5 = vector.shape_cast %4 : vector<2x8x64xf32> to vector<16x64xf32>
    %6 = tpu.iota {dimensions = array<i32: 0>} : vector<8x8xi32>
    %7 = tpu.iota {dimensions = array<i32: 1>} : vector<8x8xi32>
    %8 = arith.cmpi sgt, %7, %6 : vector<8x8xi32>
    %cst = arith.constant -1.000000e+30 : f32
    %cst_4 = arith.constant 0.000000e+00 : f32
    %9 = vector.broadcast %cst : f32 to vector<8x8xf32>
    %10 = vector.broadcast %cst_4 : f32 to vector<8x8xf32>
    %11 = arith.select %8, %9, %10 : vector<8x8xi1>, vector<8x8xf32>
    %12 = vector.shape_cast %11 : vector<8x8xf32> to vector<1x8x8xf32>
    %c0_5 = arith.constant 0 : index
    %c0_6 = arith.constant 0 : index
    %c0_7 = arith.constant 0 : index
    %13 = vector.load %arg3[%c0_5, %c0_6, %c0_7] : memref<2x1x64xf32, #tpu.memory_space<vmem>>, vector<1x1x64xf32>
    %14 = vector.shape_cast %13 : vector<1x1x64xf32> to vector<1x64xf32>
    %c0_8 = arith.constant 0 : index
    %c0_9 = arith.constant 0 : index
    %c0_10 = arith.constant 0 : index
    %15 = vector.load %arg4[%c0_8, %c0_9, %c0_10] : memref<2x1x64xf32, #tpu.memory_space<vmem>>, vector<1x1x64xf32>
    %16 = vector.shape_cast %15 : vector<1x1x64xf32> to vector<1x64xf32>
    %cst_11 = arith.constant dense<0.000000e+00> : vector<16xf32>
    %17 = vector.multi_reduction <add>, %5, %cst_11 [1] : vector<16x64xf32> to vector<16xf32>
    %18 = vector.shape_cast %17 : vector<16xf32> to vector<16x1xf32>
    %cst_12 = arith.constant 6.400000e+01 : f32
    %19 = vector.broadcast %cst_12 : f32 to vector<16x1xf32>
    %20 = arith.divf %18, %19 : vector<16x1xf32>
    %21 = vector.broadcast %20 : vector<16x1xf32> to vector<16x64xf32>
    %22 = arith.subf %5, %21 : vector<16x64xf32>
    %23 = arith.mulf %22, %22 : vector<16x64xf32>
    %cst_13 = arith.constant dense<0.000000e+00> : vector<16xf32>
    %24 = vector.multi_reduction <add>, %23, %cst_13 [1] : vector<16x64xf32> to vector<16xf32>
    %25 = vector.shape_cast %24 : vector<16xf32> to vector<16x1xf32>
    %cst_14 = arith.constant 6.400000e+01 : f32
    %26 = vector.broadcast %cst_14 : f32 to vector<16x1xf32>
    %27 = arith.divf %25, %26 : vector<16x1xf32>
    %28 = vector.broadcast %20 : vector<16x1xf32> to vector<16x64xf32>
    %29 = arith.subf %5, %28 : vector<16x64xf32>
    %cst_15 = arith.constant 9.99999974E-6 : f32
    %30 = vector.broadcast %cst_15 : f32 to vector<16x1xf32>
    %31 = arith.addf %27, %30 : vector<16x1xf32>
    %32 = math.rsqrt %31 : vector<16x1xf32>
    %33 = vector.broadcast %32 : vector<16x1xf32> to vector<16x64xf32>
    %34 = arith.mulf %29, %33 : vector<16x64xf32>
    %35 = vector.broadcast %14 : vector<1x64xf32> to vector<16x64xf32>
    %36 = arith.mulf %34, %35 : vector<16x64xf32>
    %37 = vector.broadcast %16 : vector<1x64xf32> to vector<16x64xf32>
    %38 = arith.addf %36, %37 : vector<16x64xf32>
    %c0_16 = arith.constant 0 : index
    %c0_17 = arith.constant 0 : index
    %c0_18 = arith.constant 0 : index
    %39 = vector.load %arg5[%c0_16, %c0_17, %c0_18] : memref<2x64x192xf32, #tpu.memory_space<vmem>>, vector<1x64x192xf32>
    %40 = vector.shape_cast %39 : vector<1x64x192xf32> to vector<64x192xf32>
    %cst_19 = arith.constant dense<0.000000e+00> : vector<16x192xf32>
    %41 = tpu.matmul %38, %40, %cst_19 {dimension_numbers = #tpu.dot_dimension_numbers<[1], [0], [0], [1], [0, 0, 1, 1], [], []>} : vector<16x64xf32>, vector<64x192xf32>, vector<16x192xf32> -> vector<16x192xf32>
    %c0_20 = arith.constant 0 : index
    %c0_21 = arith.constant 0 : index
    %c0_22 = arith.constant 0 : index
    %42 = vector.load %arg6[%c0_20, %c0_21, %c0_22] : memref<2x1x192xf32, #tpu.memory_space<vmem>>, vector<1x1x192xf32>
    %43 = vector.shape_cast %42 : vector<1x1x192xf32> to vector<1x192xf32>
    %44 = vector.broadcast %43 : vector<1x192xf32> to vector<16x192xf32>
    %45 = arith.addf %41, %44 : vector<16x192xf32>
    %c0_23 = arith.constant 0 : index
    %c0_24 = arith.constant 0 : index
    %c0_25 = arith.constant 0 : index
    %46 = vector.load %arg7[%c0_23, %c0_24, %c0_25] : memref<2x64x64xf32, #tpu.memory_space<vmem>>, vector<1x64x64xf32>
    %47 = vector.shape_cast %46 : vector<1x64x64xf32> to vector<64x64xf32>
    %cst_26 = arith.constant 0.000000e+00 : f32
    %48 = vector.broadcast %cst_26 : f32 to vector<16x64xf32>
    %49 = vector.extract_strided_slice %45 {offsets = [0, 0], sizes = [16, 16], strides = [1, 1]} : vector<16x192xf32> to vector<16x16xf32>
    %cst_27 = arith.constant 2.500000e-01 : f32
    %50 = vector.broadcast %cst_27 : f32 to vector<16x16xf32>
    %51 = arith.mulf %49, %50 : vector<16x16xf32>
    %52 = vector.shape_cast %51 : vector<16x16xf32> to vector<2x8x16xf32>
    %53 = vector.extract_strided_slice %45 {offsets = [0, 64], sizes = [16, 16], strides = [1, 1]} : vector<16x192xf32> to vector<16x16xf32>
    %54 = vector.shape_cast %53 : vector<16x16xf32> to vector<2x8x16xf32>
    %55 = vector.extract_strided_slice %45 {offsets = [0, 128], sizes = [16, 16], strides = [1, 1]} : vector<16x192xf32> to vector<16x16xf32>
    %56 = vector.shape_cast %55 : vector<16x16xf32> to vector<2x8x16xf32>
    "tpu.trace_start"() <{level = 10 : i32, message = "bqe,bke->bqk"}> : () -> ()
    %cst_28 = arith.constant dense<0.000000e+00> : vector<2x8x8xf32>
    %57 = tpu.matmul %52, %54, %cst_28 {dimension_numbers = #tpu.dot_dimension_numbers<[2], [2], [1], [1], [0, 0, 0, 1, 1, 1], [0], [0]>} : vector<2x8x16xf32>, vector<2x8x16xf32>, vector<2x8x8xf32> -> vector<2x8x8xf32>
    "tpu.trace_stop"() : () -> ()
    %58 = vector.broadcast %12 : vector<1x8x8xf32> to vector<2x8x8xf32>
    %59 = arith.addf %57, %58 : vector<2x8x8xf32>
    %cst_29 = arith.constant dense<0xFF800000> : vector<2x8xf32>
    %60 = vector.multi_reduction <maximumf>, %59, %cst_29 [2] : vector<2x8x8xf32> to vector<2x8xf32>
    %61 = vector.shape_cast %60 : vector<2x8xf32> to vector<2x8x1xf32>
    %62 = vector.broadcast %61 : vector<2x8x1xf32> to vector<2x8x8xf32>
    %63 = arith.subf %59, %62 : vector<2x8x8xf32>
    %64 = math.exp %63 : vector<2x8x8xf32>
    %cst_30 = arith.constant dense<0.000000e+00> : vector<2x8xf32>
    %65 = vector.multi_reduction <add>, %64, %cst_30 [2] : vector<2x8x8xf32> to vector<2x8xf32>
    %66 = vector.shape_cast %65 : vector<2x8xf32> to vector<2x8x1xf32>
    %67 = tpu.reciprocal %66 {approx = true} : vector<2x8x1xf32> -> vector<2x8x1xf32>
    %68 = vector.broadcast %67 : vector<2x8x1xf32> to vector<2x8x8xf32>
    %69 = arith.mulf %64, %68 : vector<2x8x8xf32>
    "tpu.trace_start"() <{level = 10 : i32, message = "bqk,bke->bqe"}> : () -> ()
    %cst_31 = arith.constant dense<0.000000e+00> : vector<2x8x16xf32>
    %70 = tpu.matmul %69, %56, %cst_31 {dimension_numbers = #tpu.dot_dimension_numbers<[2], [1], [1], [2], [0, 0, 0, 1, 1, 2], [0], [0]>} : vector<2x8x8xf32>, vector<2x8x16xf32>, vector<2x8x16xf32> -> vector<2x8x16xf32>
    "tpu.trace_stop"() : () -> ()
    %71 = vector.shape_cast %70 : vector<2x8x16xf32> to vector<16x16xf32>
    %72 = vector.extract_strided_slice %47 {offsets = [0, 0], sizes = [16, 64], strides = [1, 1]} : vector<64x64xf32> to vector<16x64xf32>
    %cst_32 = arith.constant dense<0.000000e+00> : vector<16x64xf32>
    %73 = tpu.matmul %71, %72, %cst_32 {dimension_numbers = #tpu.dot_dimension_numbers<[1], [0], [0], [1], [0, 0, 1, 1], [], []>} : vector<16x16xf32>, vector<16x64xf32>, vector<16x64xf32> -> vector<16x64xf32>
    %74 = arith.addf %48, %73 : vector<16x64xf32>
    %75 = vector.extract_strided_slice %45 {offsets = [0, 16], sizes = [16, 16], strides = [1, 1]} : vector<16x192xf32> to vector<16x16xf32>
    %cst_33 = arith.constant 2.500000e-01 : f32
    %76 = vector.broadcast %cst_33 : f32 to vector<16x16xf32>
    %77 = arith.mulf %75, %76 : vector<16x16xf32>
    %78 = vector.shape_cast %77 : vector<16x16xf32> to vector<2x8x16xf32>
    %79 = vector.extract_strided_slice %45 {offsets = [0, 80], sizes = [16, 16], strides = [1, 1]} : vector<16x192xf32> to vector<16x16xf32>
    %80 = vector.shape_cast %79 : vector<16x16xf32> to vector<2x8x16xf32>
    %81 = vector.extract_strided_slice %45 {offsets = [0, 144], sizes = [16, 16], strides = [1, 1]} : vector<16x192xf32> to vector<16x16xf32>
    %82 = vector.shape_cast %81 : vector<16x16xf32> to vector<2x8x16xf32>
    "tpu.trace_start"() <{level = 10 : i32, message = "bqe,bke->bqk"}> : () -> ()
    %cst_34 = arith.constant dense<0.000000e+00> : vector<2x8x8xf32>
    %83 = tpu.matmul %78, %80, %cst_34 {dimension_numbers = #tpu.dot_dimension_numbers<[2], [2], [1], [1], [0, 0, 0, 1, 1, 1], [0], [0]>} : vector<2x8x16xf32>, vector<2x8x16xf32>, vector<2x8x8xf32> -> vector<2x8x8xf32>
    "tpu.trace_stop"() : () -> ()
    %84 = vector.broadcast %12 : vector<1x8x8xf32> to vector<2x8x8xf32>
    %85 = arith.addf %83, %84 : vector<2x8x8xf32>
    %cst_35 = arith.constant dense<0xFF800000> : vector<2x8xf32>
    %86 = vector.multi_reduction <maximumf>, %85, %cst_35 [2] : vector<2x8x8xf32> to vector<2x8xf32>
    %87 = vector.shape_cast %86 : vector<2x8xf32> to vector<2x8x1xf32>
    %88 = vector.broadcast %87 : vector<2x8x1xf32> to vector<2x8x8xf32>
    %89 = arith.subf %85, %88 : vector<2x8x8xf32>
    %90 = math.exp %89 : vector<2x8x8xf32>
    %cst_36 = arith.constant dense<0.000000e+00> : vector<2x8xf32>
    %91 = vector.multi_reduction <add>, %90, %cst_36 [2] : vector<2x8x8xf32> to vector<2x8xf32>
    %92 = vector.shape_cast %91 : vector<2x8xf32> to vector<2x8x1xf32>
    %93 = tpu.reciprocal %92 {approx = true} : vector<2x8x1xf32> -> vector<2x8x1xf32>
    %94 = vector.broadcast %93 : vector<2x8x1xf32> to vector<2x8x8xf32>
    %95 = arith.mulf %90, %94 : vector<2x8x8xf32>
    "tpu.trace_start"() <{level = 10 : i32, message = "bqk,bke->bqe"}> : () -> ()
    %cst_37 = arith.constant dense<0.000000e+00> : vector<2x8x16xf32>
    %96 = tpu.matmul %95, %82, %cst_37 {dimension_numbers = #tpu.dot_dimension_numbers<[2], [1], [1], [2], [0, 0, 0, 1, 1, 2], [0], [0]>} : vector<2x8x8xf32>, vector<2x8x16xf32>, vector<2x8x16xf32> -> vector<2x8x16xf32>
    "tpu.trace_stop"() : () -> ()
    %97 = vector.shape_cast %96 : vector<2x8x16xf32> to vector<16x16xf32>
    %98 = vector.extract_strided_slice %47 {offsets = [16, 0], sizes = [16, 64], strides = [1, 1]} : vector<64x64xf32> to vector<16x64xf32>
    %cst_38 = arith.constant dense<0.000000e+00> : vector<16x64xf32>
    %99 = tpu.matmul %97, %98, %cst_38 {dimension_numbers = #tpu.dot_dimension_numbers<[1], [0], [0], [1], [0, 0, 1, 1], [], []>} : vector<16x16xf32>, vector<16x64xf32>, vector<16x64xf32> -> vector<16x64xf32>
    %100 = arith.addf %74, %99 : vector<16x64xf32>
    %101 = vector.extract_strided_slice %45 {offsets = [0, 32], sizes = [16, 16], strides = [1, 1]} : vector<16x192xf32> to vector<16x16xf32>
    %cst_39 = arith.constant 2.500000e-01 : f32
    %102 = vector.broadcast %cst_39 : f32 to vector<16x16xf32>
    %103 = arith.mulf %101, %102 : vector<16x16xf32>
    %104 = vector.shape_cast %103 : vector<16x16xf32> to vector<2x8x16xf32>
    %105 = vector.extract_strided_slice %45 {offsets = [0, 96], sizes = [16, 16], strides = [1, 1]} : vector<16x192xf32> to vector<16x16xf32>
    %106 = vector.shape_cast %105 : vector<16x16xf32> to vector<2x8x16xf32>
    %107 = vector.extract_strided_slice %45 {offsets = [0, 160], sizes = [16, 16], strides = [1, 1]} : vector<16x192xf32> to vector<16x16xf32>
    %108 = vector.shape_cast %107 : vector<16x16xf32> to vector<2x8x16xf32>
    "tpu.trace_start"() <{level = 10 : i32, message = "bqe,bke->bqk"}> : () -> ()
    %cst_40 = arith.constant dense<0.000000e+00> : vector<2x8x8xf32>
    %109 = tpu.matmul %104, %106, %cst_40 {dimension_numbers = #tpu.dot_dimension_numbers<[2], [2], [1], [1], [0, 0, 0, 1, 1, 1], [0], [0]>} : vector<2x8x16xf32>, vector<2x8x16xf32>, vector<2x8x8xf32> -> vector<2x8x8xf32>
    "tpu.trace_stop"() : () -> ()
    %110 = vector.broadcast %12 : vector<1x8x8xf32> to vector<2x8x8xf32>
    %111 = arith.addf %109, %110 : vector<2x8x8xf32>
    %cst_41 = arith.constant dense<0xFF800000> : vector<2x8xf32>
    %112 = vector.multi_reduction <maximumf>, %111, %cst_41 [2] : vector<2x8x8xf32> to vector<2x8xf32>
    %113 = vector.shape_cast %112 : vector<2x8xf32> to vector<2x8x1xf32>
    %114 = vector.broadcast %113 : vector<2x8x1xf32> to vector<2x8x8xf32>
    %115 = arith.subf %111, %114 : vector<2x8x8xf32>
    %116 = math.exp %115 : vector<2x8x8xf32>
    %cst_42 = arith.constant dense<0.000000e+00> : vector<2x8xf32>
    %117 = vector.multi_reduction <add>, %116, %cst_42 [2] : vector<2x8x8xf32> to vector<2x8xf32>
    %118 = vector.shape_cast %117 : vector<2x8xf32> to vector<2x8x1xf32>
    %119 = tpu.reciprocal %118 {approx = true} : vector<2x8x1xf32> -> vector<2x8x1xf32>
    %120 = vector.broadcast %119 : vector<2x8x1xf32> to vector<2x8x8xf32>
    %121 = arith.mulf %116, %120 : vector<2x8x8xf32>
    "tpu.trace_start"() <{level = 10 : i32, message = "bqk,bke->bqe"}> : () -> ()
    %cst_43 = arith.constant dense<0.000000e+00> : vector<2x8x16xf32>
    %122 = tpu.matmul %121, %108, %cst_43 {dimension_numbers = #tpu.dot_dimension_numbers<[2], [1], [1], [2], [0, 0, 0, 1, 1, 2], [0], [0]>} : vector<2x8x8xf32>, vector<2x8x16xf32>, vector<2x8x16xf32> -> vector<2x8x16xf32>
    "tpu.trace_stop"() : () -> ()
    %123 = vector.shape_cast %122 : vector<2x8x16xf32> to vector<16x16xf32>
    %124 = vector.extract_strided_slice %47 {offsets = [32, 0], sizes = [16, 64], strides = [1, 1]} : vector<64x64xf32> to vector<16x64xf32>
    %cst_44 = arith.constant dense<0.000000e+00> : vector<16x64xf32>
    %125 = tpu.matmul %123, %124, %cst_44 {dimension_numbers = #tpu.dot_dimension_numbers<[1], [0], [0], [1], [0, 0, 1, 1], [], []>} : vector<16x16xf32>, vector<16x64xf32>, vector<16x64xf32> -> vector<16x64xf32>
    %126 = arith.addf %100, %125 : vector<16x64xf32>
    %127 = vector.extract_strided_slice %45 {offsets = [0, 48], sizes = [16, 16], strides = [1, 1]} : vector<16x192xf32> to vector<16x16xf32>
    %cst_45 = arith.constant 2.500000e-01 : f32
    %128 = vector.broadcast %cst_45 : f32 to vector<16x16xf32>
    %129 = arith.mulf %127, %128 : vector<16x16xf32>
    %130 = vector.shape_cast %129 : vector<16x16xf32> to vector<2x8x16xf32>
    %131 = vector.extract_strided_slice %45 {offsets = [0, 112], sizes = [16, 16], strides = [1, 1]} : vector<16x192xf32> to vector<16x16xf32>
    %132 = vector.shape_cast %131 : vector<16x16xf32> to vector<2x8x16xf32>
    %133 = vector.extract_strided_slice %45 {offsets = [0, 176], sizes = [16, 16], strides = [1, 1]} : vector<16x192xf32> to vector<16x16xf32>
    %134 = vector.shape_cast %133 : vector<16x16xf32> to vector<2x8x16xf32>
    "tpu.trace_start"() <{level = 10 : i32, message = "bqe,bke->bqk"}> : () -> ()
    %cst_46 = arith.constant dense<0.000000e+00> : vector<2x8x8xf32>
    %135 = tpu.matmul %130, %132, %cst_46 {dimension_numbers = #tpu.dot_dimension_numbers<[2], [2], [1], [1], [0, 0, 0, 1, 1, 1], [0], [0]>} : vector<2x8x16xf32>, vector<2x8x16xf32>, vector<2x8x8xf32> -> vector<2x8x8xf32>
    "tpu.trace_stop"() : () -> ()
    %136 = vector.broadcast %12 : vector<1x8x8xf32> to vector<2x8x8xf32>
    %137 = arith.addf %135, %136 : vector<2x8x8xf32>
    %cst_47 = arith.constant dense<0xFF800000> : vector<2x8xf32>
    %138 = vector.multi_reduction <maximumf>, %137, %cst_47 [2] : vector<2x8x8xf32> to vector<2x8xf32>
    %139 = vector.shape_cast %138 : vector<2x8xf32> to vector<2x8x1xf32>
    %140 = vector.broadcast %139 : vector<2x8x1xf32> to vector<2x8x8xf32>
    %141 = arith.subf %137, %140 : vector<2x8x8xf32>
    %142 = math.exp %141 : vector<2x8x8xf32>
    %cst_48 = arith.constant dense<0.000000e+00> : vector<2x8xf32>
    %143 = vector.multi_reduction <add>, %142, %cst_48 [2] : vector<2x8x8xf32> to vector<2x8xf32>
    %144 = vector.shape_cast %143 : vector<2x8xf32> to vector<2x8x1xf32>
    %145 = tpu.reciprocal %144 {approx = true} : vector<2x8x1xf32> -> vector<2x8x1xf32>
    %146 = vector.broadcast %145 : vector<2x8x1xf32> to vector<2x8x8xf32>
    %147 = arith.mulf %142, %146 : vector<2x8x8xf32>
    "tpu.trace_start"() <{level = 10 : i32, message = "bqk,bke->bqe"}> : () -> ()
    %cst_49 = arith.constant dense<0.000000e+00> : vector<2x8x16xf32>
    %148 = tpu.matmul %147, %134, %cst_49 {dimension_numbers = #tpu.dot_dimension_numbers<[2], [1], [1], [2], [0, 0, 0, 1, 1, 2], [0], [0]>} : vector<2x8x8xf32>, vector<2x8x16xf32>, vector<2x8x16xf32> -> vector<2x8x16xf32>
    "tpu.trace_stop"() : () -> ()
    %149 = vector.shape_cast %148 : vector<2x8x16xf32> to vector<16x16xf32>
    %150 = vector.extract_strided_slice %47 {offsets = [48, 0], sizes = [16, 64], strides = [1, 1]} : vector<64x64xf32> to vector<16x64xf32>
    %cst_50 = arith.constant dense<0.000000e+00> : vector<16x64xf32>
    %151 = tpu.matmul %149, %150, %cst_50 {dimension_numbers = #tpu.dot_dimension_numbers<[1], [0], [0], [1], [0, 0, 1, 1], [], []>} : vector<16x16xf32>, vector<16x64xf32>, vector<16x64xf32> -> vector<16x64xf32>
    %152 = arith.addf %126, %151 : vector<16x64xf32>
    %153 = arith.addf %5, %152 : vector<16x64xf32>
    %c0_51 = arith.constant 0 : index
    %c0_52 = arith.constant 0 : index
    %c0_53 = arith.constant 0 : index
    %154 = vector.load %arg8[%c0_51, %c0_52, %c0_53] : memref<2x1x64xf32, #tpu.memory_space<vmem>>, vector<1x1x64xf32>
    %155 = vector.shape_cast %154 : vector<1x1x64xf32> to vector<1x64xf32>
    %156 = vector.broadcast %155 : vector<1x64xf32> to vector<16x64xf32>
    %157 = arith.addf %153, %156 : vector<16x64xf32>
    %c0_54 = arith.constant 0 : index
    %c0_55 = arith.constant 0 : index
    %c0_56 = arith.constant 0 : index
    %158 = vector.load %arg9[%c0_54, %c0_55, %c0_56] : memref<2x1x64xf32, #tpu.memory_space<vmem>>, vector<1x1x64xf32>
    %159 = vector.shape_cast %158 : vector<1x1x64xf32> to vector<1x64xf32>
    %c0_57 = arith.constant 0 : index
    %c0_58 = arith.constant 0 : index
    %c0_59 = arith.constant 0 : index
    %160 = vector.load %arg10[%c0_57, %c0_58, %c0_59] : memref<2x1x64xf32, #tpu.memory_space<vmem>>, vector<1x1x64xf32>
    %161 = vector.shape_cast %160 : vector<1x1x64xf32> to vector<1x64xf32>
    %cst_60 = arith.constant dense<0.000000e+00> : vector<16xf32>
    %162 = vector.multi_reduction <add>, %157, %cst_60 [1] : vector<16x64xf32> to vector<16xf32>
    %163 = vector.shape_cast %162 : vector<16xf32> to vector<16x1xf32>
    %cst_61 = arith.constant 6.400000e+01 : f32
    %164 = vector.broadcast %cst_61 : f32 to vector<16x1xf32>
    %165 = arith.divf %163, %164 : vector<16x1xf32>
    %166 = vector.broadcast %165 : vector<16x1xf32> to vector<16x64xf32>
    %167 = arith.subf %157, %166 : vector<16x64xf32>
    %168 = arith.mulf %167, %167 : vector<16x64xf32>
    %cst_62 = arith.constant dense<0.000000e+00> : vector<16xf32>
    %169 = vector.multi_reduction <add>, %168, %cst_62 [1] : vector<16x64xf32> to vector<16xf32>
    %170 = vector.shape_cast %169 : vector<16xf32> to vector<16x1xf32>
    %cst_63 = arith.constant 6.400000e+01 : f32
    %171 = vector.broadcast %cst_63 : f32 to vector<16x1xf32>
    %172 = arith.divf %170, %171 : vector<16x1xf32>
    %173 = vector.broadcast %165 : vector<16x1xf32> to vector<16x64xf32>
    %174 = arith.subf %157, %173 : vector<16x64xf32>
    %cst_64 = arith.constant 9.99999974E-6 : f32
    %175 = vector.broadcast %cst_64 : f32 to vector<16x1xf32>
    %176 = arith.addf %172, %175 : vector<16x1xf32>
    %177 = math.rsqrt %176 : vector<16x1xf32>
    %178 = vector.broadcast %177 : vector<16x1xf32> to vector<16x64xf32>
    %179 = arith.mulf %174, %178 : vector<16x64xf32>
    %180 = vector.broadcast %159 : vector<1x64xf32> to vector<16x64xf32>
    %181 = arith.mulf %179, %180 : vector<16x64xf32>
    %182 = vector.broadcast %161 : vector<1x64xf32> to vector<16x64xf32>
    %183 = arith.addf %181, %182 : vector<16x64xf32>
    %c0_65 = arith.constant 0 : index
    %c0_66 = arith.constant 0 : index
    %c0_67 = arith.constant 0 : index
    %184 = vector.load %arg11[%c0_65, %c0_66, %c0_67] : memref<2x64x256xf32, #tpu.memory_space<vmem>>, vector<1x64x256xf32>
    %185 = vector.shape_cast %184 : vector<1x64x256xf32> to vector<64x256xf32>
    %cst_68 = arith.constant dense<0.000000e+00> : vector<16x256xf32>
    %186 = tpu.matmul %183, %185, %cst_68 {dimension_numbers = #tpu.dot_dimension_numbers<[1], [0], [0], [1], [0, 0, 1, 1], [], []>} : vector<16x64xf32>, vector<64x256xf32>, vector<16x256xf32> -> vector<16x256xf32>
    %c0_69 = arith.constant 0 : index
    %c0_70 = arith.constant 0 : index
    %c0_71 = arith.constant 0 : index
    %187 = vector.load %arg12[%c0_69, %c0_70, %c0_71] : memref<2x1x256xf32, #tpu.memory_space<vmem>>, vector<1x1x256xf32>
    %188 = vector.shape_cast %187 : vector<1x1x256xf32> to vector<1x256xf32>
    %189 = vector.broadcast %188 : vector<1x256xf32> to vector<16x256xf32>
    %190 = arith.addf %186, %189 : vector<16x256xf32>
    %cst_72 = arith.constant 1.702000e+00 : f32
    %191 = vector.broadcast %cst_72 : f32 to vector<16x256xf32>
    %192 = arith.mulf %191, %190 : vector<16x256xf32>
    %193 = arith.negf %192 : vector<16x256xf32>
    %194 = math.exp %193 : vector<16x256xf32>
    %cst_73 = arith.constant 1.000000e+00 : f32
    %195 = vector.broadcast %cst_73 : f32 to vector<16x256xf32>
    %196 = arith.addf %195, %194 : vector<16x256xf32>
    %197 = arith.divf %195, %196 : vector<16x256xf32>
    %198 = arith.mulf %190, %197 : vector<16x256xf32>
    %c0_74 = arith.constant 0 : index
    %c0_75 = arith.constant 0 : index
    %c0_76 = arith.constant 0 : index
    %199 = vector.load %arg13[%c0_74, %c0_75, %c0_76] : memref<2x256x64xf32, #tpu.memory_space<vmem>>, vector<1x256x64xf32>
    %200 = vector.shape_cast %199 : vector<1x256x64xf32> to vector<256x64xf32>
    %cst_77 = arith.constant dense<0.000000e+00> : vector<16x64xf32>
    %201 = tpu.matmul %198, %200, %cst_77 {dimension_numbers = #tpu.dot_dimension_numbers<[1], [0], [0], [1], [0, 0, 1, 1], [], []>} : vector<16x256xf32>, vector<256x64xf32>, vector<16x64xf32> -> vector<16x64xf32>
    %202 = arith.addf %157, %201 : vector<16x64xf32>
    %c0_78 = arith.constant 0 : index
    %c0_79 = arith.constant 0 : index
    %c0_80 = arith.constant 0 : index
    %203 = vector.load %arg14[%c0_78, %c0_79, %c0_80] : memref<2x1x64xf32, #tpu.memory_space<vmem>>, vector<1x1x64xf32>
    %204 = vector.shape_cast %203 : vector<1x1x64xf32> to vector<1x64xf32>
    %205 = vector.broadcast %204 : vector<1x64xf32> to vector<16x64xf32>
    %206 = arith.addf %202, %205 : vector<16x64xf32>
    %c1 = arith.constant 1 : index
    %c0_81 = arith.constant 0 : index
    %c0_82 = arith.constant 0 : index
    %207 = vector.load %arg3[%c1, %c0_81, %c0_82] : memref<2x1x64xf32, #tpu.memory_space<vmem>>, vector<1x1x64xf32>
    %208 = vector.shape_cast %207 : vector<1x1x64xf32> to vector<1x64xf32>
    %c1_83 = arith.constant 1 : index
    %c0_84 = arith.constant 0 : index
    %c0_85 = arith.constant 0 : index
    %209 = vector.load %arg4[%c1_83, %c0_84, %c0_85] : memref<2x1x64xf32, #tpu.memory_space<vmem>>, vector<1x1x64xf32>
    %210 = vector.shape_cast %209 : vector<1x1x64xf32> to vector<1x64xf32>
    %cst_86 = arith.constant dense<0.000000e+00> : vector<16xf32>
    %211 = vector.multi_reduction <add>, %206, %cst_86 [1] : vector<16x64xf32> to vector<16xf32>
    %212 = vector.shape_cast %211 : vector<16xf32> to vector<16x1xf32>
    %cst_87 = arith.constant 6.400000e+01 : f32
    %213 = vector.broadcast %cst_87 : f32 to vector<16x1xf32>
    %214 = arith.divf %212, %213 : vector<16x1xf32>
    %215 = vector.broadcast %214 : vector<16x1xf32> to vector<16x64xf32>
    %216 = arith.subf %206, %215 : vector<16x64xf32>
    %217 = arith.mulf %216, %216 : vector<16x64xf32>
    %cst_88 = arith.constant dense<0.000000e+00> : vector<16xf32>
    %218 = vector.multi_reduction <add>, %217, %cst_88 [1] : vector<16x64xf32> to vector<16xf32>
    %219 = vector.shape_cast %218 : vector<16xf32> to vector<16x1xf32>
    %cst_89 = arith.constant 6.400000e+01 : f32
    %220 = vector.broadcast %cst_89 : f32 to vector<16x1xf32>
    %221 = arith.divf %219, %220 : vector<16x1xf32>
    %222 = vector.broadcast %214 : vector<16x1xf32> to vector<16x64xf32>
    %223 = arith.subf %206, %222 : vector<16x64xf32>
    %cst_90 = arith.constant 9.99999974E-6 : f32
    %224 = vector.broadcast %cst_90 : f32 to vector<16x1xf32>
    %225 = arith.addf %221, %224 : vector<16x1xf32>
    %226 = math.rsqrt %225 : vector<16x1xf32>
    %227 = vector.broadcast %226 : vector<16x1xf32> to vector<16x64xf32>
    %228 = arith.mulf %223, %227 : vector<16x64xf32>
    %229 = vector.broadcast %208 : vector<1x64xf32> to vector<16x64xf32>
    %230 = arith.mulf %228, %229 : vector<16x64xf32>
    %231 = vector.broadcast %210 : vector<1x64xf32> to vector<16x64xf32>
    %232 = arith.addf %230, %231 : vector<16x64xf32>
    %c1_91 = arith.constant 1 : index
    %c0_92 = arith.constant 0 : index
    %c0_93 = arith.constant 0 : index
    %233 = vector.load %arg5[%c1_91, %c0_92, %c0_93] : memref<2x64x192xf32, #tpu.memory_space<vmem>>, vector<1x64x192xf32>
    %234 = vector.shape_cast %233 : vector<1x64x192xf32> to vector<64x192xf32>
    %cst_94 = arith.constant dense<0.000000e+00> : vector<16x192xf32>
    %235 = tpu.matmul %232, %234, %cst_94 {dimension_numbers = #tpu.dot_dimension_numbers<[1], [0], [0], [1], [0, 0, 1, 1], [], []>} : vector<16x64xf32>, vector<64x192xf32>, vector<16x192xf32> -> vector<16x192xf32>
    %c1_95 = arith.constant 1 : index
    %c0_96 = arith.constant 0 : index
    %c0_97 = arith.constant 0 : index
    %236 = vector.load %arg6[%c1_95, %c0_96, %c0_97] : memref<2x1x192xf32, #tpu.memory_space<vmem>>, vector<1x1x192xf32>
    %237 = vector.shape_cast %236 : vector<1x1x192xf32> to vector<1x192xf32>
    %238 = vector.broadcast %237 : vector<1x192xf32> to vector<16x192xf32>
    %239 = arith.addf %235, %238 : vector<16x192xf32>
    %c1_98 = arith.constant 1 : index
    %c0_99 = arith.constant 0 : index
    %c0_100 = arith.constant 0 : index
    %240 = vector.load %arg7[%c1_98, %c0_99, %c0_100] : memref<2x64x64xf32, #tpu.memory_space<vmem>>, vector<1x64x64xf32>
    %241 = vector.shape_cast %240 : vector<1x64x64xf32> to vector<64x64xf32>
    %cst_101 = arith.constant 0.000000e+00 : f32
    %242 = vector.broadcast %cst_101 : f32 to vector<16x64xf32>
    %243 = vector.extract_strided_slice %239 {offsets = [0, 0], sizes = [16, 16], strides = [1, 1]} : vector<16x192xf32> to vector<16x16xf32>
    %cst_102 = arith.constant 2.500000e-01 : f32
    %244 = vector.broadcast %cst_102 : f32 to vector<16x16xf32>
    %245 = arith.mulf %243, %244 : vector<16x16xf32>
    %246 = vector.shape_cast %245 : vector<16x16xf32> to vector<2x8x16xf32>
    %247 = vector.extract_strided_slice %239 {offsets = [0, 64], sizes = [16, 16], strides = [1, 1]} : vector<16x192xf32> to vector<16x16xf32>
    %248 = vector.shape_cast %247 : vector<16x16xf32> to vector<2x8x16xf32>
    %249 = vector.extract_strided_slice %239 {offsets = [0, 128], sizes = [16, 16], strides = [1, 1]} : vector<16x192xf32> to vector<16x16xf32>
    %250 = vector.shape_cast %249 : vector<16x16xf32> to vector<2x8x16xf32>
    "tpu.trace_start"() <{level = 10 : i32, message = "bqe,bke->bqk"}> : () -> ()
    %cst_103 = arith.constant dense<0.000000e+00> : vector<2x8x8xf32>
    %251 = tpu.matmul %246, %248, %cst_103 {dimension_numbers = #tpu.dot_dimension_numbers<[2], [2], [1], [1], [0, 0, 0, 1, 1, 1], [0], [0]>} : vector<2x8x16xf32>, vector<2x8x16xf32>, vector<2x8x8xf32> -> vector<2x8x8xf32>
    "tpu.trace_stop"() : () -> ()
    %252 = vector.broadcast %12 : vector<1x8x8xf32> to vector<2x8x8xf32>
    %253 = arith.addf %251, %252 : vector<2x8x8xf32>
    %cst_104 = arith.constant dense<0xFF800000> : vector<2x8xf32>
    %254 = vector.multi_reduction <maximumf>, %253, %cst_104 [2] : vector<2x8x8xf32> to vector<2x8xf32>
    %255 = vector.shape_cast %254 : vector<2x8xf32> to vector<2x8x1xf32>
    %256 = vector.broadcast %255 : vector<2x8x1xf32> to vector<2x8x8xf32>
    %257 = arith.subf %253, %256 : vector<2x8x8xf32>
    %258 = math.exp %257 : vector<2x8x8xf32>
    %cst_105 = arith.constant dense<0.000000e+00> : vector<2x8xf32>
    %259 = vector.multi_reduction <add>, %258, %cst_105 [2] : vector<2x8x8xf32> to vector<2x8xf32>
    %260 = vector.shape_cast %259 : vector<2x8xf32> to vector<2x8x1xf32>
    %261 = tpu.reciprocal %260 {approx = true} : vector<2x8x1xf32> -> vector<2x8x1xf32>
    %262 = vector.broadcast %261 : vector<2x8x1xf32> to vector<2x8x8xf32>
    %263 = arith.mulf %258, %262 : vector<2x8x8xf32>
    "tpu.trace_start"() <{level = 10 : i32, message = "bqk,bke->bqe"}> : () -> ()
    %cst_106 = arith.constant dense<0.000000e+00> : vector<2x8x16xf32>
    %264 = tpu.matmul %263, %250, %cst_106 {dimension_numbers = #tpu.dot_dimension_numbers<[2], [1], [1], [2], [0, 0, 0, 1, 1, 2], [0], [0]>} : vector<2x8x8xf32>, vector<2x8x16xf32>, vector<2x8x16xf32> -> vector<2x8x16xf32>
    "tpu.trace_stop"() : () -> ()
    %265 = vector.shape_cast %264 : vector<2x8x16xf32> to vector<16x16xf32>
    %266 = vector.extract_strided_slice %241 {offsets = [0, 0], sizes = [16, 64], strides = [1, 1]} : vector<64x64xf32> to vector<16x64xf32>
    %cst_107 = arith.constant dense<0.000000e+00> : vector<16x64xf32>
    %267 = tpu.matmul %265, %266, %cst_107 {dimension_numbers = #tpu.dot_dimension_numbers<[1], [0], [0], [1], [0, 0, 1, 1], [], []>} : vector<16x16xf32>, vector<16x64xf32>, vector<16x64xf32> -> vector<16x64xf32>
    %268 = arith.addf %242, %267 : vector<16x64xf32>
    %269 = vector.extract_strided_slice %239 {offsets = [0, 16], sizes = [16, 16], strides = [1, 1]} : vector<16x192xf32> to vector<16x16xf32>
    %cst_108 = arith.constant 2.500000e-01 : f32
    %270 = vector.broadcast %cst_108 : f32 to vector<16x16xf32>
    %271 = arith.mulf %269, %270 : vector<16x16xf32>
    %272 = vector.shape_cast %271 : vector<16x16xf32> to vector<2x8x16xf32>
    %273 = vector.extract_strided_slice %239 {offsets = [0, 80], sizes = [16, 16], strides = [1, 1]} : vector<16x192xf32> to vector<16x16xf32>
    %274 = vector.shape_cast %273 : vector<16x16xf32> to vector<2x8x16xf32>
    %275 = vector.extract_strided_slice %239 {offsets = [0, 144], sizes = [16, 16], strides = [1, 1]} : vector<16x192xf32> to vector<16x16xf32>
    %276 = vector.shape_cast %275 : vector<16x16xf32> to vector<2x8x16xf32>
    "tpu.trace_start"() <{level = 10 : i32, message = "bqe,bke->bqk"}> : () -> ()
    %cst_109 = arith.constant dense<0.000000e+00> : vector<2x8x8xf32>
    %277 = tpu.matmul %272, %274, %cst_109 {dimension_numbers = #tpu.dot_dimension_numbers<[2], [2], [1], [1], [0, 0, 0, 1, 1, 1], [0], [0]>} : vector<2x8x16xf32>, vector<2x8x16xf32>, vector<2x8x8xf32> -> vector<2x8x8xf32>
    "tpu.trace_stop"() : () -> ()
    %278 = vector.broadcast %12 : vector<1x8x8xf32> to vector<2x8x8xf32>
    %279 = arith.addf %277, %278 : vector<2x8x8xf32>
    %cst_110 = arith.constant dense<0xFF800000> : vector<2x8xf32>
    %280 = vector.multi_reduction <maximumf>, %279, %cst_110 [2] : vector<2x8x8xf32> to vector<2x8xf32>
    %281 = vector.shape_cast %280 : vector<2x8xf32> to vector<2x8x1xf32>
    %282 = vector.broadcast %281 : vector<2x8x1xf32> to vector<2x8x8xf32>
    %283 = arith.subf %279, %282 : vector<2x8x8xf32>
    %284 = math.exp %283 : vector<2x8x8xf32>
    %cst_111 = arith.constant dense<0.000000e+00> : vector<2x8xf32>
    %285 = vector.multi_reduction <add>, %284, %cst_111 [2] : vector<2x8x8xf32> to vector<2x8xf32>
    %286 = vector.shape_cast %285 : vector<2x8xf32> to vector<2x8x1xf32>
    %287 = tpu.reciprocal %286 {approx = true} : vector<2x8x1xf32> -> vector<2x8x1xf32>
    %288 = vector.broadcast %287 : vector<2x8x1xf32> to vector<2x8x8xf32>
    %289 = arith.mulf %284, %288 : vector<2x8x8xf32>
    "tpu.trace_start"() <{level = 10 : i32, message = "bqk,bke->bqe"}> : () -> ()
    %cst_112 = arith.constant dense<0.000000e+00> : vector<2x8x16xf32>
    %290 = tpu.matmul %289, %276, %cst_112 {dimension_numbers = #tpu.dot_dimension_numbers<[2], [1], [1], [2], [0, 0, 0, 1, 1, 2], [0], [0]>} : vector<2x8x8xf32>, vector<2x8x16xf32>, vector<2x8x16xf32> -> vector<2x8x16xf32>
    "tpu.trace_stop"() : () -> ()
    %291 = vector.shape_cast %290 : vector<2x8x16xf32> to vector<16x16xf32>
    %292 = vector.extract_strided_slice %241 {offsets = [16, 0], sizes = [16, 64], strides = [1, 1]} : vector<64x64xf32> to vector<16x64xf32>
    %cst_113 = arith.constant dense<0.000000e+00> : vector<16x64xf32>
    %293 = tpu.matmul %291, %292, %cst_113 {dimension_numbers = #tpu.dot_dimension_numbers<[1], [0], [0], [1], [0, 0, 1, 1], [], []>} : vector<16x16xf32>, vector<16x64xf32>, vector<16x64xf32> -> vector<16x64xf32>
    %294 = arith.addf %268, %293 : vector<16x64xf32>
    %295 = vector.extract_strided_slice %239 {offsets = [0, 32], sizes = [16, 16], strides = [1, 1]} : vector<16x192xf32> to vector<16x16xf32>
    %cst_114 = arith.constant 2.500000e-01 : f32
    %296 = vector.broadcast %cst_114 : f32 to vector<16x16xf32>
    %297 = arith.mulf %295, %296 : vector<16x16xf32>
    %298 = vector.shape_cast %297 : vector<16x16xf32> to vector<2x8x16xf32>
    %299 = vector.extract_strided_slice %239 {offsets = [0, 96], sizes = [16, 16], strides = [1, 1]} : vector<16x192xf32> to vector<16x16xf32>
    %300 = vector.shape_cast %299 : vector<16x16xf32> to vector<2x8x16xf32>
    %301 = vector.extract_strided_slice %239 {offsets = [0, 160], sizes = [16, 16], strides = [1, 1]} : vector<16x192xf32> to vector<16x16xf32>
    %302 = vector.shape_cast %301 : vector<16x16xf32> to vector<2x8x16xf32>
    "tpu.trace_start"() <{level = 10 : i32, message = "bqe,bke->bqk"}> : () -> ()
    %cst_115 = arith.constant dense<0.000000e+00> : vector<2x8x8xf32>
    %303 = tpu.matmul %298, %300, %cst_115 {dimension_numbers = #tpu.dot_dimension_numbers<[2], [2], [1], [1], [0, 0, 0, 1, 1, 1], [0], [0]>} : vector<2x8x16xf32>, vector<2x8x16xf32>, vector<2x8x8xf32> -> vector<2x8x8xf32>
    "tpu.trace_stop"() : () -> ()
    %304 = vector.broadcast %12 : vector<1x8x8xf32> to vector<2x8x8xf32>
    %305 = arith.addf %303, %304 : vector<2x8x8xf32>
    %cst_116 = arith.constant dense<0xFF800000> : vector<2x8xf32>
    %306 = vector.multi_reduction <maximumf>, %305, %cst_116 [2] : vector<2x8x8xf32> to vector<2x8xf32>
    %307 = vector.shape_cast %306 : vector<2x8xf32> to vector<2x8x1xf32>
    %308 = vector.broadcast %307 : vector<2x8x1xf32> to vector<2x8x8xf32>
    %309 = arith.subf %305, %308 : vector<2x8x8xf32>
    %310 = math.exp %309 : vector<2x8x8xf32>
    %cst_117 = arith.constant dense<0.000000e+00> : vector<2x8xf32>
    %311 = vector.multi_reduction <add>, %310, %cst_117 [2] : vector<2x8x8xf32> to vector<2x8xf32>
    %312 = vector.shape_cast %311 : vector<2x8xf32> to vector<2x8x1xf32>
    %313 = tpu.reciprocal %312 {approx = true} : vector<2x8x1xf32> -> vector<2x8x1xf32>
    %314 = vector.broadcast %313 : vector<2x8x1xf32> to vector<2x8x8xf32>
    %315 = arith.mulf %310, %314 : vector<2x8x8xf32>
    "tpu.trace_start"() <{level = 10 : i32, message = "bqk,bke->bqe"}> : () -> ()
    %cst_118 = arith.constant dense<0.000000e+00> : vector<2x8x16xf32>
    %316 = tpu.matmul %315, %302, %cst_118 {dimension_numbers = #tpu.dot_dimension_numbers<[2], [1], [1], [2], [0, 0, 0, 1, 1, 2], [0], [0]>} : vector<2x8x8xf32>, vector<2x8x16xf32>, vector<2x8x16xf32> -> vector<2x8x16xf32>
    "tpu.trace_stop"() : () -> ()
    %317 = vector.shape_cast %316 : vector<2x8x16xf32> to vector<16x16xf32>
    %318 = vector.extract_strided_slice %241 {offsets = [32, 0], sizes = [16, 64], strides = [1, 1]} : vector<64x64xf32> to vector<16x64xf32>
    %cst_119 = arith.constant dense<0.000000e+00> : vector<16x64xf32>
    %319 = tpu.matmul %317, %318, %cst_119 {dimension_numbers = #tpu.dot_dimension_numbers<[1], [0], [0], [1], [0, 0, 1, 1], [], []>} : vector<16x16xf32>, vector<16x64xf32>, vector<16x64xf32> -> vector<16x64xf32>
    %320 = arith.addf %294, %319 : vector<16x64xf32>
    %321 = vector.extract_strided_slice %239 {offsets = [0, 48], sizes = [16, 16], strides = [1, 1]} : vector<16x192xf32> to vector<16x16xf32>
    %cst_120 = arith.constant 2.500000e-01 : f32
    %322 = vector.broadcast %cst_120 : f32 to vector<16x16xf32>
    %323 = arith.mulf %321, %322 : vector<16x16xf32>
    %324 = vector.shape_cast %323 : vector<16x16xf32> to vector<2x8x16xf32>
    %325 = vector.extract_strided_slice %239 {offsets = [0, 112], sizes = [16, 16], strides = [1, 1]} : vector<16x192xf32> to vector<16x16xf32>
    %326 = vector.shape_cast %325 : vector<16x16xf32> to vector<2x8x16xf32>
    %327 = vector.extract_strided_slice %239 {offsets = [0, 176], sizes = [16, 16], strides = [1, 1]} : vector<16x192xf32> to vector<16x16xf32>
    %328 = vector.shape_cast %327 : vector<16x16xf32> to vector<2x8x16xf32>
    "tpu.trace_start"() <{level = 10 : i32, message = "bqe,bke->bqk"}> : () -> ()
    %cst_121 = arith.constant dense<0.000000e+00> : vector<2x8x8xf32>
    %329 = tpu.matmul %324, %326, %cst_121 {dimension_numbers = #tpu.dot_dimension_numbers<[2], [2], [1], [1], [0, 0, 0, 1, 1, 1], [0], [0]>} : vector<2x8x16xf32>, vector<2x8x16xf32>, vector<2x8x8xf32> -> vector<2x8x8xf32>
    "tpu.trace_stop"() : () -> ()
    %330 = vector.broadcast %12 : vector<1x8x8xf32> to vector<2x8x8xf32>
    %331 = arith.addf %329, %330 : vector<2x8x8xf32>
    %cst_122 = arith.constant dense<0xFF800000> : vector<2x8xf32>
    %332 = vector.multi_reduction <maximumf>, %331, %cst_122 [2] : vector<2x8x8xf32> to vector<2x8xf32>
    %333 = vector.shape_cast %332 : vector<2x8xf32> to vector<2x8x1xf32>
    %334 = vector.broadcast %333 : vector<2x8x1xf32> to vector<2x8x8xf32>
    %335 = arith.subf %331, %334 : vector<2x8x8xf32>
    %336 = math.exp %335 : vector<2x8x8xf32>
    %cst_123 = arith.constant dense<0.000000e+00> : vector<2x8xf32>
    %337 = vector.multi_reduction <add>, %336, %cst_123 [2] : vector<2x8x8xf32> to vector<2x8xf32>
    %338 = vector.shape_cast %337 : vector<2x8xf32> to vector<2x8x1xf32>
    %339 = tpu.reciprocal %338 {approx = true} : vector<2x8x1xf32> -> vector<2x8x1xf32>
    %340 = vector.broadcast %339 : vector<2x8x1xf32> to vector<2x8x8xf32>
    %341 = arith.mulf %336, %340 : vector<2x8x8xf32>
    "tpu.trace_start"() <{level = 10 : i32, message = "bqk,bke->bqe"}> : () -> ()
    %cst_124 = arith.constant dense<0.000000e+00> : vector<2x8x16xf32>
    %342 = tpu.matmul %341, %328, %cst_124 {dimension_numbers = #tpu.dot_dimension_numbers<[2], [1], [1], [2], [0, 0, 0, 1, 1, 2], [0], [0]>} : vector<2x8x8xf32>, vector<2x8x16xf32>, vector<2x8x16xf32> -> vector<2x8x16xf32>
    "tpu.trace_stop"() : () -> ()
    %343 = vector.shape_cast %342 : vector<2x8x16xf32> to vector<16x16xf32>
    %344 = vector.extract_strided_slice %241 {offsets = [48, 0], sizes = [16, 64], strides = [1, 1]} : vector<64x64xf32> to vector<16x64xf32>
    %cst_125 = arith.constant dense<0.000000e+00> : vector<16x64xf32>
    %345 = tpu.matmul %343, %344, %cst_125 {dimension_numbers = #tpu.dot_dimension_numbers<[1], [0], [0], [1], [0, 0, 1, 1], [], []>} : vector<16x16xf32>, vector<16x64xf32>, vector<16x64xf32> -> vector<16x64xf32>
    %346 = arith.addf %320, %345 : vector<16x64xf32>
    %347 = arith.addf %206, %346 : vector<16x64xf32>
    %c1_126 = arith.constant 1 : index
    %c0_127 = arith.constant 0 : index
    %c0_128 = arith.constant 0 : index
    %348 = vector.load %arg8[%c1_126, %c0_127, %c0_128] : memref<2x1x64xf32, #tpu.memory_space<vmem>>, vector<1x1x64xf32>
    %349 = vector.shape_cast %348 : vector<1x1x64xf32> to vector<1x64xf32>
    %350 = vector.broadcast %349 : vector<1x64xf32> to vector<16x64xf32>
    %351 = arith.addf %347, %350 : vector<16x64xf32>
    %c1_129 = arith.constant 1 : index
    %c0_130 = arith.constant 0 : index
    %c0_131 = arith.constant 0 : index
    %352 = vector.load %arg9[%c1_129, %c0_130, %c0_131] : memref<2x1x64xf32, #tpu.memory_space<vmem>>, vector<1x1x64xf32>
    %353 = vector.shape_cast %352 : vector<1x1x64xf32> to vector<1x64xf32>
    %c1_132 = arith.constant 1 : index
    %c0_133 = arith.constant 0 : index
    %c0_134 = arith.constant 0 : index
    %354 = vector.load %arg10[%c1_132, %c0_133, %c0_134] : memref<2x1x64xf32, #tpu.memory_space<vmem>>, vector<1x1x64xf32>
    %355 = vector.shape_cast %354 : vector<1x1x64xf32> to vector<1x64xf32>
    %cst_135 = arith.constant dense<0.000000e+00> : vector<16xf32>
    %356 = vector.multi_reduction <add>, %351, %cst_135 [1] : vector<16x64xf32> to vector<16xf32>
    %357 = vector.shape_cast %356 : vector<16xf32> to vector<16x1xf32>
    %cst_136 = arith.constant 6.400000e+01 : f32
    %358 = vector.broadcast %cst_136 : f32 to vector<16x1xf32>
    %359 = arith.divf %357, %358 : vector<16x1xf32>
    %360 = vector.broadcast %359 : vector<16x1xf32> to vector<16x64xf32>
    %361 = arith.subf %351, %360 : vector<16x64xf32>
    %362 = arith.mulf %361, %361 : vector<16x64xf32>
    %cst_137 = arith.constant dense<0.000000e+00> : vector<16xf32>
    %363 = vector.multi_reduction <add>, %362, %cst_137 [1] : vector<16x64xf32> to vector<16xf32>
    %364 = vector.shape_cast %363 : vector<16xf32> to vector<16x1xf32>
    %cst_138 = arith.constant 6.400000e+01 : f32
    %365 = vector.broadcast %cst_138 : f32 to vector<16x1xf32>
    %366 = arith.divf %364, %365 : vector<16x1xf32>
    %367 = vector.broadcast %359 : vector<16x1xf32> to vector<16x64xf32>
    %368 = arith.subf %351, %367 : vector<16x64xf32>
    %cst_139 = arith.constant 9.99999974E-6 : f32
    %369 = vector.broadcast %cst_139 : f32 to vector<16x1xf32>
    %370 = arith.addf %366, %369 : vector<16x1xf32>
    %371 = math.rsqrt %370 : vector<16x1xf32>
    %372 = vector.broadcast %371 : vector<16x1xf32> to vector<16x64xf32>
    %373 = arith.mulf %368, %372 : vector<16x64xf32>
    %374 = vector.broadcast %353 : vector<1x64xf32> to vector<16x64xf32>
    %375 = arith.mulf %373, %374 : vector<16x64xf32>
    %376 = vector.broadcast %355 : vector<1x64xf32> to vector<16x64xf32>
    %377 = arith.addf %375, %376 : vector<16x64xf32>
    %c1_140 = arith.constant 1 : index
    %c0_141 = arith.constant 0 : index
    %c0_142 = arith.constant 0 : index
    %378 = vector.load %arg11[%c1_140, %c0_141, %c0_142] : memref<2x64x256xf32, #tpu.memory_space<vmem>>, vector<1x64x256xf32>
    %379 = vector.shape_cast %378 : vector<1x64x256xf32> to vector<64x256xf32>
    %cst_143 = arith.constant dense<0.000000e+00> : vector<16x256xf32>
    %380 = tpu.matmul %377, %379, %cst_143 {dimension_numbers = #tpu.dot_dimension_numbers<[1], [0], [0], [1], [0, 0, 1, 1], [], []>} : vector<16x64xf32>, vector<64x256xf32>, vector<16x256xf32> -> vector<16x256xf32>
    %c1_144 = arith.constant 1 : index
    %c0_145 = arith.constant 0 : index
    %c0_146 = arith.constant 0 : index
    %381 = vector.load %arg12[%c1_144, %c0_145, %c0_146] : memref<2x1x256xf32, #tpu.memory_space<vmem>>, vector<1x1x256xf32>
    %382 = vector.shape_cast %381 : vector<1x1x256xf32> to vector<1x256xf32>
    %383 = vector.broadcast %382 : vector<1x256xf32> to vector<16x256xf32>
    %384 = arith.addf %380, %383 : vector<16x256xf32>
    %cst_147 = arith.constant 1.702000e+00 : f32
    %385 = vector.broadcast %cst_147 : f32 to vector<16x256xf32>
    %386 = arith.mulf %385, %384 : vector<16x256xf32>
    %387 = arith.negf %386 : vector<16x256xf32>
    %388 = math.exp %387 : vector<16x256xf32>
    %cst_148 = arith.constant 1.000000e+00 : f32
    %389 = vector.broadcast %cst_148 : f32 to vector<16x256xf32>
    %390 = arith.addf %389, %388 : vector<16x256xf32>
    %391 = arith.divf %389, %390 : vector<16x256xf32>
    %392 = arith.mulf %384, %391 : vector<16x256xf32>
    %c1_149 = arith.constant 1 : index
    %c0_150 = arith.constant 0 : index
    %c0_151 = arith.constant 0 : index
    %393 = vector.load %arg13[%c1_149, %c0_150, %c0_151] : memref<2x256x64xf32, #tpu.memory_space<vmem>>, vector<1x256x64xf32>
    %394 = vector.shape_cast %393 : vector<1x256x64xf32> to vector<256x64xf32>
    %cst_152 = arith.constant dense<0.000000e+00> : vector<16x64xf32>
    %395 = tpu.matmul %392, %394, %cst_152 {dimension_numbers = #tpu.dot_dimension_numbers<[1], [0], [0], [1], [0, 0, 1, 1], [], []>} : vector<16x256xf32>, vector<256x64xf32>, vector<16x64xf32> -> vector<16x64xf32>
    %396 = arith.addf %351, %395 : vector<16x64xf32>
    %c1_153 = arith.constant 1 : index
    %c0_154 = arith.constant 0 : index
    %c0_155 = arith.constant 0 : index
    %397 = vector.load %arg14[%c1_153, %c0_154, %c0_155] : memref<2x1x64xf32, #tpu.memory_space<vmem>>, vector<1x1x64xf32>
    %398 = vector.shape_cast %397 : vector<1x1x64xf32> to vector<1x64xf32>
    %399 = vector.broadcast %398 : vector<1x64xf32> to vector<16x64xf32>
    %400 = arith.addf %396, %399 : vector<16x64xf32>
    %c0_156 = arith.constant 0 : index
    %c0_157 = arith.constant 0 : index
    %401 = vector.load %arg19[%c0_156, %c0_157] : memref<16x64xf32, #tpu.memory_space<vmem>>, vector<16x64xf32>
    tpu.vector_store %arg19[%c0_156, %c0_157], %400 {strides = array<i32>} : memref<16x64xf32, #tpu.memory_space<vmem>>, vector<16x64xf32>,
    %c0_158 = arith.constant 0 : index
    %402 = memref.load %arg0[%c0_158] : memref<2xi32, #tpu.memory_space<smem>>
    %c0_i32 = arith.constant 0 : i32
    %403 = arith.addi %c0_i32, %402 : i32
    %404 = arith.index_cast %403 : i32 to index
    %c0_159 = arith.constant 0 : index
    %405 = vector.load %arg19[%404, %c0_159] : memref<16x64xf32, #tpu.memory_space<vmem>>, vector<1x64xf32>
    %c0_160 = arith.constant 0 : index
    %c0_161 = arith.constant 0 : index
    %406 = vector.load %arg15[%c0_160, %c0_161] : memref<1x64xf32, #tpu.memory_space<vmem>>, vector<1x64xf32>
    %c0_162 = arith.constant 0 : index
    %c0_163 = arith.constant 0 : index
    %407 = vector.load %arg16[%c0_162, %c0_163] : memref<1x64xf32, #tpu.memory_space<vmem>>, vector<1x64xf32>
    %cst_164 = arith.constant dense<0.000000e+00> : vector<1xf32>
    %408 = vector.multi_reduction <add>, %405, %cst_164 [1] : vector<1x64xf32> to vector<1xf32>
    %409 = vector.shape_cast %408 : vector<1xf32> to vector<1x1xf32>
    %cst_165 = arith.constant 6.400000e+01 : f32
    %410 = vector.broadcast %cst_165 : f32 to vector<1x1xf32>
    %411 = arith.divf %409, %410 : vector<1x1xf32>
    %412 = vector.broadcast %411 : vector<1x1xf32> to vector<1x64xf32>
    %413 = arith.subf %405, %412 : vector<1x64xf32>
    %414 = arith.mulf %413, %413 : vector<1x64xf32>
    %cst_166 = arith.constant dense<0.000000e+00> : vector<1xf32>
    %415 = vector.multi_reduction <add>, %414, %cst_166 [1] : vector<1x64xf32> to vector<1xf32>
    %416 = vector.shape_cast %415 : vector<1xf32> to vector<1x1xf32>
    %cst_167 = arith.constant 6.400000e+01 : f32
    %417 = vector.broadcast %cst_167 : f32 to vector<1x1xf32>
    %418 = arith.divf %416, %417 : vector<1x1xf32>
    %419 = vector.broadcast %411 : vector<1x1xf32> to vector<1x64xf32>
    %420 = arith.subf %405, %419 : vector<1x64xf32>
    %cst_168 = arith.constant 9.99999974E-6 : f32
    %421 = vector.broadcast %cst_168 : f32 to vector<1x1xf32>
    %422 = arith.addf %418, %421 : vector<1x1xf32>
    %423 = math.rsqrt %422 : vector<1x1xf32>
    %424 = vector.broadcast %423 : vector<1x1xf32> to vector<1x64xf32>
    %425 = arith.mulf %420, %424 : vector<1x64xf32>
    %426 = arith.mulf %425, %406 : vector<1x64xf32>
    %427 = arith.addf %426, %407 : vector<1x64xf32>
    %c0_169 = arith.constant 0 : index
    %c0_170 = arith.constant 0 : index
    %428 = vector.load %arg17[%c0_169, %c0_170] : memref<64x128xf32, #tpu.memory_space<vmem>>, vector<64x128xf32>
    %cst_171 = arith.constant dense<0.000000e+00> : vector<1x128xf32>
    %429 = tpu.matmul %427, %428, %cst_171 {dimension_numbers = #tpu.dot_dimension_numbers<[1], [0], [0], [1], [0, 0, 1, 1], [], []>} : vector<1x64xf32>, vector<64x128xf32>, vector<1x128xf32> -> vector<1x128xf32>
    %c0_172 = arith.constant 0 : index
    %c0_173 = arith.constant 0 : index
    %430 = vector.load %arg18[%c0_172, %c0_173] : memref<2x128xf32, #tpu.memory_space<vmem>>, vector<1x128xf32>
    tpu.vector_store %arg18[%c0_172, %c0_173], %429 {strides = array<i32>} : memref<2x128xf32, #tpu.memory_space<vmem>>, vector<1x128xf32>,
    %c1_174 = arith.constant 1 : index
    %431 = memref.load %arg0[%c1_174] : memref<2xi32, #tpu.memory_space<smem>>
    %c8_i32 = arith.constant 8 : i32
    %432 = arith.addi %c8_i32, %431 : i32
    %433 = arith.index_cast %432 : i32 to index
    %c0_175 = arith.constant 0 : index
    %434 = vector.load %arg19[%433, %c0_175] : memref<16x64xf32, #tpu.memory_space<vmem>>, vector<1x64xf32>
    %c0_176 = arith.constant 0 : index
    %c0_177 = arith.constant 0 : index
    %435 = vector.load %arg15[%c0_176, %c0_177] : memref<1x64xf32, #tpu.memory_space<vmem>>, vector<1x64xf32>
    %c0_178 = arith.constant 0 : index
    %c0_179 = arith.constant 0 : index
    %436 = vector.load %arg16[%c0_178, %c0_179] : memref<1x64xf32, #tpu.memory_space<vmem>>, vector<1x64xf32>
    %cst_180 = arith.constant dense<0.000000e+00> : vector<1xf32>
    %437 = vector.multi_reduction <add>, %434, %cst_180 [1] : vector<1x64xf32> to vector<1xf32>
    %438 = vector.shape_cast %437 : vector<1xf32> to vector<1x1xf32>
    %cst_181 = arith.constant 6.400000e+01 : f32
    %439 = vector.broadcast %cst_181 : f32 to vector<1x1xf32>
    %440 = arith.divf %438, %439 : vector<1x1xf32>
    %441 = vector.broadcast %440 : vector<1x1xf32> to vector<1x64xf32>
    %442 = arith.subf %434, %441 : vector<1x64xf32>
    %443 = arith.mulf %442, %442 : vector<1x64xf32>
    %cst_182 = arith.constant dense<0.000000e+00> : vector<1xf32>
    %444 = vector.multi_reduction <add>, %443, %cst_182 [1] : vector<1x64xf32> to vector<1xf32>
    %445 = vector.shape_cast %444 : vector<1xf32> to vector<1x1xf32>
    %cst_183 = arith.constant 6.400000e+01 : f32
    %446 = vector.broadcast %cst_183 : f32 to vector<1x1xf32>
    %447 = arith.divf %445, %446 : vector<1x1xf32>
    %448 = vector.broadcast %440 : vector<1x1xf32> to vector<1x64xf32>
    %449 = arith.subf %434, %448 : vector<1x64xf32>
    %cst_184 = arith.constant 9.99999974E-6 : f32
    %450 = vector.broadcast %cst_184 : f32 to vector<1x1xf32>
    %451 = arith.addf %447, %450 : vector<1x1xf32>
    %452 = math.rsqrt %451 : vector<1x1xf32>
    %453 = vector.broadcast %452 : vector<1x1xf32> to vector<1x64xf32>
    %454 = arith.mulf %449, %453 : vector<1x64xf32>
    %455 = arith.mulf %454, %435 : vector<1x64xf32>
    %456 = arith.addf %455, %436 : vector<1x64xf32>
    %c0_185 = arith.constant 0 : index
    %c0_186 = arith.constant 0 : index
    %457 = vector.load %arg17[%c0_185, %c0_186] : memref<64x128xf32, #tpu.memory_space<vmem>>, vector<64x128xf32>
    %cst_187 = arith.constant dense<0.000000e+00> : vector<1x128xf32>
    %458 = tpu.matmul %456, %457, %cst_187 {dimension_numbers = #tpu.dot_dimension_numbers<[1], [0], [0], [1], [0, 0, 1, 1], [], []>} : vector<1x64xf32>, vector<64x128xf32>, vector<1x128xf32> -> vector<1x128xf32>
    %c1_188 = arith.constant 1 : index
    %c0_189 = arith.constant 0 : index
    %459 = vector.load %arg18[%c1_188, %c0_189] : memref<2x128xf32, #tpu.memory_space<vmem>>, vector<1x128xf32>
    tpu.vector_store %arg18[%c1_188, %c0_189], %458 {strides = array<i32>} : memref<2x128xf32, #tpu.memory_space<vmem>>, vector<1x128xf32>,
    return
  }
}

</mosaic_0001>

<llo_original>
// kernel: tpu_custom_call.1
$region0: #{tpu_custom_call.1}
  #allocation0 [shape = 'u32[]', space=smem, size = 0x4, offset = 0x4, fixed_abs, tag = 'smem constant byte address 0x4 - core index']
  #allocation1 [shape = 'u32[144,128]{1,0:T(1,128)}', space=vmem, size = 0x12000, scoped, tag = 'internal scratch']
  #allocation2 [shape = 'f32[16,64]{1,0:T(8,128)}', space=vmem, size = 0x2000, scoped, tag = 'scratch operand']
  %s0 = inlined_call_operand.vmem [shape: s32[2], index: 0, kind: input, shape index: {}]
  %s1 = inlined_call_operand.vmem [shape: f32[2,8,64], index: 1, kind: input, shape index: {}]
  %s2 = inlined_call_operand.vmem [shape: f32[8,64], index: 2, kind: input, shape index: {}]
  %s3 = inlined_call_operand.vmem [shape: f32[2,1,64], index: 3, kind: input, shape index: {}]
  %s4 = inlined_call_operand.vmem [shape: f32[2,1,64], index: 4, kind: input, shape index: {}]
  %s5 = inlined_call_operand.vmem [shape: f32[2,64,192], index: 5, kind: input, shape index: {}]
  %s6 = inlined_call_operand.vmem [shape: f32[2,1,192], index: 6, kind: input, shape index: {}]
  %s7 = inlined_call_operand.vmem [shape: f32[2,64,64], index: 7, kind: input, shape index: {}]
  %s8 = inlined_call_operand.vmem [shape: f32[2,1,64], index: 8, kind: input, shape index: {}]
  %s9 = inlined_call_operand.vmem [shape: f32[2,1,64], index: 9, kind: input, shape index: {}]
  %s10 = inlined_call_operand.vmem [shape: f32[2,1,64], index: 10, kind: input, shape index: {}]
  %s11 = inlined_call_operand.vmem [shape: f32[2,64,256], index: 11, kind: input, shape index: {}]
  %s12 = inlined_call_operand.vmem [shape: f32[2,1,256], index: 12, kind: input, shape index: {}]
  %s13 = inlined_call_operand.vmem [shape: f32[2,256,64], index: 13, kind: input, shape index: {}]
  %s14 = inlined_call_operand.vmem [shape: f32[2,1,64], index: 14, kind: input, shape index: {}]
  %s15 = inlined_call_operand.vmem [shape: f32[1,64], index: 15, kind: input, shape index: {}]
  %s16 = inlined_call_operand.vmem [shape: f32[1,64], index: 16, kind: input, shape index: {}]
  %s17 = inlined_call_operand.vmem [shape: f32[64,128], index: 17, kind: input, shape index: {}]
  %s18 = inlined_call_operand.hbm [shape: f32[2,128], index: 18, kind: output, shape index: {}]
  %s19 = sld [smem:[#allocation0]]
  $region86: #{tpu_custom_call.1} parent=0
    _
  %s21 = ssub.s32 1, %s19
  %s22 = scalar_select 0, %s21, %s19
  $region1: #{tpu_custom_call.1} parent=0
    #allocation3 [shape = 'u8[512]{0}', space=smem, size = 0x200, scoped, tag = 'input window, operand 0, single buffered']
    #allocation4 [shape = 's32[1]{0}', space=sflag, size = 0x4, scoped, tag = 'scoped memory for tpu_custom_call.1']
    #allocation5 [shape = 's32[1]{0}', space=sflag, size = 0x4, scoped, tag = 'scoped memory for tpu_custom_call.1']
    #allocation6 [shape = 'u8[1024]{0}', space=vmem, size = 0x400, scoped, tag = 'output window, operand 0, single buffered']
    %23 = vsyncpa [#allocation5], 0
    %24 = vsyncpa [#allocation4], 0
    // Predicated region
    $region2: #{tpu_custom_call.1} parent=1 // pred_check
      _
    $region3: #{tpu_custom_call.1} parent=1 // pred_check_branch
      %26 = sbr.rel (0) target = $region5
    $region4: #{tpu_custom_call.1} parent=1 // pred_region
      %s28 = ssub.s32 16, 16
      %29 = vsyncadd [#allocation5], %s28
      %s31 = sshll.u32 %s0, 4
      %s32 = int_to_ptr.vmem [resolvable:$true] %s31
      %34 = dma.vmem_to_smem %s32, 16, [#allocation3], [#allocation5]
    $region5: #{tpu_custom_call.1} parent=1 // pred_fallthru
      _
    // Predicated region
    $region6: #{tpu_custom_call.1} parent=1 // pred_check
      _
    $region7: #{tpu_custom_call.1} parent=1 // pred_check_branch
      %36 = sbr.rel (0) target = $region9
    $region8: #{tpu_custom_call.1} parent=1 // pred_region
      _
    $region9: #{tpu_custom_call.1} parent=1 // pred_fallthru
      _
    // Predicated region
    $region10: #{tpu_custom_call.1} parent=1 // pred_check
      _
    $region11: #{tpu_custom_call.1} parent=1 // pred_check_branch
      %38 = sbr.rel (0) target = $region13
    $region12: #{tpu_custom_call.1} parent=1 // pred_region
      _
    $region13: #{tpu_custom_call.1} parent=1 // pred_fallthru
      _
    // Predicated region
    $region14: #{tpu_custom_call.1} parent=1 // pred_check
      _
    $region15: #{tpu_custom_call.1} parent=1 // pred_check_branch
      %40 = sbr.rel (0) target = $region17
    $region16: #{tpu_custom_call.1} parent=1 // pred_region
      _
    $region17: #{tpu_custom_call.1} parent=1 // pred_fallthru
      _
    // Predicated region
    $region18: #{tpu_custom_call.1} parent=1 // pred_check
      _
    $region19: #{tpu_custom_call.1} parent=1 // pred_check_branch
      %42 = sbr.rel (0) target = $region21
    $region20: #{tpu_custom_call.1} parent=1 // pred_region
      _
    $region21: #{tpu_custom_call.1} parent=1 // pred_fallthru
      _
    // Predicated region
    $region22: #{tpu_custom_call.1} parent=1 // pred_check
      _
    $region23: #{tpu_custom_call.1} parent=1 // pred_check_branch
      %44 = sbr.rel (0) target = $region25
    $region24: #{tpu_custom_call.1} parent=1 // pred_region
      _
    $region25: #{tpu_custom_call.1} parent=1 // pred_fallthru
      _
    // Predicated region
    $region26: #{tpu_custom_call.1} parent=1 // pred_check
      _
    $region27: #{tpu_custom_call.1} parent=1 // pred_check_branch
      %46 = sbr.rel (0) target = $region29
    $region28: #{tpu_custom_call.1} parent=1 // pred_region
      _
    $region29: #{tpu_custom_call.1} parent=1 // pred_fallthru
      _
    // Predicated region
    $region30: #{tpu_custom_call.1} parent=1 // pred_check
      _
    $region31: #{tpu_custom_call.1} parent=1 // pred_check_branch
      %48 = sbr.rel (0) target = $region33
    $region32: #{tpu_custom_call.1} parent=1 // pred_region
      _
    $region33: #{tpu_custom_call.1} parent=1 // pred_fallthru
      _
    // Predicated region
    $region34: #{tpu_custom_call.1} parent=1 // pred_check
      _
    $region35: #{tpu_custom_call.1} parent=1 // pred_check_branch
      %50 = sbr.rel (0) target = $region37
    $region36: #{tpu_custom_call.1} parent=1 // pred_region
      _
    $region37: #{tpu_custom_call.1} parent=1 // pred_fallthru
      _
    // Predicated region
    $region38: #{tpu_custom_call.1} parent=1 // pred_check
      _
    $region39: #{tpu_custom_call.1} parent=1 // pred_check_branch
      %52 = sbr.rel (0) target = $region41
    $region40: #{tpu_custom_call.1} parent=1 // pred_region
      _
    $region41: #{tpu_custom_call.1} parent=1 // pred_fallthru
      _
    // Predicated region
    $region42: #{tpu_custom_call.1} parent=1 // pred_check
      _
    $region43: #{tpu_custom_call.1} parent=1 // pred_check_branch
      %54 = sbr.rel (0) target = $region45
    $region44: #{tpu_custom_call.1} parent=1 // pred_region
      _
    $region45: #{tpu_custom_call.1} parent=1 // pred_fallthru
      _
    // Predicated region
    $region46: #{tpu_custom_call.1} parent=1 // pred_check
      _
    $region47: #{tpu_custom_call.1} parent=1 // pred_check_branch
      %56 = sbr.rel (0) target = $region49
    $region48: #{tpu_custom_call.1} parent=1 // pred_region
      _
    $region49: #{tpu_custom_call.1} parent=1 // pred_fallthru
      _
    // Predicated region
    $region50: #{tpu_custom_call.1} parent=1 // pred_check
      _
    $region51: #{tpu_custom_call.1} parent=1 // pred_check_branch
      %58 = sbr.rel (0) target = $region53
    $region52: #{tpu_custom_call.1} parent=1 // pred_region
      _
    $region53: #{tpu_custom_call.1} parent=1 // pred_fallthru
      _
    // Predicated region
    $region54: #{tpu_custom_call.1} parent=1 // pred_check
      _
    $region55: #{tpu_custom_call.1} parent=1 // pred_check_branch
      %60 = sbr.rel (0) target = $region57
    $region56: #{tpu_custom_call.1} parent=1 // pred_region
      _
    $region57: #{tpu_custom_call.1} parent=1 // pred_fallthru
      _
    // Predicated region
    $region58: #{tpu_custom_call.1} parent=1 // pred_check
      _
    $region59: #{tpu_custom_call.1} parent=1 // pred_check_branch
      %62 = sbr.rel (0) target = $region61
    $region60: #{tpu_custom_call.1} parent=1 // pred_region
      _
    $region61: #{tpu_custom_call.1} parent=1 // pred_fallthru
      _
    // Predicated region
    $region62: #{tpu_custom_call.1} parent=1 // pred_check
      _
    $region63: #{tpu_custom_call.1} parent=1 // pred_check_branch
      %64 = sbr.rel (0) target = $region65
    $region64: #{tpu_custom_call.1} parent=1 // pred_region
      _
    $region65: #{tpu_custom_call.1} parent=1 // pred_fallthru
      _
    // Predicated region
    $region66: #{tpu_custom_call.1} parent=1 // pred_check
      _
    $region67: #{tpu_custom_call.1} parent=1 // pred_check_branch
      %66 = sbr.rel (0) target = $region69
    $region68: #{tpu_custom_call.1} parent=1 // pred_region
      _
    $region69: #{tpu_custom_call.1} parent=1 // pred_fallthru
      _
    // Predicated region
    $region70: #{tpu_custom_call.1} parent=1 // pred_check
      _
    $region71: #{tpu_custom_call.1} parent=1 // pred_check_branch
      %68 = sbr.rel (0) target = $region73
    $region72: #{tpu_custom_call.1} parent=1 // pred_region
      _
    $region73: #{tpu_custom_call.1} parent=1 // pred_fallthru
      _
    // Predicated region
    $region74: #{tpu_custom_call.1} parent=1 // pred_check
      _
    $region75: #{tpu_custom_call.1} parent=1 // pred_check_branch
      %70 = sbr.rel (0) target = $region77
    $region76: #{tpu_custom_call.1} parent=1 // pred_region
      %71 = dma.done [#allocation5], 16
    $region77: #{tpu_custom_call.1} parent=1 // pred_fallthru
      _
    %72 = sfence
    %v73 = vld [vmem:[%s1] sm:$0xff]
    %v74 = vld [vmem:[%s1 + $0x8] sm:$0xff]
    %v75 = vld [vmem:[%s2] sm:$0xff]
    %v76 = vadd.f32 %v73, %v75
    %v77 = vadd.f32 %v74, %v75
    %v78 = vlaneseq
    %v79 = vshrl.u32 %v78, 7
    %v80 = vlaneseq
    %v81 = vand.u32 %v80, 127
    %vm82 = vcmp.gt.s32.totalorder %v81, %v79
    %v83 = vsel %vm82, -1e+30, 0.0
    %v84 = vld [vmem:[%s3] sm:$0x1]
    %v85 = vld [vmem:[%s4] sm:$0x1]
    %vm86 = vcmask 523264
    %v87 = vsel %vm86, %v76, 0.0
    %88 = vadd.xlane.f32.xlu0 %v87
    %v89 = vpop.xlane.xlu0 %88
    %v90 = vsel %vm86, %v77, 0.0
    %91 = vadd.xlane.f32.xlu0 %v90
    %v92 = vpop.xlane.xlu0 %91
    %v93 = vrcp.pop 64.0
    %v94 = vmul.f32 %v89, %v93
    %v95 = vmul.f32 %v92, %v93
    %v96 = vsub.f32 %v76, %v94
    %v97 = vsub.f32 %v77, %v95
    %v98 = vmul.f32 %v96, %v96
    %v99 = vmul.f32 %v97, %v97
    %v100 = vsel %vm86, %v98, 0.0
    %101 = vadd.xlane.f32.xlu0 %v100
    %v102 = vpop.xlane.xlu0 %101
    %v103 = vsel %vm86, %v99, 0.0
    %104 = vadd.xlane.f32.xlu0 %v103
    %v105 = vpop.xlane.xlu0 %104
    %v106 = vmul.f32 %v102, %v93
    %v107 = vmul.f32 %v105, %v93
    %v108 = vadd.f32 %v106, 1e-05
    %v109 = vadd.f32 %v107, 1e-05
    %v110 = vrsqrt.pop %v108
    %v111 = vrsqrt.pop %v109
    %v112 = vmul.f32 %v96, %v110
    %v113 = vmul.f32 %v97, %v111
    %v115 = vlaneseq
    %v116 = vshrl.u32 %v115, 7
    %v117 = vsub.s32 0, %v116
    %v118 = vrot.slane %v84, %v117
    %v120 = vmul.f32 %v112, %v118
    %v121 = vmul.f32 %v113, %v118
    %v123 = vlaneseq
    %v124 = vshrl.u32 %v123, 7
    %v125 = vsub.s32 0, %v124
    %v126 = vrot.slane %v85, %v125
    %v128 = vadd.f32 %v120, %v126
    %v129 = vadd.f32 %v121, %v126
    %v130 = vld [vmem:[%s5] sm:$0xff]
    %v131 = vld [vmem:[%s5 + $0x8] sm:$0xff]
    %v132 = vld [vmem:[%s5 + $0x10] sm:$0xff]
    %v133 = vld [vmem:[%s5 + $0x18] sm:$0xff]
    %v134 = vld [vmem:[%s5 + $0x20] sm:$0xff]
    %v135 = vld [vmem:[%s5 + $0x28] sm:$0xff]
    %v136 = vld [vmem:[%s5 + $0x30] sm:$0xff]
    %v137 = vld [vmem:[%s5 + $0x38] sm:$0xff]
    %v138 = vld [vmem:[%s5 + $0x40] sm:$0xff]
    %v139 = vld [vmem:[%s5 + $0x48] sm:$0xff]
    %v140 = vld [vmem:[%s5 + $0x50] sm:$0xff]
    %v141 = vld [vmem:[%s5 + $0x58] sm:$0xff]
    %v142 = vld [vmem:[%s5 + $0x60] sm:$0xff]
    %v143 = vld [vmem:[%s5 + $0x68] sm:$0xff]
    %v144 = vld [vmem:[%s5 + $0x70] sm:$0xff]
    %v145 = vld [vmem:[%s5 + $0x78] sm:$0xff]
    %v146 = vld [vmem:[%s6] sm:$0x3]
    %v148 = vlaneseq
    %v149 = vshrl.u32 %v148, 7
    %v150 = vsub.s32 0, %v149
    %v151 = vrot.slane %v146, %v150
    %v152 = vlaneseq
    %v153 = vshrl.u32 %v152, 7
    %v154 = vsub.s32 1, %v153
    %v155 = vrot.slane %v146, %v154
    %v159 = vsel %vm86, %v128, 0
    %v162 = vsel %vm86, %v129, 0
    %164 = vmatprep.subr.mxu0 %v131
    %165 = vmatpush1.msra.mxu0 %v130
    %166 = vmatprep.subr.mxu0 %v133
    %167 = vmatpush1.msra.mxu0 %v132
    %168 = vmatprep.subr.mxu0 %v135
    %169 = vmatpush1.msra.mxu0 %v134
    %170 = vmatprep.subr.mxu0 %v137
    %171 = vmatpush1.msra.mxu0 %v136
    %172 = vmatprep.subr.mxu0 %v139
    %173 = vmatpush1.msra.mxu0 %v138
    %174 = vmatprep.subr.mxu0 %v141
    %175 = vmatpush1.msra.mxu0 %v140
    %176 = vmatprep.subr.mxu0 %v143
    %177 = vmatpush1.msra.mxu0 %v142
    %178 = vmatprep.subr.mxu0 %v145
    %179 = vmatpush1.msra.mxu0 %v144
    %180 = vmatprep.subr.mxu0 0.0
    %181 = vmatpush1.msra.mxu0 0.0
    %182 = vmatprep.subr.mxu0 0.0
    %183 = vmatpush1.msra.mxu0 0.0
    %184 = vmatprep.subr.mxu0 0.0
    %185 = vmatpush1.msra.mxu0 0.0
    %186 = vmatprep.subr.mxu0 0.0
    %187 = vmatpush1.msra.mxu0 0.0
    %188 = vmatprep.subr.mxu0 0.0
    %189 = vmatpush1.msra.mxu0 0.0
    %190 = vmatprep.subr.mxu0 0.0
    %191 = vmatpush1.msra.mxu0 0.0
    %192 = vmatprep.subr.mxu0 0.0
    %193 = vmatpush1.msra.mxu0 0.0
    %194 = vmatprep.subr.mxu0 0.0
    %195 = vmatpush1.msra.mxu0 0.0
    %196 = vmatprep.subr.mxu0 0.0
    %197 = vmatpush1.msra.mxu0 0.0
    %198 = vmatprep.subr.mxu0 0.0
    %199 = vmatpush1.msra.mxu0 0.0
    %200 = vmatprep.subr.mxu0 0.0
    %201 = vmatpush1.msra.mxu0 0.0
    %202 = vmatprep.subr.mxu0 0.0
    %203 = vmatpush1.msra.mxu0 0.0
    %204 = vmatprep.subr.mxu0 0.0
    %205 = vmatpush1.msra.mxu0 0.0
    %206 = vmatprep.subr.mxu0 0.0
    %207 = vmatpush1.msra.mxu0 0.0
    %208 = vmatprep.subr.mxu0 0.0
    %209 = vmatpush1.msra.mxu0 0.0
    %210 = vmatprep.subr.mxu0 0.0
    %211 = vmatpush1.msra.mxu0 0.0
    %212 = vmatprep.subr.mxu0 0.0
    %213 = vmatpush1.msra.mxu0 0.0
    %214 = vmatprep.subr.mxu0 0.0
    %215 = vmatpush1.msra.mxu0 0.0
    %216 = vmatprep.subr.mxu0 0.0
    %217 = vmatpush1.msra.mxu0 0.0
    %218 = vmatprep.subr.mxu0 0.0
    %219 = vmatpush1.msra.mxu0 0.0
    %220 = vmatprep.subr.mxu0 0.0
    %221 = vmatpush1.msra.mxu0 0.0
    %222 = vmatprep.subr.mxu0 0.0
    %223 = vmatpush1.msra.mxu0 0.0
    %224 = vmatprep.subr.mxu0 0.0
    %225 = vmatpush1.msra.mxu0 0.0
    %226 = vmatprep.subr.mxu0 0.0
    %227 = vmatpush1.msra.mxu0 0.0
    %228 = vmatprep.mubr.f32.mxu0 0.0
    %229 = vmatmul.mubr.f32.gmra.mrb[0].mxu0 %v159
    %v230 = vpop.f32.mrb[0].mxu0
    %v231 = vadd.f32 %v151, %v230
    %v232 = vpop.f32.mrb[0].mxu0
    %v233 = vadd.f32 %v155, %v232
    %234 = vmatprep.mubr.f32.mxu0 0.0
    %235 = vmatmul.mubr.f32.gmra.mrb[0].mxu0 %v162
    %v236 = vpop.f32.mrb[0].mxu0
    %v237 = vadd.f32 %v151, %v236
    %v238 = vpop.f32.mrb[0].mxu0
    %v239 = vadd.f32 %v155, %v238
    %240 = vdwg.mxu0
    %v241 = vld [vmem:[%s7] sm:$0xff]
    %v242 = vld [vmem:[%s7 + $0x8] sm:$0xff]
    %v243 = vld [vmem:[%s7 + $0x10] sm:$0xff]
    %v244 = vld [vmem:[%s7 + $0x18] sm:$0xff]
    %v245 = vld [vmem:[%s7 + $0x20] sm:$0xff]
    %v246 = vld [vmem:[%s7 + $0x28] sm:$0xff]
    %v247 = vld [vmem:[%s7 + $0x30] sm:$0xff]
    %v248 = vld [vmem:[%s7 + $0x38] sm:$0xff]
    %v249 = vmul.f32 %v231, 0.25
    %v250 = vmul.f32 %v237, 0.25
    %252 = vrot.lane.b32.xlu0 %v231, 64
    %v253 = vpop.permute.xlu0 %252
    %vm254 = vcmask 130048
    %v256 = vsel %vm254, %v249, 0
    %v258 = vsel %vm254, %v253, 0
    %260 = vmatprep.subr.mxu0 0.0
    %261 = vmatpush1.xpose.msra.mxu0 %v258
    %262 = vmatprep.subr.mxu0 0.0
    %263 = vmatpush1.xpose.msra.mxu0 0.0
    %264 = vmatprep.subr.mxu0 0.0
    %265 = vmatpush1.xpose.msra.mxu0 0.0
    %266 = vmatprep.subr.mxu0 0.0
    %267 = vmatpush1.xpose.msra.mxu0 0.0
    %268 = vmatprep.subr.mxu0 0.0
    %269 = vmatpush1.xpose.msra.mxu0 0.0
    %270 = vmatprep.subr.mxu0 0.0
    %271 = vmatpush1.xpose.msra.mxu0 0.0
    %272 = vmatprep.subr.mxu0 0.0
    %273 = vmatpush1.xpose.msra.mxu0 0.0
    %274 = vmatprep.subr.mxu0 0.0
    %275 = vmatpush1.xpose.msra.mxu0 0.0
    %276 = vmatprep.subr.mxu0 0.0
    %277 = vmatpush1.xpose.msra.mxu0 0.0
    %278 = vmatprep.subr.mxu0 0.0
    %279 = vmatpush1.xpose.msra.mxu0 0.0
    %280 = vmatprep.subr.mxu0 0.0
    %281 = vmatpush1.xpose.msra.mxu0 0.0
    %282 = vmatprep.subr.mxu0 0.0
    %283 = vmatpush1.xpose.msra.mxu0 0.0
    %284 = vmatprep.subr.mxu0 0.0
    %285 = vmatpush1.xpose.msra.mxu0 0.0
    %286 = vmatprep.subr.mxu0 0.0
    %287 = vmatpush1.xpose.msra.mxu0 0.0
    %288 = vmatprep.subr.mxu0 0.0
    %289 = vmatpush1.xpose.msra.mxu0 0.0
    %290 = vmatprep.subr.mxu0 0.0
    %291 = vmatpush1.xpose.msra.mxu0 0.0
    %292 = vmatprep.subr.mxu0 0.0
    %293 = vmatpush1.xpose.msra.mxu0 0.0
    %294 = vmatprep.subr.mxu0 0.0
    %295 = vmatpush1.xpose.msra.mxu0 0.0
    %296 = vmatprep.subr.mxu0 0.0
    %297 = vmatpush1.xpose.msra.mxu0 0.0
    %298 = vmatprep.subr.mxu0 0.0
    %299 = vmatpush1.xpose.msra.mxu0 0.0
    %300 = vmatprep.subr.mxu0 0.0
    %301 = vmatpush1.xpose.msra.mxu0 0.0
    %302 = vmatprep.subr.mxu0 0.0
    %303 = vmatpush1.xpose.msra.mxu0 0.0
    %304 = vmatprep.subr.mxu0 0.0
    %305 = vmatpush1.xpose.msra.mxu0 0.0
    %306 = vmatprep.subr.mxu0 0.0
    %307 = vmatpush1.xpose.msra.mxu0 0.0
    %308 = vmatprep.subr.mxu0 0.0
    %309 = vmatpush1.xpose.msra.mxu0 0.0
    %310 = vmatprep.subr.mxu0 0.0
    %311 = vmatpush1.xpose.msra.mxu0 0.0
    %312 = vmatprep.subr.mxu0 0.0
    %313 = vmatpush1.xpose.msra.mxu0 0.0
    %314 = vmatprep.subr.mxu0 0.0
    %315 = vmatpush1.xpose.msra.mxu0 0.0
    %316 = vmatprep.subr.mxu0 0.0
    %317 = vmatpush1.xpose.msra.mxu0 0.0
    %318 = vmatprep.subr.mxu0 0.0
    %319 = vmatpush1.xpose.msra.mxu0 0.0
    %320 = vmatprep.subr.mxu0 0.0
    %321 = vmatpush1.xpose.msra.mxu0 0.0
    %322 = vmatprep.subr.mxu0 0.0
    %323 = vmatpush1.xpose.msra.mxu0 0.0
    %324 = vmatprep.mubr.f32.mxu0 0.0
    %325 = vmatmul.mubr.f32.gmra.mrb[0].mxu0 %v256
    %v326 = vpop.f32.mrb[0].mxu0
    %v327 = vadd.f32 %v83, %v326
    %v328 = vpop.f32.mrb[0].mxu0
    %329 = vdwg.mxu0
    %331 = vrot.lane.b32.xlu0 %v237, 64
    %v332 = vpop.permute.xlu0 %331
    %v334 = vsel %vm254, %v250, 0
    %v336 = vsel %vm254, %v332, 0
    %338 = vmatprep.subr.mxu0 0.0
    %339 = vmatpush1.xpose.msra.mxu0 %v336
    %340 = vmatprep.subr.mxu0 0.0
    %341 = vmatpush1.xpose.msra.mxu0 0.0
    %342 = vmatprep.subr.mxu0 0.0
    %343 = vmatpush1.xpose.msra.mxu0 0.0
    %344 = vmatprep.subr.mxu0 0.0
    %345 = vmatpush1.xpose.msra.mxu0 0.0
    %346 = vmatprep.subr.mxu0 0.0
    %347 = vmatpush1.xpose.msra.mxu0 0.0
    %348 = vmatprep.subr.mxu0 0.0
    %349 = vmatpush1.xpose.msra.mxu0 0.0
    %350 = vmatprep.subr.mxu0 0.0
    %351 = vmatpush1.xpose.msra.mxu0 0.0
    %352 = vmatprep.subr.mxu0 0.0
    %353 = vmatpush1.xpose.msra.mxu0 0.0
    %354 = vmatprep.subr.mxu0 0.0
    %355 = vmatpush1.xpose.msra.mxu0 0.0
    %356 = vmatprep.subr.mxu0 0.0
    %357 = vmatpush1.xpose.msra.mxu0 0.0
    %358 = vmatprep.subr.mxu0 0.0
    %359 = vmatpush1.xpose.msra.mxu0 0.0
    %360 = vmatprep.subr.mxu0 0.0
    %361 = vmatpush1.xpose.msra.mxu0 0.0
    %362 = vmatprep.subr.mxu0 0.0
    %363 = vmatpush1.xpose.msra.mxu0 0.0
    %364 = vmatprep.subr.mxu0 0.0
    %365 = vmatpush1.xpose.msra.mxu0 0.0
    %366 = vmatprep.subr.mxu0 0.0
    %367 = vmatpush1.xpose.msra.mxu0 0.0
    %368 = vmatprep.subr.mxu0 0.0
    %369 = vmatpush1.xpose.msra.mxu0 0.0
    %370 = vmatprep.subr.mxu0 0.0
    %371 = vmatpush1.xpose.msra.mxu0 0.0
    %372 = vmatprep.subr.mxu0 0.0
    %373 = vmatpush1.xpose.msra.mxu0 0.0
    %374 = vmatprep.subr.mxu0 0.0
    %375 = vmatpush1.xpose.msra.mxu0 0.0
    %376 = vmatprep.subr.mxu0 0.0
    %377 = vmatpush1.xpose.msra.mxu0 0.0
    %378 = vmatprep.subr.mxu0 0.0
    %379 = vmatpush1.xpose.msra.mxu0 0.0
    %380 = vmatprep.subr.mxu0 0.0
    %381 = vmatpush1.xpose.msra.mxu0 0.0
    %382 = vmatprep.subr.mxu0 0.0
    %383 = vmatpush1.xpose.msra.mxu0 0.0
    %384 = vmatprep.subr.mxu0 0.0
    %385 = vmatpush1.xpose.msra.mxu0 0.0
    %386 = vmatprep.subr.mxu0 0.0
    %387 = vmatpush1.xpose.msra.mxu0 0.0
    %388 = vmatprep.subr.mxu0 0.0
    %389 = vmatpush1.xpose.msra.mxu0 0.0
    %390 = vmatprep.subr.mxu0 0.0
    %391 = vmatpush1.xpose.msra.mxu0 0.0
    %392 = vmatprep.subr.mxu0 0.0
    %393 = vmatpush1.xpose.msra.mxu0 0.0
    %394 = vmatprep.subr.mxu0 0.0
    %395 = vmatpush1.xpose.msra.mxu0 0.0
    %396 = vmatprep.subr.mxu0 0.0
    %397 = vmatpush1.xpose.msra.mxu0 0.0
    %398 = vmatprep.subr.mxu0 0.0
    %399 = vmatpush1.xpose.msra.mxu0 0.0
    %400 = vmatprep.subr.mxu0 0.0
    %401 = vmatpush1.xpose.msra.mxu0 0.0
    %402 = vmatprep.mubr.f32.mxu0 0.0
    %403 = vmatmul.mubr.f32.gmra.mrb[0].mxu0 %v334
    %v404 = vpop.f32.mrb[0].mxu0
    %v405 = vadd.f32 %v83, %v404
    %v406 = vpop.f32.mrb[0].mxu0
    %407 = vdwg.mxu0
    %vm408 = vcmask 64512
    %v409 = vsel %vm408, %v327, -inf
    %410 = vmax.xlane.f32.xlu0 %v409
    %v411 = vpop.xlane.xlu0 %410
    %v412 = vsel %vm408, %v405, -inf
    %413 = vmax.xlane.f32.xlu0 %v412
    %v414 = vpop.xlane.xlu0 %413
    %v415 = vsub.f32 %v327, %v411
    %v416 = vsub.f32 %v405, %v414
    %v417 = vmul.f32 %v415, 1.442695
    %v418 = vpow.pop %v417
    %v419 = vmul.f32 %v416, 1.442695
    %v420 = vpow.pop %v419
    %v421 = vsel %vm408, %v418, 0.0
    %422 = vadd.xlane.f32.xlu0 %v421
    %v423 = vpop.xlane.xlu0 %422
    %v424 = vsel %vm408, %v420, 0.0
    %425 = vadd.xlane.f32.xlu0 %v424
    %v426 = vpop.xlane.xlu0 %425
    %v427 = vrcp.pop %v423
    %v428 = vrcp.pop %v426
    %v429 = vmul.f32 %v418, %v427
    %v430 = vmul.f32 %v420, %v428
    %v432 = vsel %vm408, %v429, 0
    %434 = vmatprep.subr.mxu0 0.0
    %435 = vmatpush1.msra.mxu0 %v233
    %436 = vmatprep.subr.mxu0 0.0
    %437 = vmatpush1.msra.mxu0 0.0
    %438 = vmatprep.subr.mxu0 0.0
    %439 = vmatpush1.msra.mxu0 0.0
    %440 = vmatprep.subr.mxu0 0.0
    %441 = vmatpush1.msra.mxu0 0.0
    %442 = vmatprep.subr.mxu0 0.0
    %443 = vmatpush1.msra.mxu0 0.0
    %444 = vmatprep.subr.mxu0 0.0
    %445 = vmatpush1.msra.mxu0 0.0
    %446 = vmatprep.subr.mxu0 0.0
    %447 = vmatpush1.msra.mxu0 0.0
    %448 = vmatprep.subr.mxu0 0.0
    %449 = vmatpush1.msra.mxu0 0.0
    %450 = vmatprep.subr.mxu0 0.0
    %451 = vmatpush1.msra.mxu0 0.0
    %452 = vmatprep.subr.mxu0 0.0
    %453 = vmatpush1.msra.mxu0 0.0
    %454 = vmatprep.subr.mxu0 0.0
    %455 = vmatpush1.msra.mxu0 0.0
    %456 = vmatprep.subr.mxu0 0.0
    %457 = vmatpush1.msra.mxu0 0.0
    %458 = vmatprep.subr.mxu0 0.0
    %459 = vmatpush1.msra.mxu0 0.0
    %460 = vmatprep.subr.mxu0 0.0
    %461 = vmatpush1.msra.mxu0 0.0
    %462 = vmatprep.subr.mxu0 0.0
    %463 = vmatpush1.msra.mxu0 0.0
    %464 = vmatprep.subr.mxu0 0.0
    %465 = vmatpush1.msra.mxu0 0.0
    %466 = vmatprep.subr.mxu0 0.0
    %467 = vmatpush1.msra.mxu0 0.0
    %468 = vmatprep.subr.mxu0 0.0
    %469 = vmatpush1.msra.mxu0 0.0
    %470 = vmatprep.subr.mxu0 0.0
    %471 = vmatpush1.msra.mxu0 0.0
    %472 = vmatprep.subr.mxu0 0.0
    %473 = vmatpush1.msra.mxu0 0.0
    %474 = vmatprep.subr.mxu0 0.0
    %475 = vmatpush1.msra.mxu0 0.0
    %476 = vmatprep.subr.mxu0 0.0
    %477 = vmatpush1.msra.mxu0 0.0
    %478 = vmatprep.subr.mxu0 0.0
    %479 = vmatpush1.msra.mxu0 0.0
    %480 = vmatprep.subr.mxu0 0.0
    %481 = vmatpush1.msra.mxu0 0.0
    %482 = vmatprep.subr.mxu0 0.0
    %483 = vmatpush1.msra.mxu0 0.0
    %484 = vmatprep.subr.mxu0 0.0
    %485 = vmatpush1.msra.mxu0 0.0
    %486 = vmatprep.subr.mxu0 0.0
    %487 = vmatpush1.msra.mxu0 0.0
    %488 = vmatprep.subr.mxu0 0.0
    %489 = vmatpush1.msra.mxu0 0.0
    %490 = vmatprep.subr.mxu0 0.0
    %491 = vmatpush1.msra.mxu0 0.0
    %492 = vmatprep.subr.mxu0 0.0
    %493 = vmatpush1.msra.mxu0 0.0
    %494 = vmatprep.subr.mxu0 0.0
    %495 = vmatpush1.msra.mxu0 0.0
    %496 = vmatprep.subr.mxu0 0.0
    %497 = vmatpush1.msra.mxu0 0.0
    %498 = vmatprep.mubr.f32.mxu0 0.0
    %499 = vmatmul.mubr.f32.gmra.mrb[0].mxu0 %v432
    %v500 = vpop.f32.mrb[0].mxu0
    %v501 = vadd.f32 0.0, %v500
    %v502 = vpop.f32.mrb[0].mxu0
    %503 = vdwg.mxu0
    %v505 = vsel %vm408, %v430, 0
    %507 = vmatprep.subr.mxu0 0.0
    %508 = vmatpush1.msra.mxu0 %v239
    %509 = vmatprep.subr.mxu0 0.0
    %510 = vmatpush1.msra.mxu0 0.0
    %511 = vmatprep.subr.mxu0 0.0
    %512 = vmatpush1.msra.mxu0 0.0
    %513 = vmatprep.subr.mxu0 0.0
    %514 = vmatpush1.msra.mxu0 0.0
    %515 = vmatprep.subr.mxu0 0.0
    %516 = vmatpush1.msra.mxu0 0.0
    %517 = vmatprep.subr.mxu0 0.0
    %518 = vmatpush1.msra.mxu0 0.0
    %519 = vmatprep.subr.mxu0 0.0
    %520 = vmatpush1.msra.mxu0 0.0
    %521 = vmatprep.subr.mxu0 0.0
    %522 = vmatpush1.msra.mxu0 0.0
    %523 = vmatprep.subr.mxu0 0.0
    %524 = vmatpush1.msra.mxu0 0.0
    %525 = vmatprep.subr.mxu0 0.0
    %526 = vmatpush1.msra.mxu0 0.0
    %527 = vmatprep.subr.mxu0 0.0
    %528 = vmatpush1.msra.mxu0 0.0
    %529 = vmatprep.subr.mxu0 0.0
    %530 = vmatpush1.msra.mxu0 0.0
    %531 = vmatprep.subr.mxu0 0.0
    %532 = vmatpush1.msra.mxu0 0.0
    %533 = vmatprep.subr.mxu0 0.0
    %534 = vmatpush1.msra.mxu0 0.0
    %535 = vmatprep.subr.mxu0 0.0
    %536 = vmatpush1.msra.mxu0 0.0
    %537 = vmatprep.subr.mxu0 0.0
    %538 = vmatpush1.msra.mxu0 0.0
    %539 = vmatprep.subr.mxu0 0.0
    %540 = vmatpush1.msra.mxu0 0.0
    %541 = vmatprep.subr.mxu0 0.0
    %542 = vmatpush1.msra.mxu0 0.0
    %543 = vmatprep.subr.mxu0 0.0
    %544 = vmatpush1.msra.mxu0 0.0
    %545 = vmatprep.subr.mxu0 0.0
    %546 = vmatpush1.msra.mxu0 0.0
    %547 = vmatprep.subr.mxu0 0.0
    %548 = vmatpush1.msra.mxu0 0.0
    %549 = vmatprep.subr.mxu0 0.0
    %550 = vmatpush1.msra.mxu0 0.0
    %551 = vmatprep.subr.mxu0 0.0
    %552 = vmatpush1.msra.mxu0 0.0
    %553 = vmatprep.subr.mxu0 0.0
    %554 = vmatpush1.msra.mxu0 0.0
    %555 = vmatprep.subr.mxu0 0.0
    %556 = vmatpush1.msra.mxu0 0.0
    %557 = vmatprep.subr.mxu0 0.0
    %558 = vmatpush1.msra.mxu0 0.0
    %559 = vmatprep.subr.mxu0 0.0
    %560 = vmatpush1.msra.mxu0 0.0
    %561 = vmatprep.subr.mxu0 0.0
    %562 = vmatpush1.msra.mxu0 0.0
    %563 = vmatprep.subr.mxu0 0.0
    %564 = vmatpush1.msra.mxu0 0.0
    %565 = vmatprep.subr.mxu0 0.0
    %566 = vmatpush1.msra.mxu0 0.0
    %567 = vmatprep.subr.mxu0 0.0
    %568 = vmatpush1.msra.mxu0 0.0
    %569 = vmatprep.subr.mxu0 0.0
    %570 = vmatpush1.msra.mxu0 0.0
    %571 = vmatprep.mubr.f32.mxu0 0.0
    %572 = vmatmul.mubr.f32.gmra.mrb[0].mxu0 %v505
    %v573 = vpop.f32.mrb[0].mxu0
    %v574 = vadd.f32 0.0, %v573
    %v575 = vpop.f32.mrb[0].mxu0
    %576 = vdwg.mxu0
    %577 = vrot.lane.b32.xlu0 %v249, 112
    %v578 = vpop.permute.xlu0 %577
    %579 = vrot.lane.b32.xlu0 %v231, 48
    %v580 = vpop.permute.xlu0 %579
    %v581 = vsel %vm254, %v578, 0
    %v583 = vsel %vm254, %v580, 0
    %585 = vmatprep.subr.mxu0 0.0
    %586 = vmatpush1.xpose.msra.mxu0 %v583
    %587 = vmatprep.subr.mxu0 0.0
    %588 = vmatpush1.xpose.msra.mxu0 0.0
    %589 = vmatprep.subr.mxu0 0.0
    %590 = vmatpush1.xpose.msra.mxu0 0.0
    %591 = vmatprep.subr.mxu0 0.0
    %592 = vmatpush1.xpose.msra.mxu0 0.0
    %593 = vmatprep.subr.mxu0 0.0
    %594 = vmatpush1.xpose.msra.mxu0 0.0
    %595 = vmatprep.subr.mxu0 0.0
    %596 = vmatpush1.xpose.msra.mxu0 0.0
    %597 = vmatprep.subr.mxu0 0.0
    %598 = vmatpush1.xpose.msra.mxu0 0.0
    %599 = vmatprep.subr.mxu0 0.0
    %600 = vmatpush1.xpose.msra.mxu0 0.0
    %601 = vmatprep.subr.mxu0 0.0
    %602 = vmatpush1.xpose.msra.mxu0 0.0
    %603 = vmatprep.subr.mxu0 0.0
    %604 = vmatpush1.xpose.msra.mxu0 0.0
    %605 = vmatprep.subr.mxu0 0.0
    %606 = vmatpush1.xpose.msra.mxu0 0.0
    %607 = vmatprep.subr.mxu0 0.0
    %608 = vmatpush1.xpose.msra.mxu0 0.0
    %609 = vmatprep.subr.mxu0 0.0
    %610 = vmatpush1.xpose.msra.mxu0 0.0
    %611 = vmatprep.subr.mxu0 0.0
    %612 = vmatpush1.xpose.msra.mxu0 0.0
    %613 = vmatprep.subr.mxu0 0.0
    %614 = vmatpush1.xpose.msra.mxu0 0.0
    %615 = vmatprep.subr.mxu0 0.0
    %616 = vmatpush1.xpose.msra.mxu0 0.0
    %617 = vmatprep.subr.mxu0 0.0
    %618 = vmatpush1.xpose.msra.mxu0 0.0
    %619 = vmatprep.subr.mxu0 0.0
    %620 = vmatpush1.xpose.msra.mxu0 0.0
    %621 = vmatprep.subr.mxu0 0.0
    %622 = vmatpush1.xpose.msra.mxu0 0.0
    %623 = vmatprep.subr.mxu0 0.0
    %624 = vmatpush1.xpose.msra.mxu0 0.0
    %625 = vmatprep.subr.mxu0 0.0
    %626 = vmatpush1.xpose.msra.mxu0 0.0
    %627 = vmatprep.subr.mxu0 0.0
    %628 = vmatpush1.xpose.msra.mxu0 0.0
    %629 = vmatprep.subr.mxu0 0.0
    %630 = vmatpush1.xpose.msra.mxu0 0.0
    %631 = vmatprep.subr.mxu0 0.0
    %632 = vmatpush1.xpose.msra.mxu0 0.0
    %633 = vmatprep.subr.mxu0 0.0
    %634 = vmatpush1.xpose.msra.mxu0 0.0
    %635 = vmatprep.subr.mxu0 0.0
    %636 = vmatpush1.xpose.msra.mxu0 0.0
    %637 = vmatprep.subr.mxu0 0.0
    %638 = vmatpush1.xpose.msra.mxu0 0.0
    %639 = vmatprep.subr.mxu0 0.0
    %640 = vmatpush1.xpose.msra.mxu0 0.0
    %641 = vmatprep.subr.mxu0 0.0
    %642 = vmatpush1.xpose.msra.mxu0 0.0
    %643 = vmatprep.subr.mxu0 0.0
    %644 = vmatpush1.xpose.msra.mxu0 0.0
    %645 = vmatprep.subr.mxu0 0.0
    %646 = vmatpush1.xpose.msra.mxu0 0.0
    %647 = vmatprep.subr.mxu0 0.0
    %648 = vmatpush1.xpose.msra.mxu0 0.0
    %649 = vmatprep.mubr.f32.mxu0 0.0
    %650 = vmatmul.mubr.f32.gmra.mrb[0].mxu0 %v581
    %v651 = vpop.f32.mrb[0].mxu0
    %v652 = vadd.f32 %v83, %v651
    %v653 = vpop.f32.mrb[0].mxu0
    %654 = vdwg.mxu0
    %655 = vrot.lane.b32.xlu0 %v250, 112
    %v656 = vpop.permute.xlu0 %655
    %657 = vrot.lane.b32.xlu0 %v237, 48
    %v658 = vpop.permute.xlu0 %657
    %v659 = vsel %vm254, %v656, 0
    %v661 = vsel %vm254, %v658, 0
    %663 = vmatprep.subr.mxu0 0.0
    %664 = vmatpush1.xpose.msra.mxu0 %v661
    %665 = vmatprep.subr.mxu0 0.0
    %666 = vmatpush1.xpose.msra.mxu0 0.0
    %667 = vmatprep.subr.mxu0 0.0
    %668 = vmatpush1.xpose.msra.mxu0 0.0
    %669 = vmatprep.subr.mxu0 0.0
    %670 = vmatpush1.xpose.msra.mxu0 0.0
    %671 = vmatprep.subr.mxu0 0.0
    %672 = vmatpush1.xpose.msra.mxu0 0.0
    %673 = vmatprep.subr.mxu0 0.0
    %674 = vmatpush1.xpose.msra.mxu0 0.0
    %675 = vmatprep.subr.mxu0 0.0
    %676 = vmatpush1.xpose.msra.mxu0 0.0
    %677 = vmatprep.subr.mxu0 0.0
    %678 = vmatpush1.xpose.msra.mxu0 0.0
    %679 = vmatprep.subr.mxu0 0.0
    %680 = vmatpush1.xpose.msra.mxu0 0.0
    %681 = vmatprep.subr.mxu0 0.0
    %682 = vmatpush1.xpose.msra.mxu0 0.0
    %683 = vmatprep.subr.mxu0 0.0
    %684 = vmatpush1.xpose.msra.mxu0 0.0
    %685 = vmatprep.subr.mxu0 0.0
    %686 = vmatpush1.xpose.msra.mxu0 0.0
    %687 = vmatprep.subr.mxu0 0.0
    %688 = vmatpush1.xpose.msra.mxu0 0.0
    %689 = vmatprep.subr.mxu0 0.0
    %690 = vmatpush1.xpose.msra.mxu0 0.0
    %691 = vmatprep.subr.mxu0 0.0
    %692 = vmatpush1.xpose.msra.mxu0 0.0
    %693 = vmatprep.subr.mxu0 0.0
    %694 = vmatpush1.xpose.msra.mxu0 0.0
    %695 = vmatprep.subr.mxu0 0.0
    %696 = vmatpush1.xpose.msra.mxu0 0.0
    %697 = vmatprep.subr.mxu0 0.0
    %698 = vmatpush1.xpose.msra.mxu0 0.0
    %699 = vmatprep.subr.mxu0 0.0
    %700 = vmatpush1.xpose.msra.mxu0 0.0
    %701 = vmatprep.subr.mxu0 0.0
    %702 = vmatpush1.xpose.msra.mxu0 0.0
    %703 = vmatprep.subr.mxu0 0.0
    %704 = vmatpush1.xpose.msra.mxu0 0.0
    %705 = vmatprep.subr.mxu0 0.0
    %706 = vmatpush1.xpose.msra.mxu0 0.0
    %707 = vmatprep.subr.mxu0 0.0
    %708 = vmatpush1.xpose.msra.mxu0 0.0
    %709 = vmatprep.subr.mxu0 0.0
    %710 = vmatpush1.xpose.msra.mxu0 0.0
    %711 = vmatprep.subr.mxu0 0.0
    %712 = vmatpush1.xpose.msra.mxu0 0.0
    %713 = vmatprep.subr.mxu0 0.0
    %714 = vmatpush1.xpose.msra.mxu0 0.0
    %715 = vmatprep.subr.mxu0 0.0
    %716 = vmatpush1.xpose.msra.mxu0 0.0
    %717 = vmatprep.subr.mxu0 0.0
    %718 = vmatpush1.xpose.msra.mxu0 0.0
    %719 = vmatprep.subr.mxu0 0.0
    %720 = vmatpush1.xpose.msra.mxu0 0.0
    %721 = vmatprep.subr.mxu0 0.0
    %722 = vmatpush1.xpose.msra.mxu0 0.0
    %723 = vmatprep.subr.mxu0 0.0
    %724 = vmatpush1.xpose.msra.mxu0 0.0
    %725 = vmatprep.subr.mxu0 0.0
    %726 = vmatpush1.xpose.msra.mxu0 0.0
    %727 = vmatprep.mubr.f32.mxu0 0.0
    %728 = vmatmul.mubr.f32.gmra.mrb[0].mxu0 %v659
    %v729 = vpop.f32.mrb[0].mxu0
    %v730 = vadd.f32 %v83, %v729
    %v731 = vpop.f32.mrb[0].mxu0
    %732 = vdwg.mxu0
    %v733 = vsel %vm408, %v652, -inf
    %734 = vmax.xlane.f32.xlu0 %v733
    %v735 = vpop.xlane.xlu0 %734
    %v736 = vsel %vm408, %v730, -inf
    %737 = vmax.xlane.f32.xlu0 %v736
    %v738 = vpop.xlane.xlu0 %737
    %v739 = vsub.f32 %v652, %v735
    %v740 = vsub.f32 %v730, %v738
    %v741 = vmul.f32 %v739, 1.442695
    %v742 = vpow.pop %v741
    %v743 = vmul.f32 %v740, 1.442695
    %v744 = vpow.pop %v743
    %v745 = vsel %vm408, %v742, 0.0
    %746 = vadd.xlane.f32.xlu0 %v745
    %v747 = vpop.xlane.xlu0 %746
    %v748 = vsel %vm408, %v744, 0.0
    %749 = vadd.xlane.f32.xlu0 %v748
    %v750 = vpop.xlane.xlu0 %749
    %v751 = vrcp.pop %v747
    %v752 = vrcp.pop %v750
    %v753 = vmul.f32 %v742, %v751
    %v754 = vmul.f32 %v744, %v752
    %756 = vrot.lane.b32.xlu0 %v233, 112
    %v757 = vpop.permute.xlu0 %756
    %v760 = vsel %vm408, %v753, 0
    %762 = vmatprep.subr.mxu0 0.0
    %763 = vmatpush1.msra.mxu0 %v757
    %764 = vmatprep.subr.mxu0 0.0
    %765 = vmatpush1.msra.mxu0 0.0
    %766 = vmatprep.subr.mxu0 0.0
    %767 = vmatpush1.msra.mxu0 0.0
    %768 = vmatprep.subr.mxu0 0.0
    %769 = vmatpush1.msra.mxu0 0.0
    %770 = vmatprep.subr.mxu0 0.0
    %771 = vmatpush1.msra.mxu0 0.0
    %772 = vmatprep.subr.mxu0 0.0
    %773 = vmatpush1.msra.mxu0 0.0
    %774 = vmatprep.subr.mxu0 0.0
    %775 = vmatpush1.msra.mxu0 0.0
    %776 = vmatprep.subr.mxu0 0.0
    %777 = vmatpush1.msra.mxu0 0.0
    %778 = vmatprep.subr.mxu0 0.0
    %779 = vmatpush1.msra.mxu0 0.0
    %780 = vmatprep.subr.mxu0 0.0
    %781 = vmatpush1.msra.mxu0 0.0
    %782 = vmatprep.subr.mxu0 0.0
    %783 = vmatpush1.msra.mxu0 0.0
    %784 = vmatprep.subr.mxu0 0.0
    %785 = vmatpush1.msra.mxu0 0.0
    %786 = vmatprep.subr.mxu0 0.0
    %787 = vmatpush1.msra.mxu0 0.0
    %788 = vmatprep.subr.mxu0 0.0
    %789 = vmatpush1.msra.mxu0 0.0
    %790 = vmatprep.subr.mxu0 0.0
    %791 = vmatpush1.msra.mxu0 0.0
    %792 = vmatprep.subr.mxu0 0.0
    %793 = vmatpush1.msra.mxu0 0.0
    %794 = vmatprep.subr.mxu0 0.0
    %795 = vmatpush1.msra.mxu0 0.0
    %796 = vmatprep.subr.mxu0 0.0
    %797 = vmatpush1.msra.mxu0 0.0
    %798 = vmatprep.subr.mxu0 0.0
    %799 = vmatpush1.msra.mxu0 0.0
    %800 = vmatprep.subr.mxu0 0.0
    %801 = vmatpush1.msra.mxu0 0.0
    %802 = vmatprep.subr.mxu0 0.0
    %803 = vmatpush1.msra.mxu0 0.0
    %804 = vmatprep.subr.mxu0 0.0
    %805 = vmatpush1.msra.mxu0 0.0
    %806 = vmatprep.subr.mxu0 0.0
    %807 = vmatpush1.msra.mxu0 0.0
    %808 = vmatprep.subr.mxu0 0.0
    %809 = vmatpush1.msra.mxu0 0.0
    %810 = vmatprep.subr.mxu0 0.0
    %811 = vmatpush1.msra.mxu0 0.0
    %812 = vmatprep.subr.mxu0 0.0
    %813 = vmatpush1.msra.mxu0 0.0
    %814 = vmatprep.subr.mxu0 0.0
    %815 = vmatpush1.msra.mxu0 0.0
    %816 = vmatprep.subr.mxu0 0.0
    %817 = vmatpush1.msra.mxu0 0.0
    %818 = vmatprep.subr.mxu0 0.0
    %819 = vmatpush1.msra.mxu0 0.0
    %820 = vmatprep.subr.mxu0 0.0
    %821 = vmatpush1.msra.mxu0 0.0
    %822 = vmatprep.subr.mxu0 0.0
    %823 = vmatpush1.msra.mxu0 0.0
    %824 = vmatprep.subr.mxu0 0.0
    %825 = vmatpush1.msra.mxu0 0.0
    %826 = vmatprep.mubr.f32.mxu0 0.0
    %827 = vmatmul.mubr.f32.gmra.mrb[0].mxu0 %v760
    %v828 = vpop.f32.mrb[0].mxu0
    %v829 = vadd.f32 0.0, %v828
    %v830 = vpop.f32.mrb[0].mxu0
    %831 = vdwg.mxu0
    %833 = vrot.lane.b32.xlu0 %v239, 112
    %v834 = vpop.permute.xlu0 %833
    %v837 = vsel %vm408, %v754, 0
    %839 = vmatprep.subr.mxu0 0.0
    %840 = vmatpush1.msra.mxu0 %v834
    %841 = vmatprep.subr.mxu0 0.0
    %842 = vmatpush1.msra.mxu0 0.0
    %843 = vmatprep.subr.mxu0 0.0
    %844 = vmatpush1.msra.mxu0 0.0
    %845 = vmatprep.subr.mxu0 0.0
    %846 = vmatpush1.msra.mxu0 0.0
    %847 = vmatprep.subr.mxu0 0.0
    %848 = vmatpush1.msra.mxu0 0.0
    %849 = vmatprep.subr.mxu0 0.0
    %850 = vmatpush1.msra.mxu0 0.0
    %851 = vmatprep.subr.mxu0 0.0
    %852 = vmatpush1.msra.mxu0 0.0
    %853 = vmatprep.subr.mxu0 0.0
    %854 = vmatpush1.msra.mxu0 0.0
    %855 = vmatprep.subr.mxu0 0.0
    %856 = vmatpush1.msra.mxu0 0.0
    %857 = vmatprep.subr.mxu0 0.0
    %858 = vmatpush1.msra.mxu0 0.0
    %859 = vmatprep.subr.mxu0 0.0
    %860 = vmatpush1.msra.mxu0 0.0
    %861 = vmatprep.subr.mxu0 0.0
    %862 = vmatpush1.msra.mxu0 0.0
    %863 = vmatprep.subr.mxu0 0.0
    %864 = vmatpush1.msra.mxu0 0.0
    %865 = vmatprep.subr.mxu0 0.0
    %866 = vmatpush1.msra.mxu0 0.0
    %867 = vmatprep.subr.mxu0 0.0
    %868 = vmatpush1.msra.mxu0 0.0
    %869 = vmatprep.subr.mxu0 0.0
    %870 = vmatpush1.msra.mxu0 0.0
    %871 = vmatprep.subr.mxu0 0.0
    %872 = vmatpush1.msra.mxu0 0.0
    %873 = vmatprep.subr.mxu0 0.0
    %874 = vmatpush1.msra.mxu0 0.0
    %875 = vmatprep.subr.mxu0 0.0
    %876 = vmatpush1.msra.mxu0 0.0
    %877 = vmatprep.subr.mxu0 0.0
    %878 = vmatpush1.msra.mxu0 0.0
    %879 = vmatprep.subr.mxu0 0.0
    %880 = vmatpush1.msra.mxu0 0.0
    %881 = vmatprep.subr.mxu0 0.0
    %882 = vmatpush1.msra.mxu0 0.0
    %883 = vmatprep.subr.mxu0 0.0
    %884 = vmatpush1.msra.mxu0 0.0
    %885 = vmatprep.subr.mxu0 0.0
    %886 = vmatpush1.msra.mxu0 0.0
    %887 = vmatprep.subr.mxu0 0.0
    %888 = vmatpush1.msra.mxu0 0.0
    %889 = vmatprep.subr.mxu0 0.0
    %890 = vmatpush1.msra.mxu0 0.0
    %891 = vmatprep.subr.mxu0 0.0
    %892 = vmatpush1.msra.mxu0 0.0
    %893 = vmatprep.subr.mxu0 0.0
    %894 = vmatpush1.msra.mxu0 0.0
    %895 = vmatprep.subr.mxu0 0.0
    %896 = vmatpush1.msra.mxu0 0.0
    %897 = vmatprep.subr.mxu0 0.0
    %898 = vmatpush1.msra.mxu0 0.0
    %899 = vmatprep.subr.mxu0 0.0
    %900 = vmatpush1.msra.mxu0 0.0
    %901 = vmatprep.subr.mxu0 0.0
    %902 = vmatpush1.msra.mxu0 0.0
    %903 = vmatprep.mubr.f32.mxu0 0.0
    %904 = vmatmul.mubr.f32.gmra.mrb[0].mxu0 %v837
    %v905 = vpop.f32.mrb[0].mxu0
    %v906 = vadd.f32 0.0, %v905
    %v907 = vpop.f32.mrb[0].mxu0
    %908 = vdwg.mxu0
    %v910 = vsel %vm254, %v829, 0
    %v913 = vsel %vm254, %v906, 0
    %915 = vmatprep.subr.mxu0 0.0
    %916 = vmatpush1.msra.mxu0 %v243
    %917 = vmatprep.subr.mxu0 0.0
    %918 = vmatpush1.msra.mxu0 %v244
    %919 = vmatprep.subr.mxu0 0.0
    %920 = vmatpush1.msra.mxu0 0.0
    %921 = vmatprep.subr.mxu0 0.0
    %922 = vmatpush1.msra.mxu0 0.0
    %923 = vmatprep.subr.mxu0 0.0
    %924 = vmatpush1.msra.mxu0 0.0
    %925 = vmatprep.subr.mxu0 0.0
    %926 = vmatpush1.msra.mxu0 0.0
    %927 = vmatprep.subr.mxu0 0.0
    %928 = vmatpush1.msra.mxu0 0.0
    %929 = vmatprep.subr.mxu0 0.0
    %930 = vmatpush1.msra.mxu0 0.0
    %931 = vmatprep.subr.mxu0 0.0
    %932 = vmatpush1.msra.mxu0 0.0
    %933 = vmatprep.subr.mxu0 0.0
    %934 = vmatpush1.msra.mxu0 0.0
    %935 = vmatprep.subr.mxu0 0.0
    %936 = vmatpush1.msra.mxu0 0.0
    %937 = vmatprep.subr.mxu0 0.0
    %938 = vmatpush1.msra.mxu0 0.0
    %939 = vmatprep.subr.mxu0 0.0
    %940 = vmatpush1.msra.mxu0 0.0
    %941 = vmatprep.subr.mxu0 0.0
    %942 = vmatpush1.msra.mxu0 0.0
    %943 = vmatprep.subr.mxu0 0.0
    %944 = vmatpush1.msra.mxu0 0.0
    %945 = vmatprep.subr.mxu0 0.0
    %946 = vmatpush1.msra.mxu0 0.0
    %947 = vmatprep.subr.mxu0 0.0
    %948 = vmatpush1.msra.mxu0 0.0
    %949 = vmatprep.subr.mxu0 0.0
    %950 = vmatpush1.msra.mxu0 0.0
    %951 = vmatprep.subr.mxu0 0.0
    %952 = vmatpush1.msra.mxu0 0.0
    %953 = vmatprep.subr.mxu0 0.0
    %954 = vmatpush1.msra.mxu0 0.0
    %955 = vmatprep.subr.mxu0 0.0
    %956 = vmatpush1.msra.mxu0 0.0
    %957 = vmatprep.subr.mxu0 0.0
    %958 = vmatpush1.msra.mxu0 0.0
    %959 = vmatprep.subr.mxu0 0.0
    %960 = vmatpush1.msra.mxu0 0.0
    %961 = vmatprep.subr.mxu0 0.0
    %962 = vmatpush1.msra.mxu0 0.0
    %963 = vmatprep.subr.mxu0 0.0
    %964 = vmatpush1.msra.mxu0 0.0
    %965 = vmatprep.subr.mxu0 0.0
    %966 = vmatpush1.msra.mxu0 0.0
    %967 = vmatprep.subr.mxu0 0.0
    %968 = vmatpush1.msra.mxu0 0.0
    %969 = vmatprep.subr.mxu0 0.0
    %970 = vmatpush1.msra.mxu0 0.0
    %971 = vmatprep.subr.mxu0 0.0
    %972 = vmatpush1.msra.mxu0 0.0
    %973 = vmatprep.subr.mxu0 0.0
    %974 = vmatpush1.msra.mxu0 0.0
    %975 = vmatprep.subr.mxu0 0.0
    %976 = vmatpush1.msra.mxu0 0.0
    %977 = vmatprep.subr.mxu0 0.0
    %978 = vmatpush1.msra.mxu0 0.0
    %979 = vmatprep.mubr.f32.mxu0 0.0
    %980 = vmatmul.mubr.f32.gmra.mrb[0].mxu0 %v910
    %v981 = vpop.f32.mrb[0].mxu0
    %v982 = vadd.f32 0.0, %v981
    %v983 = vpop.f32.mrb[0].mxu0
    %984 = vmatprep.mubr.f32.mxu0 0.0
    %985 = vmatmul.mubr.f32.gmra.mrb[0].mxu0 %v913
    %v986 = vpop.f32.mrb[0].mxu0
    %v987 = vadd.f32 0.0, %v986
    %v988 = vpop.f32.mrb[0].mxu0
    %989 = vdwg.mxu0
    %v991 = vsel %vm254, %v501, 0
    %v994 = vsel %vm254, %v574, 0
    %996 = vmatprep.subr.mxu0 0.0
    %997 = vmatpush1.msra.mxu0 %v241
    %998 = vmatprep.subr.mxu0 0.0
    %999 = vmatpush1.msra.mxu0 %v242
    %1000 = vmatprep.subr.mxu0 0.0
    %1001 = vmatpush1.msra.mxu0 0.0
    %1002 = vmatprep.subr.mxu0 0.0
    %1003 = vmatpush1.msra.mxu0 0.0
    %1004 = vmatprep.subr.mxu0 0.0
    %1005 = vmatpush1.msra.mxu0 0.0
    %1006 = vmatprep.subr.mxu0 0.0
    %1007 = vmatpush1.msra.mxu0 0.0
    %1008 = vmatprep.subr.mxu0 0.0
    %1009 = vmatpush1.msra.mxu0 0.0
    %1010 = vmatprep.subr.mxu0 0.0
    %1011 = vmatpush1.msra.mxu0 0.0
    %1012 = vmatprep.subr.mxu0 0.0
    %1013 = vmatpush1.msra.mxu0 0.0
    %1014 = vmatprep.subr.mxu0 0.0
    %1015 = vmatpush1.msra.mxu0 0.0
    %1016 = vmatprep.subr.mxu0 0.0
    %1017 = vmatpush1.msra.mxu0 0.0
    %1018 = vmatprep.subr.mxu0 0.0
    %1019 = vmatpush1.msra.mxu0 0.0
    %1020 = vmatprep.subr.mxu0 0.0
    %1021 = vmatpush1.msra.mxu0 0.0
    %1022 = vmatprep.subr.mxu0 0.0
    %1023 = vmatpush1.msra.mxu0 0.0
    %1024 = vmatprep.subr.mxu0 0.0
    %1025 = vmatpush1.msra.mxu0 0.0
    %1026 = vmatprep.subr.mxu0 0.0
    %1027 = vmatpush1.msra.mxu0 0.0
    %1028 = vmatprep.subr.mxu0 0.0
    %1029 = vmatpush1.msra.mxu0 0.0
    %1030 = vmatprep.subr.mxu0 0.0
    %1031 = vmatpush1.msra.mxu0 0.0
    %1032 = vmatprep.subr.mxu0 0.0
    %1033 = vmatpush1.msra.mxu0 0.0
    %1034 = vmatprep.subr.mxu0 0.0
    %1035 = vmatpush1.msra.mxu0 0.0
    %1036 = vmatprep.subr.mxu0 0.0
    %1037 = vmatpush1.msra.mxu0 0.0
    %1038 = vmatprep.subr.mxu0 0.0
    %1039 = vmatpush1.msra.mxu0 0.0
    %1040 = vmatprep.subr.mxu0 0.0
    %1041 = vmatpush1.msra.mxu0 0.0
    %1042 = vmatprep.subr.mxu0 0.0
    %1043 = vmatpush1.msra.mxu0 0.0
    %1044 = vmatprep.subr.mxu0 0.0
    %1045 = vmatpush1.msra.mxu0 0.0
    %1046 = vmatprep.subr.mxu0 0.0
    %1047 = vmatpush1.msra.mxu0 0.0
    %1048 = vmatprep.subr.mxu0 0.0
    %1049 = vmatpush1.msra.mxu0 0.0
    %1050 = vmatprep.subr.mxu0 0.0
    %1051 = vmatpush1.msra.mxu0 0.0
    %1052 = vmatprep.subr.mxu0 0.0
    %1053 = vmatpush1.msra.mxu0 0.0
    %1054 = vmatprep.subr.mxu0 0.0
    %1055 = vmatpush1.msra.mxu0 0.0
    %1056 = vmatprep.subr.mxu0 0.0
    %1057 = vmatpush1.msra.mxu0 0.0
    %1058 = vmatprep.subr.mxu0 0.0
    %1059 = vmatpush1.msra.mxu0 0.0
    %1060 = vmatprep.mubr.f32.mxu0 0.0
    %1061 = vmatmul.mubr.f32.gmra.mrb[0].mxu0 %v991
    %v1062 = vpop.f32.mrb[0].mxu0
    %v1063 = vadd.f32 %v982, %v1062
    %v1064 = vpop.f32.mrb[0].mxu0
    %1065 = vmatprep.mubr.f32.mxu0 0.0
    %1066 = vmatmul.mubr.f32.gmra.mrb[0].mxu0 %v994
    %v1067 = vpop.f32.mrb[0].mxu0
    %v1068 = vadd.f32 %v987, %v1067
    %v1069 = vpop.f32.mrb[0].mxu0
    %1070 = vdwg.mxu0
    %1071 = vrot.lane.b32.xlu0 %v249, 96
    %v1072 = vpop.permute.xlu0 %1071
    %1073 = vrot.lane.b32.xlu0 %v231, 32
    %v1074 = vpop.permute.xlu0 %1073
    %v1075 = vsel %vm254, %v1072, 0
    %v1077 = vsel %vm254, %v1074, 0
    %1079 = vmatprep.subr.mxu0 0.0
    %1080 = vmatpush1.xpose.msra.mxu0 %v1077
    %1081 = vmatprep.subr.mxu0 0.0
    %1082 = vmatpush1.xpose.msra.mxu0 0.0
    %1083 = vmatprep.subr.mxu0 0.0
    %1084 = vmatpush1.xpose.msra.mxu0 0.0
    %1085 = vmatprep.subr.mxu0 0.0
    %1086 = vmatpush1.xpose.msra.mxu0 0.0
    %1087 = vmatprep.subr.mxu0 0.0
    %1088 = vmatpush1.xpose.msra.mxu0 0.0
    %1089 = vmatprep.subr.mxu0 0.0
    %1090 = vmatpush1.xpose.msra.mxu0 0.0
    %1091 = vmatprep.subr.mxu0 0.0
    %1092 = vmatpush1.xpose.msra.mxu0 0.0
    %1093 = vmatprep.subr.mxu0 0.0
    %1094 = vmatpush1.xpose.msra.mxu0 0.0
    %1095 = vmatprep.subr.mxu0 0.0
    %1096 = vmatpush1.xpose.msra.mxu0 0.0
    %1097 = vmatprep.subr.mxu0 0.0
    %1098 = vmatpush1.xpose.msra.mxu0 0.0
    %1099 = vmatprep.subr.mxu0 0.0
    %1100 = vmatpush1.xpose.msra.mxu0 0.0
    %1101 = vmatprep.subr.mxu0 0.0
    %1102 = vmatpush1.xpose.msra.mxu0 0.0
    %1103 = vmatprep.subr.mxu0 0.0
    %1104 = vmatpush1.xpose.msra.mxu0 0.0
    %1105 = vmatprep.subr.mxu0 0.0
    %1106 = vmatpush1.xpose.msra.mxu0 0.0
    %1107 = vmatprep.subr.mxu0 0.0
    %1108 = vmatpush1.xpose.msra.mxu0 0.0
    %1109 = vmatprep.subr.mxu0 0.0
    %1110 = vmatpush1.xpose.msra.mxu0 0.0
    %1111 = vmatprep.subr.mxu0 0.0
    %1112 = vmatpush1.xpose.msra.mxu0 0.0
    %1113 = vmatprep.subr.mxu0 0.0
    %1114 = vmatpush1.xpose.msra.mxu0 0.0
    %1115 = vmatprep.subr.mxu0 0.0
    %1116 = vmatpush1.xpose.msra.mxu0 0.0
    %1117 = vmatprep.subr.mxu0 0.0
    %1118 = vmatpush1.xpose.msra.mxu0 0.0
    %1119 = vmatprep.subr.mxu0 0.0
    %1120 = vmatpush1.xpose.msra.mxu0 0.0
    %1121 = vmatprep.subr.mxu0 0.0
    %1122 = vmatpush1.xpose.msra.mxu0 0.0
    %1123 = vmatprep.subr.mxu0 0.0
    %1124 = vmatpush1.xpose.msra.mxu0 0.0
    %1125 = vmatprep.subr.mxu0 0.0
    %1126 = vmatpush1.xpose.msra.mxu0 0.0
    %1127 = vmatprep.subr.mxu0 0.0
    %1128 = vmatpush1.xpose.msra.mxu0 0.0
    %1129 = vmatprep.subr.mxu0 0.0
    %1130 = vmatpush1.xpose.msra.mxu0 0.0
    %1131 = vmatprep.subr.mxu0 0.0
    %1132 = vmatpush1.xpose.msra.mxu0 0.0
    %1133 = vmatprep.subr.mxu0 0.0
    %1134 = vmatpush1.xpose.msra.mxu0 0.0
    %1135 = vmatprep.subr.mxu0 0.0
    %1136 = vmatpush1.xpose.msra.mxu0 0.0
    %1137 = vmatprep.subr.mxu0 0.0
    %1138 = vmatpush1.xpose.msra.mxu0 0.0
    %1139 = vmatprep.subr.mxu0 0.0
    %1140 = vmatpush1.xpose.msra.mxu0 0.0
    %1141 = vmatprep.subr.mxu0 0.0
    %1142 = vmatpush1.xpose.msra.mxu0 0.0
    %1143 = vmatprep.mubr.f32.mxu0 0.0
    %1144 = vmatmul.mubr.f32.gmra.mrb[0].mxu0 %v1075
    %v1145 = vpop.f32.mrb[0].mxu0
    %v1146 = vadd.f32 %v83, %v1145
    %v1147 = vpop.f32.mrb[0].mxu0
    %1148 = vdwg.mxu0
    %1149 = vrot.lane.b32.xlu0 %v250, 96
    %v1150 = vpop.permute.xlu0 %1149
    %1151 = vrot.lane.b32.xlu0 %v237, 32
    %v1152 = vpop.permute.xlu0 %1151
    %v1153 = vsel %vm254, %v1150, 0
    %v1155 = vsel %vm254, %v1152, 0
    %1157 = vmatprep.subr.mxu0 0.0
    %1158 = vmatpush1.xpose.msra.mxu0 %v1155
    %1159 = vmatprep.subr.mxu0 0.0
    %1160 = vmatpush1.xpose.msra.mxu0 0.0
    %1161 = vmatprep.subr.mxu0 0.0
    %1162 = vmatpush1.xpose.msra.mxu0 0.0
    %1163 = vmatprep.subr.mxu0 0.0
    %1164 = vmatpush1.xpose.msra.mxu0 0.0
    %1165 = vmatprep.subr.mxu0 0.0
    %1166 = vmatpush1.xpose.msra.mxu0 0.0
    %1167 = vmatprep.subr.mxu0 0.0
    %1168 = vmatpush1.xpose.msra.mxu0 0.0
    %1169 = vmatprep.subr.mxu0 0.0
    %1170 = vmatpush1.xpose.msra.mxu0 0.0
    %1171 = vmatprep.subr.mxu0 0.0
    %1172 = vmatpush1.xpose.msra.mxu0 0.0
    %1173 = vmatprep.subr.mxu0 0.0
    %1174 = vmatpush1.xpose.msra.mxu0 0.0
    %1175 = vmatprep.subr.mxu0 0.0
    %1176 = vmatpush1.xpose.msra.mxu0 0.0
    %1177 = vmatprep.subr.mxu0 0.0
    %1178 = vmatpush1.xpose.msra.mxu0 0.0
    %1179 = vmatprep.subr.mxu0 0.0
    %1180 = vmatpush1.xpose.msra.mxu0 0.0
    %1181 = vmatprep.subr.mxu0 0.0
    %1182 = vmatpush1.xpose.msra.mxu0 0.0
    %1183 = vmatprep.subr.mxu0 0.0
    %1184 = vmatpush1.xpose.msra.mxu0 0.0
    %1185 = vmatprep.subr.mxu0 0.0
    %1186 = vmatpush1.xpose.msra.mxu0 0.0
    %1187 = vmatprep.subr.mxu0 0.0
    %1188 = vmatpush1.xpose.msra.mxu0 0.0
    %1189 = vmatprep.subr.mxu0 0.0
    %1190 = vmatpush1.xpose.msra.mxu0 0.0
    %1191 = vmatprep.subr.mxu0 0.0
    %1192 = vmatpush1.xpose.msra.mxu0 0.0
    %1193 = vmatprep.subr.mxu0 0.0
    %1194 = vmatpush1.xpose.msra.mxu0 0.0
    %1195 = vmatprep.subr.mxu0 0.0
    %1196 = vmatpush1.xpose.msra.mxu0 0.0
    %1197 = vmatprep.subr.mxu0 0.0
    %1198 = vmatpush1.xpose.msra.mxu0 0.0
    %1199 = vmatprep.subr.mxu0 0.0
    %1200 = vmatpush1.xpose.msra.mxu0 0.0
    %1201 = vmatprep.subr.mxu0 0.0
    %1202 = vmatpush1.xpose.msra.mxu0 0.0
    %1203 = vmatprep.subr.mxu0 0.0
    %1204 = vmatpush1.xpose.msra.mxu0 0.0
    %1205 = vmatprep.subr.mxu0 0.0
    %1206 = vmatpush1.xpose.msra.mxu0 0.0
    %1207 = vmatprep.subr.mxu0 0.0
    %1208 = vmatpush1.xpose.msra.mxu0 0.0
    %1209 = vmatprep.subr.mxu0 0.0
    %1210 = vmatpush1.xpose.msra.mxu0 0.0
    %1211 = vmatprep.subr.mxu0 0.0
    %1212 = vmatpush1.xpose.msra.mxu0 0.0
    %1213 = vmatprep.subr.mxu0 0.0
    %1214 = vmatpush1.xpose.msra.mxu0 0.0
    %1215 = vmatprep.subr.mxu0 0.0
    %1216 = vmatpush1.xpose.msra.mxu0 0.0
    %1217 = vmatprep.subr.mxu0 0.0
    %1218 = vmatpush1.xpose.msra.mxu0 0.0
    %1219 = vmatprep.subr.mxu0 0.0
    %1220 = vmatpush1.xpose.msra.mxu0 0.0
    %1221 = vmatprep.mubr.f32.mxu0 0.0
    %1222 = vmatmul.mubr.f32.gmra.mrb[0].mxu0 %v1153
    %v1223 = vpop.f32.mrb[0].mxu0
    %v1224 = vadd.f32 %v83, %v1223
    %v1225 = vpop.f32.mrb[0].mxu0
    %1226 = vdwg.mxu0
    %v1227 = vsel %vm408, %v1146, -inf
    %1228 = vmax.xlane.f32.xlu0 %v1227
    %v1229 = vpop.xlane.xlu0 %1228
    %v1230 = vsel %vm408, %v1224, -inf
    %1231 = vmax.xlane.f32.xlu0 %v1230
    %v1232 = vpop.xlane.xlu0 %1231
    %v1233 = vsub.f32 %v1146, %v1229
    %v1234 = vsub.f32 %v1224, %v1232
    %v1235 = vmul.f32 %v1233, 1.442695
    %v1236 = vpow.pop %v1235
    %v1237 = vmul.f32 %v1234, 1.442695
    %v1238 = vpow.pop %v1237
    %v1239 = vsel %vm408, %v1236, 0.0
    %1240 = vadd.xlane.f32.xlu0 %v1239
    %v1241 = vpop.xlane.xlu0 %1240
    %v1242 = vsel %vm408, %v1238, 0.0
    %1243 = vadd.xlane.f32.xlu0 %v1242
    %v1244 = vpop.xlane.xlu0 %1243
    %v1245 = vrcp.pop %v1241
    %v1246 = vrcp.pop %v1244
    %v1247 = vmul.f32 %v1236, %v1245
    %v1248 = vmul.f32 %v1238, %v1246
    %1249 = vrot.lane.b32.xlu0 %v233, 96
    %v1250 = vpop.permute.xlu0 %1249
    %v1253 = vsel %vm408, %v1247, 0
    %1255 = vmatprep.subr.mxu0 0.0
    %1256 = vmatpush1.msra.mxu0 %v1250
    %1257 = vmatprep.subr.mxu0 0.0
    %1258 = vmatpush1.msra.mxu0 0.0
    %1259 = vmatprep.subr.mxu0 0.0
    %1260 = vmatpush1.msra.mxu0 0.0
    %1261 = vmatprep.subr.mxu0 0.0
    %1262 = vmatpush1.msra.mxu0 0.0
    %1263 = vmatprep.subr.mxu0 0.0
    %1264 = vmatpush1.msra.mxu0 0.0
    %1265 = vmatprep.subr.mxu0 0.0
    %1266 = vmatpush1.msra.mxu0 0.0
    %1267 = vmatprep.subr.mxu0 0.0
    %1268 = vmatpush1.msra.mxu0 0.0
    %1269 = vmatprep.subr.mxu0 0.0
    %1270 = vmatpush1.msra.mxu0 0.0
    %1271 = vmatprep.subr.mxu0 0.0
    %1272 = vmatpush1.msra.mxu0 0.0
    %1273 = vmatprep.subr.mxu0 0.0
    %1274 = vmatpush1.msra.mxu0 0.0
    %1275 = vmatprep.subr.mxu0 0.0
    %1276 = vmatpush1.msra.mxu0 0.0
    %1277 = vmatprep.subr.mxu0 0.0
    %1278 = vmatpush1.msra.mxu0 0.0
    %1279 = vmatprep.subr.mxu0 0.0
    %1280 = vmatpush1.msra.mxu0 0.0
    %1281 = vmatprep.subr.mxu0 0.0
    %1282 = vmatpush1.msra.mxu0 0.0
    %1283 = vmatprep.subr.mxu0 0.0
    %1284 = vmatpush1.msra.mxu0 0.0
    %1285 = vmatprep.subr.mxu0 0.0
    %1286 = vmatpush1.msra.mxu0 0.0
    %1287 = vmatprep.subr.mxu0 0.0
    %1288 = vmatpush1.msra.mxu0 0.0
    %1289 = vmatprep.subr.mxu0 0.0
    %1290 = vmatpush1.msra.mxu0 0.0
    %1291 = vmatprep.subr.mxu0 0.0
    %1292 = vmatpush1.msra.mxu0 0.0
    %1293 = vmatprep.subr.mxu0 0.0
    %1294 = vmatpush1.msra.mxu0 0.0
    %1295 = vmatprep.subr.mxu0 0.0
    %1296 = vmatpush1.msra.mxu0 0.0
    %1297 = vmatprep.subr.mxu0 0.0
    %1298 = vmatpush1.msra.mxu0 0.0
    %1299 = vmatprep.subr.mxu0 0.0
    %1300 = vmatpush1.msra.mxu0 0.0
    %1301 = vmatprep.subr.mxu0 0.0
    %1302 = vmatpush1.msra.mxu0 0.0
    %1303 = vmatprep.subr.mxu0 0.0
    %1304 = vmatpush1.msra.mxu0 0.0
    %1305 = vmatprep.subr.mxu0 0.0
    %1306 = vmatpush1.msra.mxu0 0.0
    %1307 = vmatprep.subr.mxu0 0.0
    %1308 = vmatpush1.msra.mxu0 0.0
    %1309 = vmatprep.subr.mxu0 0.0
    %1310 = vmatpush1.msra.mxu0 0.0
    %1311 = vmatprep.subr.mxu0 0.0
    %1312 = vmatpush1.msra.mxu0 0.0
    %1313 = vmatprep.subr.mxu0 0.0
    %1314 = vmatpush1.msra.mxu0 0.0
    %1315 = vmatprep.subr.mxu0 0.0
    %1316 = vmatpush1.msra.mxu0 0.0
    %1317 = vmatprep.subr.mxu0 0.0
    %1318 = vmatpush1.msra.mxu0 0.0
    %1319 = vmatprep.mubr.f32.mxu0 0.0
    %1320 = vmatmul.mubr.f32.gmra.mrb[0].mxu0 %v1253
    %v1321 = vpop.f32.mrb[0].mxu0
    %v1322 = vadd.f32 0.0, %v1321
    %v1323 = vpop.f32.mrb[0].mxu0
    %1324 = vdwg.mxu0
    %1325 = vrot.lane.b32.xlu0 %v239, 96
    %v1326 = vpop.permute.xlu0 %1325
    %v1329 = vsel %vm408, %v1248, 0
    %1331 = vmatprep.subr.mxu0 0.0
    %1332 = vmatpush1.msra.mxu0 %v1326
    %1333 = vmatprep.subr.mxu0 0.0
    %1334 = vmatpush1.msra.mxu0 0.0
    %1335 = vmatprep.subr.mxu0 0.0
    %1336 = vmatpush1.msra.mxu0 0.0
    %1337 = vmatprep.subr.mxu0 0.0
    %1338 = vmatpush1.msra.mxu0 0.0
    %1339 = vmatprep.subr.mxu0 0.0
    %1340 = vmatpush1.msra.mxu0 0.0
    %1341 = vmatprep.subr.mxu0 0.0
    %1342 = vmatpush1.msra.mxu0 0.0
    %1343 = vmatprep.subr.mxu0 0.0
    %1344 = vmatpush1.msra.mxu0 0.0
    %1345 = vmatprep.subr.mxu0 0.0
    %1346 = vmatpush1.msra.mxu0 0.0
    %1347 = vmatprep.subr.mxu0 0.0
    %1348 = vmatpush1.msra.mxu0 0.0
    %1349 = vmatprep.subr.mxu0 0.0
    %1350 = vmatpush1.msra.mxu0 0.0
    %1351 = vmatprep.subr.mxu0 0.0
    %1352 = vmatpush1.msra.mxu0 0.0
    %1353 = vmatprep.subr.mxu0 0.0
    %1354 = vmatpush1.msra.mxu0 0.0
    %1355 = vmatprep.subr.mxu0 0.0
    %1356 = vmatpush1.msra.mxu0 0.0
    %1357 = vmatprep.subr.mxu0 0.0
    %1358 = vmatpush1.msra.mxu0 0.0
    %1359 = vmatprep.subr.mxu0 0.0
    %1360 = vmatpush1.msra.mxu0 0.0
    %1361 = vmatprep.subr.mxu0 0.0
    %1362 = vmatpush1.msra.mxu0 0.0
    %1363 = vmatprep.subr.mxu0 0.0
    %1364 = vmatpush1.msra.mxu0 0.0
    %1365 = vmatprep.subr.mxu0 0.0
    %1366 = vmatpush1.msra.mxu0 0.0
    %1367 = vmatprep.subr.mxu0 0.0
    %1368 = vmatpush1.msra.mxu0 0.0
    %1369 = vmatprep.subr.mxu0 0.0
    %1370 = vmatpush1.msra.mxu0 0.0
    %1371 = vmatprep.subr.mxu0 0.0
    %1372 = vmatpush1.msra.mxu0 0.0
    %1373 = vmatprep.subr.mxu0 0.0
    %1374 = vmatpush1.msra.mxu0 0.0
    %1375 = vmatprep.subr.mxu0 0.0
    %1376 = vmatpush1.msra.mxu0 0.0
    %1377 = vmatprep.subr.mxu0 0.0
    %1378 = vmatpush1.msra.mxu0 0.0
    %1379 = vmatprep.subr.mxu0 0.0
    %1380 = vmatpush1.msra.mxu0 0.0
    %1381 = vmatprep.subr.mxu0 0.0
    %1382 = vmatpush1.msra.mxu0 0.0
    %1383 = vmatprep.subr.mxu0 0.0
    %1384 = vmatpush1.msra.mxu0 0.0
    %1385 = vmatprep.subr.mxu0 0.0
    %1386 = vmatpush1.msra.mxu0 0.0
    %1387 = vmatprep.subr.mxu0 0.0
    %1388 = vmatpush1.msra.mxu0 0.0
    %1389 = vmatprep.subr.mxu0 0.0
    %1390 = vmatpush1.msra.mxu0 0.0
    %1391 = vmatprep.subr.mxu0 0.0
    %1392 = vmatpush1.msra.mxu0 0.0
    %1393 = vmatprep.subr.mxu0 0.0
    %1394 = vmatpush1.msra.mxu0 0.0
    %1395 = vmatprep.mubr.f32.mxu0 0.0
    %1396 = vmatmul.mubr.f32.gmra.mrb[0].mxu0 %v1329
    %v1397 = vpop.f32.mrb[0].mxu0
    %v1398 = vadd.f32 0.0, %v1397
    %v1399 = vpop.f32.mrb[0].mxu0
    %1400 = vdwg.mxu0
    %v1402 = vsel %vm254, %v1322, 0
    %v1405 = vsel %vm254, %v1398, 0
    %1407 = vmatprep.subr.mxu0 0.0
    %1408 = vmatpush1.msra.mxu0 %v245
    %1409 = vmatprep.subr.mxu0 0.0
    %1410 = vmatpush1.msra.mxu0 %v246
    %1411 = vmatprep.subr.mxu0 0.0
    %1412 = vmatpush1.msra.mxu0 0.0
    %1413 = vmatprep.subr.mxu0 0.0
    %1414 = vmatpush1.msra.mxu0 0.0
    %1415 = vmatprep.subr.mxu0 0.0
    %1416 = vmatpush1.msra.mxu0 0.0
    %1417 = vmatprep.subr.mxu0 0.0
    %1418 = vmatpush1.msra.mxu0 0.0
    %1419 = vmatprep.subr.mxu0 0.0
    %1420 = vmatpush1.msra.mxu0 0.0
    %1421 = vmatprep.subr.mxu0 0.0
    %1422 = vmatpush1.msra.mxu0 0.0
    %1423 = vmatprep.subr.mxu0 0.0
    %1424 = vmatpush1.msra.mxu0 0.0
    %1425 = vmatprep.subr.mxu0 0.0
    %1426 = vmatpush1.msra.mxu0 0.0
    %1427 = vmatprep.subr.mxu0 0.0
    %1428 = vmatpush1.msra.mxu0 0.0
    %1429 = vmatprep.subr.mxu0 0.0
    %1430 = vmatpush1.msra.mxu0 0.0
    %1431 = vmatprep.subr.mxu0 0.0
    %1432 = vmatpush1.msra.mxu0 0.0
    %1433 = vmatprep.subr.mxu0 0.0
    %1434 = vmatpush1.msra.mxu0 0.0
    %1435 = vmatprep.subr.mxu0 0.0
    %1436 = vmatpush1.msra.mxu0 0.0
    %1437 = vmatprep.subr.mxu0 0.0
    %1438 = vmatpush1.msra.mxu0 0.0
    %1439 = vmatprep.subr.mxu0 0.0
    %1440 = vmatpush1.msra.mxu0 0.0
    %1441 = vmatprep.subr.mxu0 0.0
    %1442 = vmatpush1.msra.mxu0 0.0
    %1443 = vmatprep.subr.mxu0 0.0
    %1444 = vmatpush1.msra.mxu0 0.0
    %1445 = vmatprep.subr.mxu0 0.0
    %1446 = vmatpush1.msra.mxu0 0.0
    %1447 = vmatprep.subr.mxu0 0.0
    %1448 = vmatpush1.msra.mxu0 0.0
    %1449 = vmatprep.subr.mxu0 0.0
    %1450 = vmatpush1.msra.mxu0 0.0
    %1451 = vmatprep.subr.mxu0 0.0
    %1452 = vmatpush1.msra.mxu0 0.0
    %1453 = vmatprep.subr.mxu0 0.0
    %1454 = vmatpush1.msra.mxu0 0.0
    %1455 = vmatprep.subr.mxu0 0.0
    %1456 = vmatpush1.msra.mxu0 0.0
    %1457 = vmatprep.subr.mxu0 0.0
    %1458 = vmatpush1.msra.mxu0 0.0
    %1459 = vmatprep.subr.mxu0 0.0
    %1460 = vmatpush1.msra.mxu0 0.0
    %1461 = vmatprep.subr.mxu0 0.0
    %1462 = vmatpush1.msra.mxu0 0.0
    %1463 = vmatprep.subr.mxu0 0.0
    %1464 = vmatpush1.msra.mxu0 0.0
    %1465 = vmatprep.subr.mxu0 0.0
    %1466 = vmatpush1.msra.mxu0 0.0
    %1467 = vmatprep.subr.mxu0 0.0
    %1468 = vmatpush1.msra.mxu0 0.0
    %1469 = vmatprep.subr.mxu0 0.0
    %1470 = vmatpush1.msra.mxu0 0.0
    %1471 = vmatprep.mubr.f32.mxu0 0.0
    %1472 = vmatmul.mubr.f32.gmra.mrb[0].mxu0 %v1402
    %v1473 = vpop.f32.mrb[0].mxu0
    %v1474 = vadd.f32 0.0, %v1473
    %v1475 = vpop.f32.mrb[0].mxu0
    %1476 = vmatprep.mubr.f32.mxu0 0.0
    %1477 = vmatmul.mubr.f32.gmra.mrb[0].mxu0 %v1405
    %v1478 = vpop.f32.mrb[0].mxu0
    %v1479 = vadd.f32 0.0, %v1478
    %v1480 = vpop.f32.mrb[0].mxu0
    %1481 = vdwg.mxu0
    %v1482 = vadd.f32 %v1063, %v1474
    %v1483 = vadd.f32 %v1068, %v1479
    %1484 = vrot.lane.b32.xlu0 %v249, 80
    %v1485 = vpop.permute.xlu0 %1484
    %1486 = vrot.lane.b32.xlu0 %v231, 16
    %v1487 = vpop.permute.xlu0 %1486
    %v1488 = vsel %vm254, %v1485, 0
    %v1490 = vsel %vm254, %v1487, 0
    %1492 = vmatprep.subr.mxu0 0.0
    %1493 = vmatpush1.xpose.msra.mxu0 %v1490
    %1494 = vmatprep.subr.mxu0 0.0
    %1495 = vmatpush1.xpose.msra.mxu0 0.0
    %1496 = vmatprep.subr.mxu0 0.0
    %1497 = vmatpush1.xpose.msra.mxu0 0.0
    %1498 = vmatprep.subr.mxu0 0.0
    %1499 = vmatpush1.xpose.msra.mxu0 0.0
    %1500 = vmatprep.subr.mxu0 0.0
    %1501 = vmatpush1.xpose.msra.mxu0 0.0
    %1502 = vmatprep.subr.mxu0 0.0
    %1503 = vmatpush1.xpose.msra.mxu0 0.0
    %1504 = vmatprep.subr.mxu0 0.0
    %1505 = vmatpush1.xpose.msra.mxu0 0.0
    %1506 = vmatprep.subr.mxu0 0.0
    %1507 = vmatpush1.xpose.msra.mxu0 0.0
    %1508 = vmatprep.subr.mxu0 0.0
    %1509 = vmatpush1.xpose.msra.mxu0 0.0
    %1510 = vmatprep.subr.mxu0 0.0
    %1511 = vmatpush1.xpose.msra.mxu0 0.0
    %1512 = vmatprep.subr.mxu0 0.0
    %1513 = vmatpush1.xpose.msra.mxu0 0.0
    %1514 = vmatprep.subr.mxu0 0.0
    %1515 = vmatpush1.xpose.msra.mxu0 0.0
    %1516 = vmatprep.subr.mxu0 0.0
    %1517 = vmatpush1.xpose.msra.mxu0 0.0
    %1518 = vmatprep.subr.mxu0 0.0
    %1519 = vmatpush1.xpose.msra.mxu0 0.0
    %1520 = vmatprep.subr.mxu0 0.0
    %1521 = vmatpush1.xpose.msra.mxu0 0.0
    %1522 = vmatprep.subr.mxu0 0.0
    %1523 = vmatpush1.xpose.msra.mxu0 0.0
    %1524 = vmatprep.subr.mxu0 0.0
    %1525 = vmatpush1.xpose.msra.mxu0 0.0
    %1526 = vmatprep.subr.mxu0 0.0
    %1527 = vmatpush1.xpose.msra.mxu0 0.0
    %1528 = vmatprep.subr.mxu0 0.0
    %1529 = vmatpush1.xpose.msra.mxu0 0.0
    %1530 = vmatprep.subr.mxu0 0.0
    %1531 = vmatpush1.xpose.msra.mxu0 0.0
    %1532 = vmatprep.subr.mxu0 0.0
    %1533 = vmatpush1.xpose.msra.mxu0 0.0
    %1534 = vmatprep.subr.mxu0 0.0
    %1535 = vmatpush1.xpose.msra.mxu0 0.0
    %1536 = vmatprep.subr.mxu0 0.0
    %1537 = vmatpush1.xpose.msra.mxu0 0.0
    %1538 = vmatprep.subr.mxu0 0.0
    %1539 = vmatpush1.xpose.msra.mxu0 0.0
    %1540 = vmatprep.subr.mxu0 0.0
    %1541 = vmatpush1.xpose.msra.mxu0 0.0
    %1542 = vmatprep.subr.mxu0 0.0
    %1543 = vmatpush1.xpose.msra.mxu0 0.0
    %1544 = vmatprep.subr.mxu0 0.0
    %1545 = vmatpush1.xpose.msra.mxu0 0.0
    %1546 = vmatprep.subr.mxu0 0.0
    %1547 = vmatpush1.xpose.msra.mxu0 0.0
    %1548 = vmatprep.subr.mxu0 0.0
    %1549 = vmatpush1.xpose.msra.mxu0 0.0
    %1550 = vmatprep.subr.mxu0 0.0
    %1551 = vmatpush1.xpose.msra.mxu0 0.0
    %1552 = vmatprep.subr.mxu0 0.0
    %1553 = vmatpush1.xpose.msra.mxu0 0.0
    %1554 = vmatprep.subr.mxu0 0.0
    %1555 = vmatpush1.xpose.msra.mxu0 0.0
    %1556 = vmatprep.mubr.f32.mxu0 0.0
    %1557 = vmatmul.mubr.f32.gmra.mrb[0].mxu0 %v1488
    %v1558 = vpop.f32.mrb[0].mxu0
    %v1559 = vadd.f32 %v83, %v1558
    %v1560 = vpop.f32.mrb[0].mxu0
    %1561 = vdwg.mxu0
    %1562 = vrot.lane.b32.xlu0 %v250, 80
    %v1563 = vpop.permute.xlu0 %1562
    %1564 = vrot.lane.b32.xlu0 %v237, 16
    %v1565 = vpop.permute.xlu0 %1564
    %v1566 = vsel %vm254, %v1563, 0
    %v1568 = vsel %vm254, %v1565, 0
    %1570 = vmatprep.subr.mxu0 0.0
    %1571 = vmatpush1.xpose.msra.mxu0 %v1568
    %1572 = vmatprep.subr.mxu0 0.0
    %1573 = vmatpush1.xpose.msra.mxu0 0.0
    %1574 = vmatprep.subr.mxu0 0.0
    %1575 = vmatpush1.xpose.msra.mxu0 0.0
    %1576 = vmatprep.subr.mxu0 0.0
    %1577 = vmatpush1.xpose.msra.mxu0 0.0
    %1578 = vmatprep.subr.mxu0 0.0
    %1579 = vmatpush1.xpose.msra.mxu0 0.0
    %1580 = vmatprep.subr.mxu0 0.0
    %1581 = vmatpush1.xpose.msra.mxu0 0.0
    %1582 = vmatprep.subr.mxu0 0.0
    %1583 = vmatpush1.xpose.msra.mxu0 0.0
    %1584 = vmatprep.subr.mxu0 0.0
    %1585 = vmatpush1.xpose.msra.mxu0 0.0
    %1586 = vmatprep.subr.mxu0 0.0
    %1587 = vmatpush1.xpose.msra.mxu0 0.0
    %1588 = vmatprep.subr.mxu0 0.0
    %1589 = vmatpush1.xpose.msra.mxu0 0.0
    %1590 = vmatprep.subr.mxu0 0.0
    %1591 = vmatpush1.xpose.msra.mxu0 0.0
    %1592 = vmatprep.subr.mxu0 0.0
    %1593 = vmatpush1.xpose.msra.mxu0 0.0
    %1594 = vmatprep.subr.mxu0 0.0
    %1595 = vmatpush1.xpose.msra.mxu0 0.0
    %1596 = vmatprep.subr.mxu0 0.0
    %1597 = vmatpush1.xpose.msra.mxu0 0.0
    %1598 = vmatprep.subr.mxu0 0.0
    %1599 = vmatpush1.xpose.msra.mxu0 0.0
    %1600 = vmatprep.subr.mxu0 0.0
    %1601 = vmatpush1.xpose.msra.mxu0 0.0
    %1602 = vmatprep.subr.mxu0 0.0
    %1603 = vmatpush1.xpose.msra.mxu0 0.0
    %1604 = vmatprep.subr.mxu0 0.0
    %1605 = vmatpush1.xpose.msra.mxu0 0.0
    %1606 = vmatprep.subr.mxu0 0.0
    %1607 = vmatpush1.xpose.msra.mxu0 0.0
    %1608 = vmatprep.subr.mxu0 0.0
    %1609 = vmatpush1.xpose.msra.mxu0 0.0
    %1610 = vmatprep.subr.mxu0 0.0
    %1611 = vmatpush1.xpose.msra.mxu0 0.0
    %1612 = vmatprep.subr.mxu0 0.0
    %1613 = vmatpush1.xpose.msra.mxu0 0.0
    %1614 = vmatprep.subr.mxu0 0.0
    %1615 = vmatpush1.xpose.msra.mxu0 0.0
    %1616 = vmatprep.subr.mxu0 0.0
    %1617 = vmatpush1.xpose.msra.mxu0 0.0
    %1618 = vmatprep.subr.mxu0 0.0
    %1619 = vmatpush1.xpose.msra.mxu0 0.0
    %1620 = vmatprep.subr.mxu0 0.0
    %1621 = vmatpush1.xpose.msra.mxu0 0.0
    %1622 = vmatprep.subr.mxu0 0.0
    %1623 = vmatpush1.xpose.msra.mxu0 0.0
    %1624 = vmatprep.subr.mxu0 0.0
    %1625 = vmatpush1.xpose.msra.mxu0 0.0
    %1626 = vmatprep.subr.mxu0 0.0
    %1627 = vmatpush1.xpose.msra.mxu0 0.0
    %1628 = vmatprep.subr.mxu0 0.0
    %1629 = vmatpush1.xpose.msra.mxu0 0.0
    %1630 = vmatprep.subr.mxu0 0.0
    %1631 = vmatpush1.xpose.msra.mxu0 0.0
    %1632 = vmatprep.subr.mxu0 0.0
    %1633 = vmatpush1.xpose.msra.mxu0 0.0
    %1634 = vmatprep.mubr.f32.mxu0 0.0
    %1635 = vmatmul.mubr.f32.gmra.mrb[0].mxu0 %v1566
    %v1636 = vpop.f32.mrb[0].mxu0
    %v1637 = vadd.f32 %v83, %v1636
    %v1638 = vpop.f32.mrb[0].mxu0
    %1639 = vdwg.mxu0
    %v1640 = vsel %vm408, %v1559, -inf
    %1641 = vmax.xlane.f32.xlu0 %v1640
    %v1642 = vpop.xlane.xlu0 %1641
    %v1643 = vsel %vm408, %v1637, -inf
    %1644 = vmax.xlane.f32.xlu0 %v1643
    %v1645 = vpop.xlane.xlu0 %1644
    %v1646 = vsub.f32 %v1559, %v1642
    %v1647 = vsub.f32 %v1637, %v1645
    %v1648 = vmul.f32 %v1646, 1.442695
    %v1649 = vpow.pop %v1648
    %v1650 = vmul.f32 %v1647, 1.442695
    %v1651 = vpow.pop %v1650
    %v1652 = vsel %vm408, %v1649, 0.0
    %1653 = vadd.xlane.f32.xlu0 %v1652
    %v1654 = vpop.xlane.xlu0 %1653
    %v1655 = vsel %vm408, %v1651, 0.0
    %1656 = vadd.xlane.f32.xlu0 %v1655
    %v1657 = vpop.xlane.xlu0 %1656
    %v1658 = vrcp.pop %v1654
    %v1659 = vrcp.pop %v1657
    %v1660 = vmul.f32 %v1649, %v1658
    %v1661 = vmul.f32 %v1651, %v1659
    %1662 = vrot.lane.b32.xlu0 %v233, 80
    %v1663 = vpop.permute.xlu0 %1662
    %v1666 = vsel %vm408, %v1660, 0
    %1668 = vmatprep.subr.mxu0 0.0
    %1669 = vmatpush1.msra.mxu0 %v1663
    %1670 = vmatprep.subr.mxu0 0.0
    %1671 = vmatpush1.msra.mxu0 0.0
    %1672 = vmatprep.subr.mxu0 0.0
    %1673 = vmatpush1.msra.mxu0 0.0
    %1674 = vmatprep.subr.mxu0 0.0
    %1675 = vmatpush1.msra.mxu0 0.0
    %1676 = vmatprep.subr.mxu0 0.0
    %1677 = vmatpush1.msra.mxu0 0.0
    %1678 = vmatprep.subr.mxu0 0.0
    %1679 = vmatpush1.msra.mxu0 0.0
    %1680 = vmatprep.subr.mxu0 0.0
    %1681 = vmatpush1.msra.mxu0 0.0
    %1682 = vmatprep.subr.mxu0 0.0
    %1683 = vmatpush1.msra.mxu0 0.0
    %1684 = vmatprep.subr.mxu0 0.0
    %1685 = vmatpush1.msra.mxu0 0.0
    %1686 = vmatprep.subr.mxu0 0.0
    %1687 = vmatpush1.msra.mxu0 0.0
    %1688 = vmatprep.subr.mxu0 0.0
    %1689 = vmatpush1.msra.mxu0 0.0
    %1690 = vmatprep.subr.mxu0 0.0
    %1691 = vmatpush1.msra.mxu0 0.0
    %1692 = vmatprep.subr.mxu0 0.0
    %1693 = vmatpush1.msra.mxu0 0.0
    %1694 = vmatprep.subr.mxu0 0.0
    %1695 = vmatpush1.msra.mxu0 0.0
    %1696 = vmatprep.subr.mxu0 0.0
    %1697 = vmatpush1.msra.mxu0 0.0
    %1698 = vmatprep.subr.mxu0 0.0
    %1699 = vmatpush1.msra.mxu0 0.0
    %1700 = vmatprep.subr.mxu0 0.0
    %1701 = vmatpush1.msra.mxu0 0.0
    %1702 = vmatprep.subr.mxu0 0.0
    %1703 = vmatpush1.msra.mxu0 0.0
    %1704 = vmatprep.subr.mxu0 0.0
    %1705 = vmatpush1.msra.mxu0 0.0
    %1706 = vmatprep.subr.mxu0 0.0
    %1707 = vmatpush1.msra.mxu0 0.0
    %1708 = vmatprep.subr.mxu0 0.0
    %1709 = vmatpush1.msra.mxu0 0.0
    %1710 = vmatprep.subr.mxu0 0.0
    %1711 = vmatpush1.msra.mxu0 0.0
    %1712 = vmatprep.subr.mxu0 0.0
    %1713 = vmatpush1.msra.mxu0 0.0
    %1714 = vmatprep.subr.mxu0 0.0
    %1715 = vmatpush1.msra.mxu0 0.0
    %1716 = vmatprep.subr.mxu0 0.0
    %1717 = vmatpush1.msra.mxu0 0.0
    %1718 = vmatprep.subr.mxu0 0.0
    %1719 = vmatpush1.msra.mxu0 0.0
    %1720 = vmatprep.subr.mxu0 0.0
    %1721 = vmatpush1.msra.mxu0 0.0
    %1722 = vmatprep.subr.mxu0 0.0
    %1723 = vmatpush1.msra.mxu0 0.0
    %1724 = vmatprep.subr.mxu0 0.0
    %1725 = vmatpush1.msra.mxu0 0.0
    %1726 = vmatprep.subr.mxu0 0.0
    %1727 = vmatpush1.msra.mxu0 0.0
    %1728 = vmatprep.subr.mxu0 0.0
    %1729 = vmatpush1.msra.mxu0 0.0
    %1730 = vmatprep.subr.mxu0 0.0
    %1731 = vmatpush1.msra.mxu0 0.0
    %1732 = vmatprep.mubr.f32.mxu0 0.0
    %1733 = vmatmul.mubr.f32.gmra.mrb[0].mxu0 %v1666
    %v1734 = vpop.f32.mrb[0].mxu0
    %v1735 = vadd.f32 0.0, %v1734
    %v1736 = vpop.f32.mrb[0].mxu0
    %1737 = vdwg.mxu0
    %1738 = vrot.lane.b32.xlu0 %v239, 80
    %v1739 = vpop.permute.xlu0 %1738
    %v1742 = vsel %vm408, %v1661, 0
    %1744 = vmatprep.subr.mxu0 0.0
    %1745 = vmatpush1.msra.mxu0 %v1739
    %1746 = vmatprep.subr.mxu0 0.0
    %1747 = vmatpush1.msra.mxu0 0.0
    %1748 = vmatprep.subr.mxu0 0.0
    %1749 = vmatpush1.msra.mxu0 0.0
    %1750 = vmatprep.subr.mxu0 0.0
    %1751 = vmatpush1.msra.mxu0 0.0
    %1752 = vmatprep.subr.mxu0 0.0
    %1753 = vmatpush1.msra.mxu0 0.0
    %1754 = vmatprep.subr.mxu0 0.0
    %1755 = vmatpush1.msra.mxu0 0.0
    %1756 = vmatprep.subr.mxu0 0.0
    %1757 = vmatpush1.msra.mxu0 0.0
    %1758 = vmatprep.subr.mxu0 0.0
    %1759 = vmatpush1.msra.mxu0 0.0
    %1760 = vmatprep.subr.mxu0 0.0
    %1761 = vmatpush1.msra.mxu0 0.0
    %1762 = vmatprep.subr.mxu0 0.0
    %1763 = vmatpush1.msra.mxu0 0.0
    %1764 = vmatprep.subr.mxu0 0.0
    %1765 = vmatpush1.msra.mxu0 0.0
    %1766 = vmatprep.subr.mxu0 0.0
    %1767 = vmatpush1.msra.mxu0 0.0
    %1768 = vmatprep.subr.mxu0 0.0
    %1769 = vmatpush1.msra.mxu0 0.0
    %1770 = vmatprep.subr.mxu0 0.0
    %1771 = vmatpush1.msra.mxu0 0.0
    %1772 = vmatprep.subr.mxu0 0.0
    %1773 = vmatpush1.msra.mxu0 0.0
    %1774 = vmatprep.subr.mxu0 0.0
    %1775 = vmatpush1.msra.mxu0 0.0
    %1776 = vmatprep.subr.mxu0 0.0
    %1777 = vmatpush1.msra.mxu0 0.0
    %1778 = vmatprep.subr.mxu0 0.0
    %1779 = vmatpush1.msra.mxu0 0.0
    %1780 = vmatprep.subr.mxu0 0.0
    %1781 = vmatpush1.msra.mxu0 0.0
    %1782 = vmatprep.subr.mxu0 0.0
    %1783 = vmatpush1.msra.mxu0 0.0
    %1784 = vmatprep.subr.mxu0 0.0
    %1785 = vmatpush1.msra.mxu0 0.0
    %1786 = vmatprep.subr.mxu0 0.0
    %1787 = vmatpush1.msra.mxu0 0.0
    %1788 = vmatprep.subr.mxu0 0.0
    %1789 = vmatpush1.msra.mxu0 0.0
    %1790 = vmatprep.subr.mxu0 0.0
    %1791 = vmatpush1.msra.mxu0 0.0
    %1792 = vmatprep.subr.mxu0 0.0
    %1793 = vmatpush1.msra.mxu0 0.0
    %1794 = vmatprep.subr.mxu0 0.0
    %1795 = vmatpush1.msra.mxu0 0.0
    %1796 = vmatprep.subr.mxu0 0.0
    %1797 = vmatpush1.msra.mxu0 0.0
    %1798 = vmatprep.subr.mxu0 0.0
    %1799 = vmatpush1.msra.mxu0 0.0
    %1800 = vmatprep.subr.mxu0 0.0
    %1801 = vmatpush1.msra.mxu0 0.0
    %1802 = vmatprep.subr.mxu0 0.0
    %1803 = vmatpush1.msra.mxu0 0.0
    %1804 = vmatprep.subr.mxu0 0.0
    %1805 = vmatpush1.msra.mxu0 0.0
    %1806 = vmatprep.subr.mxu0 0.0
    %1807 = vmatpush1.msra.mxu0 0.0
    %1808 = vmatprep.mubr.f32.mxu0 0.0
    %1809 = vmatmul.mubr.f32.gmra.mrb[0].mxu0 %v1742
    %v1810 = vpop.f32.mrb[0].mxu0
    %v1811 = vadd.f32 0.0, %v1810
    %v1812 = vpop.f32.mrb[0].mxu0
    %1813 = vdwg.mxu0
    %v1815 = vsel %vm254, %v1735, 0
    %v1818 = vsel %vm254, %v1811, 0
    %1820 = vmatprep.subr.mxu0 0.0
    %1821 = vmatpush1.msra.mxu0 %v247
    %1822 = vmatprep.subr.mxu0 0.0
    %1823 = vmatpush1.msra.mxu0 %v248
    %1824 = vmatprep.subr.mxu0 0.0
    %1825 = vmatpush1.msra.mxu0 0.0
    %1826 = vmatprep.subr.mxu0 0.0
    %1827 = vmatpush1.msra.mxu0 0.0
    %1828 = vmatprep.subr.mxu0 0.0
    %1829 = vmatpush1.msra.mxu0 0.0
    %1830 = vmatprep.subr.mxu0 0.0
    %1831 = vmatpush1.msra.mxu0 0.0
    %1832 = vmatprep.subr.mxu0 0.0
    %1833 = vmatpush1.msra.mxu0 0.0
    %1834 = vmatprep.subr.mxu0 0.0
    %1835 = vmatpush1.msra.mxu0 0.0
    %1836 = vmatprep.subr.mxu0 0.0
    %1837 = vmatpush1.msra.mxu0 0.0
    %1838 = vmatprep.subr.mxu0 0.0
    %1839 = vmatpush1.msra.mxu0 0.0
    %1840 = vmatprep.subr.mxu0 0.0
    %1841 = vmatpush1.msra.mxu0 0.0
    %1842 = vmatprep.subr.mxu0 0.0
    %1843 = vmatpush1.msra.mxu0 0.0
    %1844 = vmatprep.subr.mxu0 0.0
    %1845 = vmatpush1.msra.mxu0 0.0
    %1846 = vmatprep.subr.mxu0 0.0
    %1847 = vmatpush1.msra.mxu0 0.0
    %1848 = vmatprep.subr.mxu0 0.0
    %1849 = vmatpush1.msra.mxu0 0.0
    %1850 = vmatprep.subr.mxu0 0.0
    %1851 = vmatpush1.msra.mxu0 0.0
    %1852 = vmatprep.subr.mxu0 0.0
    %1853 = vmatpush1.msra.mxu0 0.0
    %1854 = vmatprep.subr.mxu0 0.0
    %1855 = vmatpush1.msra.mxu0 0.0
    %1856 = vmatprep.subr.mxu0 0.0
    %1857 = vmatpush1.msra.mxu0 0.0
    %1858 = vmatprep.subr.mxu0 0.0
    %1859 = vmatpush1.msra.mxu0 0.0
    %1860 = vmatprep.subr.mxu0 0.0
    %1861 = vmatpush1.msra.mxu0 0.0
    %1862 = vmatprep.subr.mxu0 0.0
    %1863 = vmatpush1.msra.mxu0 0.0
    %1864 = vmatprep.subr.mxu0 0.0
    %1865 = vmatpush1.msra.mxu0 0.0
    %1866 = vmatprep.subr.mxu0 0.0
    %1867 = vmatpush1.msra.mxu0 0.0
    %1868 = vmatprep.subr.mxu0 0.0
    %1869 = vmatpush1.msra.mxu0 0.0
    %1870 = vmatprep.subr.mxu0 0.0
    %1871 = vmatpush1.msra.mxu0 0.0
    %1872 = vmatprep.subr.mxu0 0.0
    %1873 = vmatpush1.msra.mxu0 0.0
    %1874 = vmatprep.subr.mxu0 0.0
    %1875 = vmatpush1.msra.mxu0 0.0
    %1876 = vmatprep.subr.mxu0 0.0
    %1877 = vmatpush1.msra.mxu0 0.0
    %1878 = vmatprep.subr.mxu0 0.0
    %1879 = vmatpush1.msra.mxu0 0.0
    %1880 = vmatprep.subr.mxu0 0.0
    %1881 = vmatpush1.msra.mxu0 0.0
    %1882 = vmatprep.subr.mxu0 0.0
    %1883 = vmatpush1.msra.mxu0 0.0
    %1884 = vmatprep.mubr.f32.mxu0 0.0
    %1885 = vmatmul.mubr.f32.gmra.mrb[0].mxu0 %v1815
    %v1886 = vpop.f32.mrb[0].mxu0
    %v1887 = vadd.f32 0.0, %v1886
    %v1888 = vpop.f32.mrb[0].mxu0
    %1889 = vmatprep.mubr.f32.mxu0 0.0
    %1890 = vmatmul.mubr.f32.gmra.mrb[0].mxu0 %v1818
    %v1891 = vpop.f32.mrb[0].mxu0
    %v1892 = vadd.f32 0.0, %v1891
    %v1893 = vpop.f32.mrb[0].mxu0
    %1894 = vdwg.mxu0
    %v1895 = vadd.f32 %v1482, %v1887
    %v1896 = vadd.f32 %v1483, %v1892
    %v1897 = vadd.f32 %v76, %v1895
    %v1898 = vadd.f32 %v77, %v1896
    %v1899 = vld [vmem:[%s8] sm:$0x1]
    %v1901 = vlaneseq
    %v1902 = vshrl.u32 %v1901, 7
    %v1903 = vsub.s32 0, %v1902
    %v1904 = vrot.slane %v1899, %v1903
    %v1906 = vadd.f32 %v1897, %v1904
    %v1907 = vadd.f32 %v1898, %v1904
    %v1908 = vld [vmem:[%s9] sm:$0x1]
    %v1909 = vld [vmem:[%s10] sm:$0x1]
    %v1910 = vsel %vm86, %v1906, 0.0
    %1911 = vadd.xlane.f32.xlu0 %v1910
    %v1912 = vpop.xlane.xlu0 %1911
    %v1913 = vsel %vm86, %v1907, 0.0
    %1914 = vadd.xlane.f32.xlu0 %v1913
    %v1915 = vpop.xlane.xlu0 %1914
    %v1916 = vmul.f32 %v1912, %v93
    %v1917 = vmul.f32 %v1915, %v93
    %v1918 = vsub.f32 %v1906, %v1916
    %v1919 = vsub.f32 %v1907, %v1917
    %v1920 = vmul.f32 %v1918, %v1918
    %v1921 = vmul.f32 %v1919, %v1919
    %v1922 = vsel %vm86, %v1920, 0.0
    %1923 = vadd.xlane.f32.xlu0 %v1922
    %v1924 = vpop.xlane.xlu0 %1923
    %v1925 = vsel %vm86, %v1921, 0.0
    %1926 = vadd.xlane.f32.xlu0 %v1925
    %v1927 = vpop.xlane.xlu0 %1926
    %v1928 = vmul.f32 %v1924, %v93
    %v1929 = vmul.f32 %v1927, %v93
    %v1930 = vadd.f32 %v1928, 1e-05
    %v1931 = vadd.f32 %v1929, 1e-05
    %v1932 = vrsqrt.pop %v1930
    %v1933 = vrsqrt.pop %v1931
    %v1934 = vmul.f32 %v1918, %v1932
    %v1935 = vmul.f32 %v1919, %v1933
    %v1937 = vlaneseq
    %v1938 = vshrl.u32 %v1937, 7
    %v1939 = vsub.s32 0, %v1938
    %v1940 = vrot.slane %v1908, %v1939
    %v1942 = vmul.f32 %v1934, %v1940
    %v1943 = vmul.f32 %v1935, %v1940
    %v1945 = vlaneseq
    %v1946 = vshrl.u32 %v1945, 7
    %v1947 = vsub.s32 0, %v1946
    %v1948 = vrot.slane %v1909, %v1947
    %v1950 = vadd.f32 %v1942, %v1948
    %v1951 = vadd.f32 %v1943, %v1948
    %v1952 = vld [vmem:[%s11] sm:$0xff]
    %v1953 = vld [vmem:[%s11 + $0x8] sm:$0xff]
    %v1954 = vld [vmem:[%s11 + $0x10] sm:$0xff]
    %v1955 = vld [vmem:[%s11 + $0x18] sm:$0xff]
    %v1956 = vld [vmem:[%s11 + $0x20] sm:$0xff]
    %v1957 = vld [vmem:[%s11 + $0x28] sm:$0xff]
    %v1958 = vld [vmem:[%s11 + $0x30] sm:$0xff]
    %v1959 = vld [vmem:[%s11 + $0x38] sm:$0xff]
    %v1960 = vld [vmem:[%s11 + $0x40] sm:$0xff]
    %v1961 = vld [vmem:[%s11 + $0x48] sm:$0xff]
    %v1962 = vld [vmem:[%s11 + $0x50] sm:$0xff]
    %v1963 = vld [vmem:[%s11 + $0x58] sm:$0xff]
    %v1964 = vld [vmem:[%s11 + $0x60] sm:$0xff]
    %v1965 = vld [vmem:[%s11 + $0x68] sm:$0xff]
    %v1966 = vld [vmem:[%s11 + $0x70] sm:$0xff]
    %v1967 = vld [vmem:[%s11 + $0x78] sm:$0xff]
    %v1968 = vld [vmem:[%s12] sm:$0x3]
    %v1970 = vlaneseq
    %v1971 = vshrl.u32 %v1970, 7
    %v1972 = vsub.s32 0, %v1971
    %v1973 = vrot.slane %v1968, %v1972
    %v1974 = vlaneseq
    %v1975 = vshrl.u32 %v1974, 7
    %v1976 = vsub.s32 1, %v1975
    %v1977 = vrot.slane %v1968, %v1976
    %v1981 = vsel %vm86, %v1950, 0
    %v1984 = vsel %vm86, %v1951, 0
    %1986 = vmatprep.subr.mxu0 %v1953
    %1987 = vmatpush1.msra.mxu0 %v1952
    %1988 = vmatprep.subr.mxu0 %v1955
    %1989 = vmatpush1.msra.mxu0 %v1954
    %1990 = vmatprep.subr.mxu0 %v1957
    %1991 = vmatpush1.msra.mxu0 %v1956
    %1992 = vmatprep.subr.mxu0 %v1959
    %1993 = vmatpush1.msra.mxu0 %v1958
    %1994 = vmatprep.subr.mxu0 %v1961
    %1995 = vmatpush1.msra.mxu0 %v1960
    %1996 = vmatprep.subr.mxu0 %v1963
    %1997 = vmatpush1.msra.mxu0 %v1962
    %1998 = vmatprep.subr.mxu0 %v1965
    %1999 = vmatpush1.msra.mxu0 %v1964
    %2000 = vmatprep.subr.mxu0 %v1967
    %2001 = vmatpush1.msra.mxu0 %v1966
    %2002 = vmatprep.subr.mxu0 0.0
    %2003 = vmatpush1.msra.mxu0 0.0
    %2004 = vmatprep.subr.mxu0 0.0
    %2005 = vmatpush1.msra.mxu0 0.0
    %2006 = vmatprep.subr.mxu0 0.0
    %2007 = vmatpush1.msra.mxu0 0.0
    %2008 = vmatprep.subr.mxu0 0.0
    %2009 = vmatpush1.msra.mxu0 0.0
    %2010 = vmatprep.subr.mxu0 0.0
    %2011 = vmatpush1.msra.mxu0 0.0
    %2012 = vmatprep.subr.mxu0 0.0
    %2013 = vmatpush1.msra.mxu0 0.0
    %2014 = vmatprep.subr.mxu0 0.0
    %2015 = vmatpush1.msra.mxu0 0.0
    %2016 = vmatprep.subr.mxu0 0.0
    %2017 = vmatpush1.msra.mxu0 0.0
    %2018 = vmatprep.subr.mxu0 0.0
    %2019 = vmatpush1.msra.mxu0 0.0
    %2020 = vmatprep.subr.mxu0 0.0
    %2021 = vmatpush1.msra.mxu0 0.0
    %2022 = vmatprep.subr.mxu0 0.0
    %2023 = vmatpush1.msra.mxu0 0.0
    %2024 = vmatprep.subr.mxu0 0.0
    %2025 = vmatpush1.msra.mxu0 0.0
    %2026 = vmatprep.subr.mxu0 0.0
    %2027 = vmatpush1.msra.mxu0 0.0
    %2028 = vmatprep.subr.mxu0 0.0
    %2029 = vmatpush1.msra.mxu0 0.0
    %2030 = vmatprep.subr.mxu0 0.0
    %2031 = vmatpush1.msra.mxu0 0.0
    %2032 = vmatprep.subr.mxu0 0.0
    %2033 = vmatpush1.msra.mxu0 0.0
    %2034 = vmatprep.subr.mxu0 0.0
    %2035 = vmatpush1.msra.mxu0 0.0
    %2036 = vmatprep.subr.mxu0 0.0
    %2037 = vmatpush1.msra.mxu0 0.0
    %2038 = vmatprep.subr.mxu0 0.0
    %2039 = vmatpush1.msra.mxu0 0.0
    %2040 = vmatprep.subr.mxu0 0.0
    %2041 = vmatpush1.msra.mxu0 0.0
    %2042 = vmatprep.subr.mxu0 0.0
    %2043 = vmatpush1.msra.mxu0 0.0
    %2044 = vmatprep.subr.mxu0 0.0
    %2045 = vmatpush1.msra.mxu0 0.0
    %2046 = vmatprep.subr.mxu0 0.0
    %2047 = vmatpush1.msra.mxu0 0.0
    %2048 = vmatprep.subr.mxu0 0.0
    %2049 = vmatpush1.msra.mxu0 0.0
    %2050 = vmatprep.mubr.f32.mxu0 0.0
    %2051 = vmatmul.mubr.f32.gmra.mrb[0].mxu0 %v1981
    %v2052 = vpop.f32.mrb[0].mxu0
    %v2053 = vadd.f32 %v1973, %v2052
    %v2054 = vpop.f32.mrb[0].mxu0
    %v2055 = vadd.f32 %v1977, %v2054
    %2056 = vmatprep.mubr.f32.mxu0 0.0
    %2057 = vmatmul.mubr.f32.gmra.mrb[0].mxu0 %v1984
    %v2058 = vpop.f32.mrb[0].mxu0
    %v2059 = vadd.f32 %v1973, %v2058
    %v2060 = vpop.f32.mrb[0].mxu0
    %v2061 = vadd.f32 %v1977, %v2060
    %2062 = vdwg.mxu0
    %v2063 = vmul.f32 %v2053, 1.702
    %v2064 = vmul.f32 %v2055, 1.702
    %v2065 = vmul.f32 %v2059, 1.702
    %v2066 = vmul.f32 %v2061, 1.702
    %v2067 = vxor.u32 %v2063, 2147483648
    %v2068 = vxor.u32 %v2064, 2147483648
    %v2069 = vxor.u32 %v2065, 2147483648
    %v2070 = vxor.u32 %v2066, 2147483648
    %v2071 = vmul.f32 %v2067, 1.442695
    %v2072 = vpow.pop %v2071
    %v2073 = vmul.f32 %v2068, 1.442695
    %v2074 = vpow.pop %v2073
    %v2075 = vmul.f32 %v2069, 1.442695
    %v2076 = vpow.pop %v2075
    %v2077 = vmul.f32 %v2070, 1.442695
    %v2078 = vpow.pop %v2077
    %v2079 = vadd.f32 %v2072, 1.0
    %v2080 = vadd.f32 %v2074, 1.0
    %v2081 = vadd.f32 %v2076, 1.0
    %v2082 = vadd.f32 %v2078, 1.0
    %v2083 = vrcp.pop %v2079
    %v2084 = vmul.f32 1.0, %v2083
    %v2085 = vrcp.pop %v2080
    %v2086 = vmul.f32 1.0, %v2085
    %v2087 = vrcp.pop %v2081
    %v2088 = vmul.f32 1.0, %v2087
    %v2089 = vrcp.pop %v2082
    %v2090 = vmul.f32 1.0, %v2089
    %v2091 = vmul.f32 %v2053, %v2084
    %v2092 = vmul.f32 %v2055, %v2086
    %v2093 = vmul.f32 %v2059, %v2088
    %v2094 = vmul.f32 %v2061, %v2090
    %v2095 = vld [vmem:[%s13] sm:$0xff]
    %v2096 = vld [vmem:[%s13 + $0x8] sm:$0xff]
    %v2097 = vld [vmem:[%s13 + $0x10] sm:$0xff]
    %v2098 = vld [vmem:[%s13 + $0x18] sm:$0xff]
    %v2099 = vld [vmem:[%s13 + $0x20] sm:$0xff]
    %v2100 = vld [vmem:[%s13 + $0x28] sm:$0xff]
    %v2101 = vld [vmem:[%s13 + $0x30] sm:$0xff]
    %v2102 = vld [vmem:[%s13 + $0x38] sm:$0xff]
    %v2103 = vld [vmem:[%s13 + $0x40] sm:$0xff]
    %v2104 = vld [vmem:[%s13 + $0x48] sm:$0xff]
    %v2105 = vld [vmem:[%s13 + $0x50] sm:$0xff]
    %v2106 = vld [vmem:[%s13 + $0x58] sm:$0xff]
    %v2107 = vld [vmem:[%s13 + $0x60] sm:$0xff]
    %v2108 = vld [vmem:[%s13 + $0x68] sm:$0xff]
    %v2109 = vld [vmem:[%s13 + $0x70] sm:$0xff]
    %v2110 = vld [vmem:[%s13 + $0x78] sm:$0xff]
    %v2111 = vld [vmem:[%s13 + $0x80] sm:$0xff]
    %v2112 = vld [vmem:[%s13 + $0x88] sm:$0xff]
    %v2113 = vld [vmem:[%s13 + $0x90] sm:$0xff]
    %v2114 = vld [vmem:[%s13 + $0x98] sm:$0xff]
    %v2115 = vld [vmem:[%s13 + $0xa0] sm:$0xff]
    %v2116 = vld [vmem:[%s13 + $0xa8] sm:$0xff]
    %v2117 = vld [vmem:[%s13 + $0xb0] sm:$0xff]
    %v2118 = vld [vmem:[%s13 + $0xb8] sm:$0xff]
    %v2119 = vld [vmem:[%s13 + $0xc0] sm:$0xff]
    %v2120 = vld [vmem:[%s13 + $0xc8] sm:$0xff]
    %v2121 = vld [vmem:[%s13 + $0xd0] sm:$0xff]
    %v2122 = vld [vmem:[%s13 + $0xd8] sm:$0xff]
    %v2123 = vld [vmem:[%s13 + $0xe0] sm:$0xff]
    %v2124 = vld [vmem:[%s13 + $0xe8] sm:$0xff]
    %v2125 = vld [vmem:[%s13 + $0xf0] sm:$0xff]
    %v2126 = vld [vmem:[%s13 + $0xf8] sm:$0xff]
    %2127 = vmatprep.subr.mxu0 0.0
    %2128 = vmatpush1.msra.mxu0 %v2095
    %2129 = vmatprep.subr.mxu0 0.0
    %2130 = vmatpush1.msra.mxu0 %v2096
    %2131 = vmatprep.subr.mxu0 0.0
    %2132 = vmatpush1.msra.mxu0 %v2097
    %2133 = vmatprep.subr.mxu0 0.0
    %2134 = vmatpush1.msra.mxu0 %v2098
    %2135 = vmatprep.subr.mxu0 0.0
    %2136 = vmatpush1.msra.mxu0 %v2099
    %2137 = vmatprep.subr.mxu0 0.0
    %2138 = vmatpush1.msra.mxu0 %v2100
    %2139 = vmatprep.subr.mxu0 0.0
    %2140 = vmatpush1.msra.mxu0 %v2101
    %2141 = vmatprep.subr.mxu0 0.0
    %2142 = vmatpush1.msra.mxu0 %v2102
    %2143 = vmatprep.subr.mxu0 0.0
    %2144 = vmatpush1.msra.mxu0 %v2103
    %2145 = vmatprep.subr.mxu0 0.0
    %2146 = vmatpush1.msra.mxu0 %v2104
    %2147 = vmatprep.subr.mxu0 0.0
    %2148 = vmatpush1.msra.mxu0 %v2105
    %2149 = vmatprep.subr.mxu0 0.0
    %2150 = vmatpush1.msra.mxu0 %v2106
    %2151 = vmatprep.subr.mxu0 0.0
    %2152 = vmatpush1.msra.mxu0 %v2107
    %2153 = vmatprep.subr.mxu0 0.0
    %2154 = vmatpush1.msra.mxu0 %v2108
    %2155 = vmatprep.subr.mxu0 0.0
    %2156 = vmatpush1.msra.mxu0 %v2109
    %2157 = vmatprep.subr.mxu0 0.0
    %2158 = vmatpush1.msra.mxu0 %v2110
    %2159 = vmatprep.subr.mxu0 0.0
    %2160 = vmatpush1.msra.mxu0 %v2111
    %2161 = vmatprep.subr.mxu0 0.0
    %2162 = vmatpush1.msra.mxu0 %v2112
    %2163 = vmatprep.subr.mxu0 0.0
    %2164 = vmatpush1.msra.mxu0 %v2113
    %2165 = vmatprep.subr.mxu0 0.0
    %2166 = vmatpush1.msra.mxu0 %v2114
    %2167 = vmatprep.subr.mxu0 0.0
    %2168 = vmatpush1.msra.mxu0 %v2115
    %2169 = vmatprep.subr.mxu0 0.0
    %2170 = vmatpush1.msra.mxu0 %v2116
    %2171 = vmatprep.subr.mxu0 0.0
    %2172 = vmatpush1.msra.mxu0 %v2117
    %2173 = vmatprep.subr.mxu0 0.0
    %2174 = vmatpush1.msra.mxu0 %v2118
    %2175 = vmatprep.subr.mxu0 0.0
    %2176 = vmatpush1.msra.mxu0 %v2119
    %2177 = vmatprep.subr.mxu0 0.0
    %2178 = vmatpush1.msra.mxu0 %v2120
    %2179 = vmatprep.subr.mxu0 0.0
    %2180 = vmatpush1.msra.mxu0 %v2121
    %2181 = vmatprep.subr.mxu0 0.0
    %2182 = vmatpush1.msra.mxu0 %v2122
    %2183 = vmatprep.subr.mxu0 0.0
    %2184 = vmatpush1.msra.mxu0 %v2123
    %2185 = vmatprep.subr.mxu0 0.0
    %2186 = vmatpush1.msra.mxu0 %v2124
    %2187 = vmatprep.subr.mxu0 0.0
    %2188 = vmatpush1.msra.mxu0 %v2125
    %2189 = vmatprep.subr.mxu0 0.0
    %2190 = vmatpush1.msra.mxu0 %v2126
    %2191 = vmatprep.mubr.f32.mxu0 %v2092
    %2192 = vmatmul.mubr.f32.gmra.mrb[0].mxu0 %v2091
    %v2193 = vpop.f32.mrb[0].mxu0
    %v2194 = vadd.f32 0.0, %v2193
    %v2195 = vpop.f32.mrb[0].mxu0
    %2196 = vmatprep.mubr.f32.mxu0 %v2094
    %2197 = vmatmul.mubr.f32.gmra.mrb[0].mxu0 %v2093
    %v2198 = vpop.f32.mrb[0].mxu0
    %v2199 = vadd.f32 0.0, %v2198
    %v2200 = vpop.f32.mrb[0].mxu0
    %2201 = vdwg.mxu0
    %v2202 = vadd.f32 %v1906, %v2194
    %v2203 = vadd.f32 %v1907, %v2199
    %v2204 = vld [vmem:[%s14] sm:$0x1]
    %v2206 = vlaneseq
    %v2207 = vshrl.u32 %v2206, 7
    %v2208 = vsub.s32 0, %v2207
    %v2209 = vrot.slane %v2204, %v2208
    %v2211 = vadd.f32 %v2202, %v2209
    %v2212 = vadd.f32 %v2203, %v2209
    %s2213 = scalar_lea.vmem %s3, 1
    %v2214 = vld [vmem:[%s2213] sm:$0x1]
    %s2215 = scalar_lea.vmem %s4, 1
    %v2216 = vld [vmem:[%s2215] sm:$0x1]
    %v2217 = vsel %vm86, %v2211, 0.0
    %2218 = vadd.xlane.f32.xlu0 %v2217
    %v2219 = vpop.xlane.xlu0 %2218
    %v2220 = vsel %vm86, %v2212, 0.0
    %2221 = vadd.xlane.f32.xlu0 %v2220
    %v2222 = vpop.xlane.xlu0 %2221
    %v2223 = vmul.f32 %v2219, %v93
    %v2224 = vmul.f32 %v2222, %v93
    %v2225 = vsub.f32 %v2211, %v2223
    %v2226 = vsub.f32 %v2212, %v2224
    %v2227 = vmul.f32 %v2225, %v2225
    %v2228 = vmul.f32 %v2226, %v2226
    %v2229 = vsel %vm86, %v2227, 0.0
    %2230 = vadd.xlane.f32.xlu0 %v2229
    %v2231 = vpop.xlane.xlu0 %2230
    %v2232 = vsel %vm86, %v2228, 0.0
    %2233 = vadd.xlane.f32.xlu0 %v2232
    %v2234 = vpop.xlane.xlu0 %2233
    %v2235 = vmul.f32 %v2231, %v93
    %v2236 = vmul.f32 %v2234, %v93
    %v2237 = vadd.f32 %v2235, 1e-05
    %v2238 = vadd.f32 %v2236, 1e-05
    %v2239 = vrsqrt.pop %v2237
    %v2240 = vrsqrt.pop %v2238
    %v2241 = vmul.f32 %v2225, %v2239
    %v2242 = vmul.f32 %v2226, %v2240
    %v2244 = vlaneseq
    %v2245 = vshrl.u32 %v2244, 7
    %v2246 = vsub.s32 0, %v2245
    %v2247 = vrot.slane %v2214, %v2246
    %v2249 = vmul.f32 %v2241, %v2247
    %v2250 = vmul.f32 %v2242, %v2247
    %v2252 = vlaneseq
    %v2253 = vshrl.u32 %v2252, 7
    %v2254 = vsub.s32 0, %v2253
    %v2255 = vrot.slane %v2216, %v2254
    %v2257 = vadd.f32 %v2249, %v2255
    %v2258 = vadd.f32 %v2250, %v2255
    %s2259 = scalar_lea.vmem %s5, 128
    %v2260 = vld [vmem:[%s2259] sm:$0xff]
    %v2261 = vld [vmem:[%s2259 + $0x8] sm:$0xff]
    %v2262 = vld [vmem:[%s2259 + $0x10] sm:$0xff]
    %v2263 = vld [vmem:[%s2259 + $0x18] sm:$0xff]
    %v2264 = vld [vmem:[%s2259 + $0x20] sm:$0xff]
    %v2265 = vld [vmem:[%s2259 + $0x28] sm:$0xff]
    %v2266 = vld [vmem:[%s2259 + $0x30] sm:$0xff]
    %v2267 = vld [vmem:[%s2259 + $0x38] sm:$0xff]
    %v2268 = vld [vmem:[%s2259 + $0x40] sm:$0xff]
    %v2269 = vld [vmem:[%s2259 + $0x48] sm:$0xff]
    %v2270 = vld [vmem:[%s2259 + $0x50] sm:$0xff]
    %v2271 = vld [vmem:[%s2259 + $0x58] sm:$0xff]
    %v2272 = vld [vmem:[%s2259 + $0x60] sm:$0xff]
    %v2273 = vld [vmem:[%s2259 + $0x68] sm:$0xff]
    %v2274 = vld [vmem:[%s2259 + $0x70] sm:$0xff]
    %v2275 = vld [vmem:[%s2259 + $0x78] sm:$0xff]
    %s2276 = scalar_lea.vmem %s6, 2
    %v2277 = vld [vmem:[%s2276] sm:$0x3]
    %v2279 = vlaneseq
    %v2280 = vshrl.u32 %v2279, 7
    %v2281 = vsub.s32 0, %v2280
    %v2282 = vrot.slane %v2277, %v2281
    %v2283 = vlaneseq
    %v2284 = vshrl.u32 %v2283, 7
    %v2285 = vsub.s32 1, %v2284
    %v2286 = vrot.slane %v2277, %v2285
    %v2290 = vsel %vm86, %v2257, 0
    %v2293 = vsel %vm86, %v2258, 0
    %2295 = vmatprep.subr.mxu0 %v2261
    %2296 = vmatpush1.msra.mxu0 %v2260
    %2297 = vmatprep.subr.mxu0 %v2263
    %2298 = vmatpush1.msra.mxu0 %v2262
    %2299 = vmatprep.subr.mxu0 %v2265
    %2300 = vmatpush1.msra.mxu0 %v2264
    %2301 = vmatprep.subr.mxu0 %v2267
    %2302 = vmatpush1.msra.mxu0 %v2266
    %2303 = vmatprep.subr.mxu0 %v2269
    %2304 = vmatpush1.msra.mxu0 %v2268
    %2305 = vmatprep.subr.mxu0 %v2271
    %2306 = vmatpush1.msra.mxu0 %v2270
    %2307 = vmatprep.subr.mxu0 %v2273
    %2308 = vmatpush1.msra.mxu0 %v2272
    %2309 = vmatprep.subr.mxu0 %v2275
    %2310 = vmatpush1.msra.mxu0 %v2274
    %2311 = vmatprep.subr.mxu0 0.0
    %2312 = vmatpush1.msra.mxu0 0.0
    %2313 = vmatprep.subr.mxu0 0.0
    %2314 = vmatpush1.msra.mxu0 0.0
    %2315 = vmatprep.subr.mxu0 0.0
    %2316 = vmatpush1.msra.mxu0 0.0
    %2317 = vmatprep.subr.mxu0 0.0
    %2318 = vmatpush1.msra.mxu0 0.0
    %2319 = vmatprep.subr.mxu0 0.0
    %2320 = vmatpush1.msra.mxu0 0.0
    %2321 = vmatprep.subr.mxu0 0.0
    %2322 = vmatpush1.msra.mxu0 0.0
    %2323 = vmatprep.subr.mxu0 0.0
    %2324 = vmatpush1.msra.mxu0 0.0
    %2325 = vmatprep.subr.mxu0 0.0
    %2326 = vmatpush1.msra.mxu0 0.0
    %2327 = vmatprep.subr.mxu0 0.0
    %2328 = vmatpush1.msra.mxu0 0.0
    %2329 = vmatprep.subr.mxu0 0.0
    %2330 = vmatpush1.msra.mxu0 0.0
    %2331 = vmatprep.subr.mxu0 0.0
    %2332 = vmatpush1.msra.mxu0 0.0
    %2333 = vmatprep.subr.mxu0 0.0
    %2334 = vmatpush1.msra.mxu0 0.0
    %2335 = vmatprep.subr.mxu0 0.0
    %2336 = vmatpush1.msra.mxu0 0.0
    %2337 = vmatprep.subr.mxu0 0.0
    %2338 = vmatpush1.msra.mxu0 0.0
    %2339 = vmatprep.subr.mxu0 0.0
    %2340 = vmatpush1.msra.mxu0 0.0
    %2341 = vmatprep.subr.mxu0 0.0
    %2342 = vmatpush1.msra.mxu0 0.0
    %2343 = vmatprep.subr.mxu0 0.0
    %2344 = vmatpush1.msra.mxu0 0.0
    %2345 = vmatprep.subr.mxu0 0.0
    %2346 = vmatpush1.msra.mxu0 0.0
    %2347 = vmatprep.subr.mxu0 0.0
    %2348 = vmatpush1.msra.mxu0 0.0
    %2349 = vmatprep.subr.mxu0 0.0
    %2350 = vmatpush1.msra.mxu0 0.0
    %2351 = vmatprep.subr.mxu0 0.0
    %2352 = vmatpush1.msra.mxu0 0.0
    %2353 = vmatprep.subr.mxu0 0.0
    %2354 = vmatpush1.msra.mxu0 0.0
    %2355 = vmatprep.subr.mxu0 0.0
    %2356 = vmatpush1.msra.mxu0 0.0
    %2357 = vmatprep.subr.mxu0 0.0
    %2358 = vmatpush1.msra.mxu0 0.0
    %2359 = vmatprep.mubr.f32.mxu0 0.0
    %2360 = vmatmul.mubr.f32.gmra.mrb[0].mxu0 %v2290
    %v2361 = vpop.f32.mrb[0].mxu0
    %v2362 = vadd.f32 %v2282, %v2361
    %v2363 = vpop.f32.mrb[0].mxu0
    %v2364 = vadd.f32 %v2286, %v2363
    %2365 = vmatprep.mubr.f32.mxu0 0.0
    %2366 = vmatmul.mubr.f32.gmra.mrb[0].mxu0 %v2293
    %v2367 = vpop.f32.mrb[0].mxu0
    %v2368 = vadd.f32 %v2282, %v2367
    %v2369 = vpop.f32.mrb[0].mxu0
    %v2370 = vadd.f32 %v2286, %v2369
    %2371 = vdwg.mxu0
    %s2372 = scalar_lea.vmem %s7, 64
    %v2373 = vld [vmem:[%s2372] sm:$0xff]
    %v2374 = vld [vmem:[%s2372 + $0x8] sm:$0xff]
    %v2375 = vld [vmem:[%s2372 + $0x10] sm:$0xff]
    %v2376 = vld [vmem:[%s2372 + $0x18] sm:$0xff]
    %v2377 = vld [vmem:[%s2372 + $0x20] sm:$0xff]
    %v2378 = vld [vmem:[%s2372 + $0x28] sm:$0xff]
    %v2379 = vld [vmem:[%s2372 + $0x30] sm:$0xff]
    %v2380 = vld [vmem:[%s2372 + $0x38] sm:$0xff]
    %v2381 = vmul.f32 %v2362, 0.25
    %v2382 = vmul.f32 %v2368, 0.25
    %2384 = vrot.lane.b32.xlu0 %v2362, 64
    %v2385 = vpop.permute.xlu0 %2384
    %v2387 = vsel %vm254, %v2381, 0
    %v2389 = vsel %vm254, %v2385, 0
    %2391 = vmatprep.subr.mxu0 0.0
    %2392 = vmatpush1.xpose.msra.mxu0 %v2389
    %2393 = vmatprep.subr.mxu0 0.0
    %2394 = vmatpush1.xpose.msra.mxu0 0.0
    %2395 = vmatprep.subr.mxu0 0.0
    %2396 = vmatpush1.xpose.msra.mxu0 0.0
    %2397 = vmatprep.subr.mxu0 0.0
    %2398 = vmatpush1.xpose.msra.mxu0 0.0
    %2399 = vmatprep.subr.mxu0 0.0
    %2400 = vmatpush1.xpose.msra.mxu0 0.0
    %2401 = vmatprep.subr.mxu0 0.0
    %2402 = vmatpush1.xpose.msra.mxu0 0.0
    %2403 = vmatprep.subr.mxu0 0.0
    %2404 = vmatpush1.xpose.msra.mxu0 0.0
    %2405 = vmatprep.subr.mxu0 0.0
    %2406 = vmatpush1.xpose.msra.mxu0 0.0
    %2407 = vmatprep.subr.mxu0 0.0
    %2408 = vmatpush1.xpose.msra.mxu0 0.0
    %2409 = vmatprep.subr.mxu0 0.0
    %2410 = vmatpush1.xpose.msra.mxu0 0.0
    %2411 = vmatprep.subr.mxu0 0.0
    %2412 = vmatpush1.xpose.msra.mxu0 0.0
    %2413 = vmatprep.subr.mxu0 0.0
    %2414 = vmatpush1.xpose.msra.mxu0 0.0
    %2415 = vmatprep.subr.mxu0 0.0
    %2416 = vmatpush1.xpose.msra.mxu0 0.0
    %2417 = vmatprep.subr.mxu0 0.0
    %2418 = vmatpush1.xpose.msra.mxu0 0.0
    %2419 = vmatprep.subr.mxu0 0.0
    %2420 = vmatpush1.xpose.msra.mxu0 0.0
    %2421 = vmatprep.subr.mxu0 0.0
    %2422 = vmatpush1.xpose.msra.mxu0 0.0
    %2423 = vmatprep.subr.mxu0 0.0
    %2424 = vmatpush1.xpose.msra.mxu0 0.0
    %2425 = vmatprep.subr.mxu0 0.0
    %2426 = vmatpush1.xpose.msra.mxu0 0.0
    %2427 = vmatprep.subr.mxu0 0.0
    %2428 = vmatpush1.xpose.msra.mxu0 0.0
    %2429 = vmatprep.subr.mxu0 0.0
    %2430 = vmatpush1.xpose.msra.mxu0 0.0
    %2431 = vmatprep.subr.mxu0 0.0
    %2432 = vmatpush1.xpose.msra.mxu0 0.0
    %2433 = vmatprep.subr.mxu0 0.0
    %2434 = vmatpush1.xpose.msra.mxu0 0.0
    %2435 = vmatprep.subr.mxu0 0.0
    %2436 = vmatpush1.xpose.msra.mxu0 0.0
    %2437 = vmatprep.subr.mxu0 0.0
    %2438 = vmatpush1.xpose.msra.mxu0 0.0
    %2439 = vmatprep.subr.mxu0 0.0
    %2440 = vmatpush1.xpose.msra.mxu0 0.0
    %2441 = vmatprep.subr.mxu0 0.0
    %2442 = vmatpush1.xpose.msra.mxu0 0.0
    %2443 = vmatprep.subr.mxu0 0.0
    %2444 = vmatpush1.xpose.msra.mxu0 0.0
    %2445 = vmatprep.subr.mxu0 0.0
    %2446 = vmatpush1.xpose.msra.mxu0 0.0
    %2447 = vmatprep.subr.mxu0 0.0
    %2448 = vmatpush1.xpose.msra.mxu0 0.0
    %2449 = vmatprep.subr.mxu0 0.0
    %2450 = vmatpush1.xpose.msra.mxu0 0.0
    %2451 = vmatprep.subr.mxu0 0.0
    %2452 = vmatpush1.xpose.msra.mxu0 0.0
    %2453 = vmatprep.subr.mxu0 0.0
    %2454 = vmatpush1.xpose.msra.mxu0 0.0
    %2455 = vmatprep.mubr.f32.mxu0 0.0
    %2456 = vmatmul.mubr.f32.gmra.mrb[0].mxu0 %v2387
    %v2457 = vpop.f32.mrb[0].mxu0
    %v2458 = vadd.f32 %v83, %v2457
    %v2459 = vpop.f32.mrb[0].mxu0
    %2460 = vdwg.mxu0
    %2462 = vrot.lane.b32.xlu0 %v2368, 64
    %v2463 = vpop.permute.xlu0 %2462
    %v2465 = vsel %vm254, %v2382, 0
    %v2467 = vsel %vm254, %v2463, 0
    %2469 = vmatprep.subr.mxu0 0.0
    %2470 = vmatpush1.xpose.msra.mxu0 %v2467
    %2471 = vmatprep.subr.mxu0 0.0
    %2472 = vmatpush1.xpose.msra.mxu0 0.0
    %2473 = vmatprep.subr.mxu0 0.0
    %2474 = vmatpush1.xpose.msra.mxu0 0.0
    %2475 = vmatprep.subr.mxu0 0.0
    %2476 = vmatpush1.xpose.msra.mxu0 0.0
    %2477 = vmatprep.subr.mxu0 0.0
    %2478 = vmatpush1.xpose.msra.mxu0 0.0
    %2479 = vmatprep.subr.mxu0 0.0
    %2480 = vmatpush1.xpose.msra.mxu0 0.0
    %2481 = vmatprep.subr.mxu0 0.0
    %2482 = vmatpush1.xpose.msra.mxu0 0.0
    %2483 = vmatprep.subr.mxu0 0.0
    %2484 = vmatpush1.xpose.msra.mxu0 0.0
    %2485 = vmatprep.subr.mxu0 0.0
    %2486 = vmatpush1.xpose.msra.mxu0 0.0
    %2487 = vmatprep.subr.mxu0 0.0
    %2488 = vmatpush1.xpose.msra.mxu0 0.0
    %2489 = vmatprep.subr.mxu0 0.0
    %2490 = vmatpush1.xpose.msra.mxu0 0.0
    %2491 = vmatprep.subr.mxu0 0.0
    %2492 = vmatpush1.xpose.msra.mxu0 0.0
    %2493 = vmatprep.subr.mxu0 0.0
    %2494 = vmatpush1.xpose.msra.mxu0 0.0
    %2495 = vmatprep.subr.mxu0 0.0
    %2496 = vmatpush1.xpose.msra.mxu0 0.0
    %2497 = vmatprep.subr.mxu0 0.0
    %2498 = vmatpush1.xpose.msra.mxu0 0.0
    %2499 = vmatprep.subr.mxu0 0.0
    %2500 = vmatpush1.xpose.msra.mxu0 0.0
    %2501 = vmatprep.subr.mxu0 0.0
    %2502 = vmatpush1.xpose.msra.mxu0 0.0
    %2503 = vmatprep.subr.mxu0 0.0
    %2504 = vmatpush1.xpose.msra.mxu0 0.0
    %2505 = vmatprep.subr.mxu0 0.0
    %2506 = vmatpush1.xpose.msra.mxu0 0.0
    %2507 = vmatprep.subr.mxu0 0.0
    %2508 = vmatpush1.xpose.msra.mxu0 0.0
    %2509 = vmatprep.subr.mxu0 0.0
    %2510 = vmatpush1.xpose.msra.mxu0 0.0
    %2511 = vmatprep.subr.mxu0 0.0
    %2512 = vmatpush1.xpose.msra.mxu0 0.0
    %2513 = vmatprep.subr.mxu0 0.0
    %2514 = vmatpush1.xpose.msra.mxu0 0.0
    %2515 = vmatprep.subr.mxu0 0.0
    %2516 = vmatpush1.xpose.msra.mxu0 0.0
    %2517 = vmatprep.subr.mxu0 0.0
    %2518 = vmatpush1.xpose.msra.mxu0 0.0
    %2519 = vmatprep.subr.mxu0 0.0
    %2520 = vmatpush1.xpose.msra.mxu0 0.0
    %2521 = vmatprep.subr.mxu0 0.0
    %2522 = vmatpush1.xpose.msra.mxu0 0.0
    %2523 = vmatprep.subr.mxu0 0.0
    %2524 = vmatpush1.xpose.msra.mxu0 0.0
    %2525 = vmatprep.subr.mxu0 0.0
    %2526 = vmatpush1.xpose.msra.mxu0 0.0
    %2527 = vmatprep.subr.mxu0 0.0
    %2528 = vmatpush1.xpose.msra.mxu0 0.0
    %2529 = vmatprep.subr.mxu0 0.0
    %2530 = vmatpush1.xpose.msra.mxu0 0.0
    %2531 = vmatprep.subr.mxu0 0.0
    %2532 = vmatpush1.xpose.msra.mxu0 0.0
    %2533 = vmatprep.mubr.f32.mxu0 0.0
    %2534 = vmatmul.mubr.f32.gmra.mrb[0].mxu0 %v2465
    %v2535 = vpop.f32.mrb[0].mxu0
    %v2536 = vadd.f32 %v83, %v2535
    %v2537 = vpop.f32.mrb[0].mxu0
    %2538 = vdwg.mxu0
    %v2539 = vsel %vm408, %v2458, -inf
    %2540 = vmax.xlane.f32.xlu0 %v2539
    %v2541 = vpop.xlane.xlu0 %2540
    %v2542 = vsel %vm408, %v2536, -inf
    %2543 = vmax.xlane.f32.xlu0 %v2542
    %v2544 = vpop.xlane.xlu0 %2543
    %v2545 = vsub.f32 %v2458, %v2541
    %v2546 = vsub.f32 %v2536, %v2544
    %v2547 = vmul.f32 %v2545, 1.442695
    %v2548 = vpow.pop %v2547
    %v2549 = vmul.f32 %v2546, 1.442695
    %v2550 = vpow.pop %v2549
    %v2551 = vsel %vm408, %v2548, 0.0
    %2552 = vadd.xlane.f32.xlu0 %v2551
    %v2553 = vpop.xlane.xlu0 %2552
    %v2554 = vsel %vm408, %v2550, 0.0
    %2555 = vadd.xlane.f32.xlu0 %v2554
    %v2556 = vpop.xlane.xlu0 %2555
    %v2557 = vrcp.pop %v2553
    %v2558 = vrcp.pop %v2556
    %v2559 = vmul.f32 %v2548, %v2557
    %v2560 = vmul.f32 %v2550, %v2558
    %v2562 = vsel %vm408, %v2559, 0
    %2564 = vmatprep.subr.mxu0 0.0
    %2565 = vmatpush1.msra.mxu0 %v2364
    %2566 = vmatprep.subr.mxu0 0.0
    %2567 = vmatpush1.msra.mxu0 0.0
    %2568 = vmatprep.subr.mxu0 0.0
    %2569 = vmatpush1.msra.mxu0 0.0
    %2570 = vmatprep.subr.mxu0 0.0
    %2571 = vmatpush1.msra.mxu0 0.0
    %2572 = vmatprep.subr.mxu0 0.0
    %2573 = vmatpush1.msra.mxu0 0.0
    %2574 = vmatprep.subr.mxu0 0.0
    %2575 = vmatpush1.msra.mxu0 0.0
    %2576 = vmatprep.subr.mxu0 0.0
    %2577 = vmatpush1.msra.mxu0 0.0
    %2578 = vmatprep.subr.mxu0 0.0
    %2579 = vmatpush1.msra.mxu0 0.0
    %2580 = vmatprep.subr.mxu0 0.0
    %2581 = vmatpush1.msra.mxu0 0.0
    %2582 = vmatprep.subr.mxu0 0.0
    %2583 = vmatpush1.msra.mxu0 0.0
    %2584 = vmatprep.subr.mxu0 0.0
    %2585 = vmatpush1.msra.mxu0 0.0
    %2586 = vmatprep.subr.mxu0 0.0
    %2587 = vmatpush1.msra.mxu0 0.0
    %2588 = vmatprep.subr.mxu0 0.0
    %2589 = vmatpush1.msra.mxu0 0.0
    %2590 = vmatprep.subr.mxu0 0.0
    %2591 = vmatpush1.msra.mxu0 0.0
    %2592 = vmatprep.subr.mxu0 0.0
    %2593 = vmatpush1.msra.mxu0 0.0
    %2594 = vmatprep.subr.mxu0 0.0
    %2595 = vmatpush1.msra.mxu0 0.0
    %2596 = vmatprep.subr.mxu0 0.0
    %2597 = vmatpush1.msra.mxu0 0.0
    %2598 = vmatprep.subr.mxu0 0.0
    %2599 = vmatpush1.msra.mxu0 0.0
    %2600 = vmatprep.subr.mxu0 0.0
    %2601 = vmatpush1.msra.mxu0 0.0
    %2602 = vmatprep.subr.mxu0 0.0
    %2603 = vmatpush1.msra.mxu0 0.0
    %2604 = vmatprep.subr.mxu0 0.0
    %2605 = vmatpush1.msra.mxu0 0.0
    %2606 = vmatprep.subr.mxu0 0.0
    %2607 = vmatpush1.msra.mxu0 0.0
    %2608 = vmatprep.subr.mxu0 0.0
    %2609 = vmatpush1.msra.mxu0 0.0
    %2610 = vmatprep.subr.mxu0 0.0
    %2611 = vmatpush1.msra.mxu0 0.0
    %2612 = vmatprep.subr.mxu0 0.0
    %2613 = vmatpush1.msra.mxu0 0.0
    %2614 = vmatprep.subr.mxu0 0.0
    %2615 = vmatpush1.msra.mxu0 0.0
    %2616 = vmatprep.subr.mxu0 0.0
    %2617 = vmatpush1.msra.mxu0 0.0
    %2618 = vmatprep.subr.mxu0 0.0
    %2619 = vmatpush1.msra.mxu0 0.0
    %2620 = vmatprep.subr.mxu0 0.0
    %2621 = vmatpush1.msra.mxu0 0.0
    %2622 = vmatprep.subr.mxu0 0.0
    %2623 = vmatpush1.msra.mxu0 0.0
    %2624 = vmatprep.subr.mxu0 0.0
    %2625 = vmatpush1.msra.mxu0 0.0
    %2626 = vmatprep.subr.mxu0 0.0
    %2627 = vmatpush1.msra.mxu0 0.0
    %2628 = vmatprep.mubr.f32.mxu0 0.0
    %2629 = vmatmul.mubr.f32.gmra.mrb[0].mxu0 %v2562
    %v2630 = vpop.f32.mrb[0].mxu0
    %v2631 = vadd.f32 0.0, %v2630
    %v2632 = vpop.f32.mrb[0].mxu0
    %2633 = vdwg.mxu0
    %v2635 = vsel %vm408, %v2560, 0
    %2637 = vmatprep.subr.mxu0 0.0
    %2638 = vmatpush1.msra.mxu0 %v2370
    %2639 = vmatprep.subr.mxu0 0.0
    %2640 = vmatpush1.msra.mxu0 0.0
    %2641 = vmatprep.subr.mxu0 0.0
    %2642 = vmatpush1.msra.mxu0 0.0
    %2643 = vmatprep.subr.mxu0 0.0
    %2644 = vmatpush1.msra.mxu0 0.0
    %2645 = vmatprep.subr.mxu0 0.0
    %2646 = vmatpush1.msra.mxu0 0.0
    %2647 = vmatprep.subr.mxu0 0.0
    %2648 = vmatpush1.msra.mxu0 0.0
    %2649 = vmatprep.subr.mxu0 0.0
    %2650 = vmatpush1.msra.mxu0 0.0
    %2651 = vmatprep.subr.mxu0 0.0
    %2652 = vmatpush1.msra.mxu0 0.0
    %2653 = vmatprep.subr.mxu0 0.0
    %2654 = vmatpush1.msra.mxu0 0.0
    %2655 = vmatprep.subr.mxu0 0.0
    %2656 = vmatpush1.msra.mxu0 0.0
    %2657 = vmatprep.subr.mxu0 0.0
    %2658 = vmatpush1.msra.mxu0 0.0
    %2659 = vmatprep.subr.mxu0 0.0
    %2660 = vmatpush1.msra.mxu0 0.0
    %2661 = vmatprep.subr.mxu0 0.0
    %2662 = vmatpush1.msra.mxu0 0.0
    %2663 = vmatprep.subr.mxu0 0.0
    %2664 = vmatpush1.msra.mxu0 0.0
    %2665 = vmatprep.subr.mxu0 0.0
    %2666 = vmatpush1.msra.mxu0 0.0
    %2667 = vmatprep.subr.mxu0 0.0
    %2668 = vmatpush1.msra.mxu0 0.0
    %2669 = vmatprep.subr.mxu0 0.0
    %2670 = vmatpush1.msra.mxu0 0.0
    %2671 = vmatprep.subr.mxu0 0.0
    %2672 = vmatpush1.msra.mxu0 0.0
    %2673 = vmatprep.subr.mxu0 0.0
    %2674 = vmatpush1.msra.mxu0 0.0
    %2675 = vmatprep.subr.mxu0 0.0
    %2676 = vmatpush1.msra.mxu0 0.0
    %2677 = vmatprep.subr.mxu0 0.0
    %2678 = vmatpush1.msra.mxu0 0.0
    %2679 = vmatprep.subr.mxu0 0.0
    %2680 = vmatpush1.msra.mxu0 0.0
    %2681 = vmatprep.subr.mxu0 0.0
    %2682 = vmatpush1.msra.mxu0 0.0
    %2683 = vmatprep.subr.mxu0 0.0
    %2684 = vmatpush1.msra.mxu0 0.0
    %2685 = vmatprep.subr.mxu0 0.0
    %2686 = vmatpush1.msra.mxu0 0.0
    %2687 = vmatprep.subr.mxu0 0.0
    %2688 = vmatpush1.msra.mxu0 0.0
    %2689 = vmatprep.subr.mxu0 0.0
    %2690 = vmatpush1.msra.mxu0 0.0
    %2691 = vmatprep.subr.mxu0 0.0
    %2692 = vmatpush1.msra.mxu0 0.0
    %2693 = vmatprep.subr.mxu0 0.0
    %2694 = vmatpush1.msra.mxu0 0.0
    %2695 = vmatprep.subr.mxu0 0.0
    %2696 = vmatpush1.msra.mxu0 0.0
    %2697 = vmatprep.subr.mxu0 0.0
    %2698 = vmatpush1.msra.mxu0 0.0
    %2699 = vmatprep.subr.mxu0 0.0
    %2700 = vmatpush1.msra.mxu0 0.0
    %2701 = vmatprep.mubr.f32.mxu0 0.0
    %2702 = vmatmul.mubr.f32.gmra.mrb[0].mxu0 %v2635
    %v2703 = vpop.f32.mrb[0].mxu0
    %v2704 = vadd.f32 0.0, %v2703
    %v2705 = vpop.f32.mrb[0].mxu0
    %2706 = vdwg.mxu0
    %2707 = vrot.lane.b32.xlu0 %v2381, 112
    %v2708 = vpop.permute.xlu0 %2707
    %2709 = vrot.lane.b32.xlu0 %v2362, 48
    %v2710 = vpop.permute.xlu0 %2709
    %v2711 = vsel %vm254, %v2708, 0
    %v2713 = vsel %vm254, %v2710, 0
    %2715 = vmatprep.subr.mxu0 0.0
    %2716 = vmatpush1.xpose.msra.mxu0 %v2713
    %2717 = vmatprep.subr.mxu0 0.0
    %2718 = vmatpush1.xpose.msra.mxu0 0.0
    %2719 = vmatprep.subr.mxu0 0.0
    %2720 = vmatpush1.xpose.msra.mxu0 0.0
    %2721 = vmatprep.subr.mxu0 0.0
    %2722 = vmatpush1.xpose.msra.mxu0 0.0
    %2723 = vmatprep.subr.mxu0 0.0
    %2724 = vmatpush1.xpose.msra.mxu0 0.0
    %2725 = vmatprep.subr.mxu0 0.0
    %2726 = vmatpush1.xpose.msra.mxu0 0.0
    %2727 = vmatprep.subr.mxu0 0.0
    %2728 = vmatpush1.xpose.msra.mxu0 0.0
    %2729 = vmatprep.subr.mxu0 0.0
    %2730 = vmatpush1.xpose.msra.mxu0 0.0
    %2731 = vmatprep.subr.mxu0 0.0
    %2732 = vmatpush1.xpose.msra.mxu0 0.0
    %2733 = vmatprep.subr.mxu0 0.0
    %2734 = vmatpush1.xpose.msra.mxu0 0.0
    %2735 = vmatprep.subr.mxu0 0.0
    %2736 = vmatpush1.xpose.msra.mxu0 0.0
    %2737 = vmatprep.subr.mxu0 0.0
    %2738 = vmatpush1.xpose.msra.mxu0 0.0
    %2739 = vmatprep.subr.mxu0 0.0
    %2740 = vmatpush1.xpose.msra.mxu0 0.0
    %2741 = vmatprep.subr.mxu0 0.0
    %2742 = vmatpush1.xpose.msra.mxu0 0.0
    %2743 = vmatprep.subr.mxu0 0.0
    %2744 = vmatpush1.xpose.msra.mxu0 0.0
    %2745 = vmatprep.subr.mxu0 0.0
    %2746 = vmatpush1.xpose.msra.mxu0 0.0
    %2747 = vmatprep.subr.mxu0 0.0
    %2748 = vmatpush1.xpose.msra.mxu0 0.0
    %2749 = vmatprep.subr.mxu0 0.0
    %2750 = vmatpush1.xpose.msra.mxu0 0.0
    %2751 = vmatprep.subr.mxu0 0.0
    %2752 = vmatpush1.xpose.msra.mxu0 0.0
    %2753 = vmatprep.subr.mxu0 0.0
    %2754 = vmatpush1.xpose.msra.mxu0 0.0
    %2755 = vmatprep.subr.mxu0 0.0
    %2756 = vmatpush1.xpose.msra.mxu0 0.0
    %2757 = vmatprep.subr.mxu0 0.0
    %2758 = vmatpush1.xpose.msra.mxu0 0.0
    %2759 = vmatprep.subr.mxu0 0.0
    %2760 = vmatpush1.xpose.msra.mxu0 0.0
    %2761 = vmatprep.subr.mxu0 0.0
    %2762 = vmatpush1.xpose.msra.mxu0 0.0
    %2763 = vmatprep.subr.mxu0 0.0
    %2764 = vmatpush1.xpose.msra.mxu0 0.0
    %2765 = vmatprep.subr.mxu0 0.0
    %2766 = vmatpush1.xpose.msra.mxu0 0.0
    %2767 = vmatprep.subr.mxu0 0.0
    %2768 = vmatpush1.xpose.msra.mxu0 0.0
    %2769 = vmatprep.subr.mxu0 0.0
    %2770 = vmatpush1.xpose.msra.mxu0 0.0
    %2771 = vmatprep.subr.mxu0 0.0
    %2772 = vmatpush1.xpose.msra.mxu0 0.0
    %2773 = vmatprep.subr.mxu0 0.0
    %2774 = vmatpush1.xpose.msra.mxu0 0.0
    %2775 = vmatprep.subr.mxu0 0.0
    %2776 = vmatpush1.xpose.msra.mxu0 0.0
    %2777 = vmatprep.subr.mxu0 0.0
    %2778 = vmatpush1.xpose.msra.mxu0 0.0
    %2779 = vmatprep.mubr.f32.mxu0 0.0
    %2780 = vmatmul.mubr.f32.gmra.mrb[0].mxu0 %v2711
    %v2781 = vpop.f32.mrb[0].mxu0
    %v2782 = vadd.f32 %v83, %v2781
    %v2783 = vpop.f32.mrb[0].mxu0
    %2784 = vdwg.mxu0
    %2785 = vrot.lane.b32.xlu0 %v2382, 112
    %v2786 = vpop.permute.xlu0 %2785
    %2787 = vrot.lane.b32.xlu0 %v2368, 48
    %v2788 = vpop.permute.xlu0 %2787
    %v2789 = vsel %vm254, %v2786, 0
    %v2791 = vsel %vm254, %v2788, 0
    %2793 = vmatprep.subr.mxu0 0.0
    %2794 = vmatpush1.xpose.msra.mxu0 %v2791
    %2795 = vmatprep.subr.mxu0 0.0
    %2796 = vmatpush1.xpose.msra.mxu0 0.0
    %2797 = vmatprep.subr.mxu0 0.0
    %2798 = vmatpush1.xpose.msra.mxu0 0.0
    %2799 = vmatprep.subr.mxu0 0.0
    %2800 = vmatpush1.xpose.msra.mxu0 0.0
    %2801 = vmatprep.subr.mxu0 0.0
    %2802 = vmatpush1.xpose.msra.mxu0 0.0
    %2803 = vmatprep.subr.mxu0 0.0
    %2804 = vmatpush1.xpose.msra.mxu0 0.0
    %2805 = vmatprep.subr.mxu0 0.0
    %2806 = vmatpush1.xpose.msra.mxu0 0.0
    %2807 = vmatprep.subr.mxu0 0.0
    %2808 = vmatpush1.xpose.msra.mxu0 0.0
    %2809 = vmatprep.subr.mxu0 0.0
    %2810 = vmatpush1.xpose.msra.mxu0 0.0
    %2811 = vmatprep.subr.mxu0 0.0
    %2812 = vmatpush1.xpose.msra.mxu0 0.0
    %2813 = vmatprep.subr.mxu0 0.0
    %2814 = vmatpush1.xpose.msra.mxu0 0.0
    %2815 = vmatprep.subr.mxu0 0.0
    %2816 = vmatpush1.xpose.msra.mxu0 0.0
    %2817 = vmatprep.subr.mxu0 0.0
    %2818 = vmatpush1.xpose.msra.mxu0 0.0
    %2819 = vmatprep.subr.mxu0 0.0
    %2820 = vmatpush1.xpose.msra.mxu0 0.0
    %2821 = vmatprep.subr.mxu0 0.0
    %2822 = vmatpush1.xpose.msra.mxu0 0.0
    %2823 = vmatprep.subr.mxu0 0.0
    %2824 = vmatpush1.xpose.msra.mxu0 0.0
    %2825 = vmatprep.subr.mxu0 0.0
    %2826 = vmatpush1.xpose.msra.mxu0 0.0
    %2827 = vmatprep.subr.mxu0 0.0
    %2828 = vmatpush1.xpose.msra.mxu0 0.0
    %2829 = vmatprep.subr.mxu0 0.0
    %2830 = vmatpush1.xpose.msra.mxu0 0.0
    %2831 = vmatprep.subr.mxu0 0.0
    %2832 = vmatpush1.xpose.msra.mxu0 0.0
    %2833 = vmatprep.subr.mxu0 0.0
    %2834 = vmatpush1.xpose.msra.mxu0 0.0
    %2835 = vmatprep.subr.mxu0 0.0
    %2836 = vmatpush1.xpose.msra.mxu0 0.0
    %2837 = vmatprep.subr.mxu0 0.0
    %2838 = vmatpush1.xpose.msra.mxu0 0.0
    %2839 = vmatprep.subr.mxu0 0.0
    %2840 = vmatpush1.xpose.msra.mxu0 0.0
    %2841 = vmatprep.subr.mxu0 0.0
    %2842 = vmatpush1.xpose.msra.mxu0 0.0
    %2843 = vmatprep.subr.mxu0 0.0
    %2844 = vmatpush1.xpose.msra.mxu0 0.0
    %2845 = vmatprep.subr.mxu0 0.0
    %2846 = vmatpush1.xpose.msra.mxu0 0.0
    %2847 = vmatprep.subr.mxu0 0.0
    %2848 = vmatpush1.xpose.msra.mxu0 0.0
    %2849 = vmatprep.subr.mxu0 0.0
    %2850 = vmatpush1.xpose.msra.mxu0 0.0
    %2851 = vmatprep.subr.mxu0 0.0
    %2852 = vmatpush1.xpose.msra.mxu0 0.0
    %2853 = vmatprep.subr.mxu0 0.0
    %2854 = vmatpush1.xpose.msra.mxu0 0.0
    %2855 = vmatprep.subr.mxu0 0.0
    %2856 = vmatpush1.xpose.msra.mxu0 0.0
    %2857 = vmatprep.mubr.f32.mxu0 0.0
    %2858 = vmatmul.mubr.f32.gmra.mrb[0].mxu0 %v2789
    %v2859 = vpop.f32.mrb[0].mxu0
    %v2860 = vadd.f32 %v83, %v2859
    %v2861 = vpop.f32.mrb[0].mxu0
    %2862 = vdwg.mxu0
    %v2863 = vsel %vm408, %v2782, -inf
    %2864 = vmax.xlane.f32.xlu0 %v2863
    %v2865 = vpop.xlane.xlu0 %2864
    %v2866 = vsel %vm408, %v2860, -inf
    %2867 = vmax.xlane.f32.xlu0 %v2866
    %v2868 = vpop.xlane.xlu0 %2867
    %v2869 = vsub.f32 %v2782, %v2865
    %v2870 = vsub.f32 %v2860, %v2868
    %v2871 = vmul.f32 %v2869, 1.442695
    %v2872 = vpow.pop %v2871
    %v2873 = vmul.f32 %v2870, 1.442695
    %v2874 = vpow.pop %v2873
    %v2875 = vsel %vm408, %v2872, 0.0
    %2876 = vadd.xlane.f32.xlu0 %v2875
    %v2877 = vpop.xlane.xlu0 %2876
    %v2878 = vsel %vm408, %v2874, 0.0
    %2879 = vadd.xlane.f32.xlu0 %v2878
    %v2880 = vpop.xlane.xlu0 %2879
    %v2881 = vrcp.pop %v2877
    %v2882 = vrcp.pop %v2880
    %v2883 = vmul.f32 %v2872, %v2881
    %v2884 = vmul.f32 %v2874, %v2882
    %2886 = vrot.lane.b32.xlu0 %v2364, 112
    %v2887 = vpop.permute.xlu0 %2886
    %v2890 = vsel %vm408, %v2883, 0
    %2892 = vmatprep.subr.mxu0 0.0
    %2893 = vmatpush1.msra.mxu0 %v2887
    %2894 = vmatprep.subr.mxu0 0.0
    %2895 = vmatpush1.msra.mxu0 0.0
    %2896 = vmatprep.subr.mxu0 0.0
    %2897 = vmatpush1.msra.mxu0 0.0
    %2898 = vmatprep.subr.mxu0 0.0
    %2899 = vmatpush1.msra.mxu0 0.0
    %2900 = vmatprep.subr.mxu0 0.0
    %2901 = vmatpush1.msra.mxu0 0.0
    %2902 = vmatprep.subr.mxu0 0.0
    %2903 = vmatpush1.msra.mxu0 0.0
    %2904 = vmatprep.subr.mxu0 0.0
    %2905 = vmatpush1.msra.mxu0 0.0
    %2906 = vmatprep.subr.mxu0 0.0
    %2907 = vmatpush1.msra.mxu0 0.0
    %2908 = vmatprep.subr.mxu0 0.0
    %2909 = vmatpush1.msra.mxu0 0.0
    %2910 = vmatprep.subr.mxu0 0.0
    %2911 = vmatpush1.msra.mxu0 0.0
    %2912 = vmatprep.subr.mxu0 0.0
    %2913 = vmatpush1.msra.mxu0 0.0
    %2914 = vmatprep.subr.mxu0 0.0
    %2915 = vmatpush1.msra.mxu0 0.0
    %2916 = vmatprep.subr.mxu0 0.0
    %2917 = vmatpush1.msra.mxu0 0.0
    %2918 = vmatprep.subr.mxu0 0.0
    %2919 = vmatpush1.msra.mxu0 0.0
    %2920 = vmatprep.subr.mxu0 0.0
    %2921 = vmatpush1.msra.mxu0 0.0
    %2922 = vmatprep.subr.mxu0 0.0
    %2923 = vmatpush1.msra.mxu0 0.0
    %2924 = vmatprep.subr.mxu0 0.0
    %2925 = vmatpush1.msra.mxu0 0.0
    %2926 = vmatprep.subr.mxu0 0.0
    %2927 = vmatpush1.msra.mxu0 0.0
    %2928 = vmatprep.subr.mxu0 0.0
    %2929 = vmatpush1.msra.mxu0 0.0
    %2930 = vmatprep.subr.mxu0 0.0
    %2931 = vmatpush1.msra.mxu0 0.0
    %2932 = vmatprep.subr.mxu0 0.0
    %2933 = vmatpush1.msra.mxu0 0.0
    %2934 = vmatprep.subr.mxu0 0.0
    %2935 = vmatpush1.msra.mxu0 0.0
    %2936 = vmatprep.subr.mxu0 0.0
    %2937 = vmatpush1.msra.mxu0 0.0
    %2938 = vmatprep.subr.mxu0 0.0
    %2939 = vmatpush1.msra.mxu0 0.0
    %2940 = vmatprep.subr.mxu0 0.0
    %2941 = vmatpush1.msra.mxu0 0.0
    %2942 = vmatprep.subr.mxu0 0.0
    %2943 = vmatpush1.msra.mxu0 0.0
    %2944 = vmatprep.subr.mxu0 0.0
    %2945 = vmatpush1.msra.mxu0 0.0
    %2946 = vmatprep.subr.mxu0 0.0
    %2947 = vmatpush1.msra.mxu0 0.0
    %2948 = vmatprep.subr.mxu0 0.0
    %2949 = vmatpush1.msra.mxu0 0.0
    %2950 = vmatprep.subr.mxu0 0.0
    %2951 = vmatpush1.msra.mxu0 0.0
    %2952 = vmatprep.subr.mxu0 0.0
    %2953 = vmatpush1.msra.mxu0 0.0
    %2954 = vmatprep.subr.mxu0 0.0
    %2955 = vmatpush1.msra.mxu0 0.0
    %2956 = vmatprep.mubr.f32.mxu0 0.0
    %2957 = vmatmul.mubr.f32.gmra.mrb[0].mxu0 %v2890
    %v2958 = vpop.f32.mrb[0].mxu0
    %v2959 = vadd.f32 0.0, %v2958
    %v2960 = vpop.f32.mrb[0].mxu0
    %2961 = vdwg.mxu0
    %2963 = vrot.lane.b32.xlu0 %v2370, 112
    %v2964 = vpop.permute.xlu0 %2963
    %v2967 = vsel %vm408, %v2884, 0
    %2969 = vmatprep.subr.mxu0 0.0
    %2970 = vmatpush1.msra.mxu0 %v2964
    %2971 = vmatprep.subr.mxu0 0.0
    %2972 = vmatpush1.msra.mxu0 0.0
    %2973 = vmatprep.subr.mxu0 0.0
    %2974 = vmatpush1.msra.mxu0 0.0
    %2975 = vmatprep.subr.mxu0 0.0
    %2976 = vmatpush1.msra.mxu0 0.0
    %2977 = vmatprep.subr.mxu0 0.0
    %2978 = vmatpush1.msra.mxu0 0.0
    %2979 = vmatprep.subr.mxu0 0.0
    %2980 = vmatpush1.msra.mxu0 0.0
    %2981 = vmatprep.subr.mxu0 0.0
    %2982 = vmatpush1.msra.mxu0 0.0
    %2983 = vmatprep.subr.mxu0 0.0
    %2984 = vmatpush1.msra.mxu0 0.0
    %2985 = vmatprep.subr.mxu0 0.0
    %2986 = vmatpush1.msra.mxu0 0.0
    %2987 = vmatprep.subr.mxu0 0.0
    %2988 = vmatpush1.msra.mxu0 0.0
    %2989 = vmatprep.subr.mxu0 0.0
    %2990 = vmatpush1.msra.mxu0 0.0
    %2991 = vmatprep.subr.mxu0 0.0
    %2992 = vmatpush1.msra.mxu0 0.0
    %2993 = vmatprep.subr.mxu0 0.0
    %2994 = vmatpush1.msra.mxu0 0.0
    %2995 = vmatprep.subr.mxu0 0.0
    %2996 = vmatpush1.msra.mxu0 0.0
    %2997 = vmatprep.subr.mxu0 0.0
    %2998 = vmatpush1.msra.mxu0 0.0
    %2999 = vmatprep.subr.mxu0 0.0
    %3000 = vmatpush1.msra.mxu0 0.0
    %3001 = vmatprep.subr.mxu0 0.0
    %3002 = vmatpush1.msra.mxu0 0.0
    %3003 = vmatprep.subr.mxu0 0.0
    %3004 = vmatpush1.msra.mxu0 0.0
    %3005 = vmatprep.subr.mxu0 0.0
    %3006 = vmatpush1.msra.mxu0 0.0
    %3007 = vmatprep.subr.mxu0 0.0
    %3008 = vmatpush1.msra.mxu0 0.0
    %3009 = vmatprep.subr.mxu0 0.0
    %3010 = vmatpush1.msra.mxu0 0.0
    %3011 = vmatprep.subr.mxu0 0.0
    %3012 = vmatpush1.msra.mxu0 0.0
    %3013 = vmatprep.subr.mxu0 0.0
    %3014 = vmatpush1.msra.mxu0 0.0
    %3015 = vmatprep.subr.mxu0 0.0
    %3016 = vmatpush1.msra.mxu0 0.0
    %3017 = vmatprep.subr.mxu0 0.0
    %3018 = vmatpush1.msra.mxu0 0.0
    %3019 = vmatprep.subr.mxu0 0.0
    %3020 = vmatpush1.msra.mxu0 0.0
    %3021 = vmatprep.subr.mxu0 0.0
    %3022 = vmatpush1.msra.mxu0 0.0
    %3023 = vmatprep.subr.mxu0 0.0
    %3024 = vmatpush1.msra.mxu0 0.0
    %3025 = vmatprep.subr.mxu0 0.0
    %3026 = vmatpush1.msra.mxu0 0.0
    %3027 = vmatprep.subr.mxu0 0.0
    %3028 = vmatpush1.msra.mxu0 0.0
    %3029 = vmatprep.subr.mxu0 0.0
    %3030 = vmatpush1.msra.mxu0 0.0
    %3031 = vmatprep.subr.mxu0 0.0
    %3032 = vmatpush1.msra.mxu0 0.0
    %3033 = vmatprep.mubr.f32.mxu0 0.0
    %3034 = vmatmul.mubr.f32.gmra.mrb[0].mxu0 %v2967
    %v3035 = vpop.f32.mrb[0].mxu0
    %v3036 = vadd.f32 0.0, %v3035
    %v3037 = vpop.f32.mrb[0].mxu0
    %3038 = vdwg.mxu0
    %v3040 = vsel %vm254, %v2959, 0
    %v3043 = vsel %vm254, %v3036, 0
    %3045 = vmatprep.subr.mxu0 0.0
    %3046 = vmatpush1.msra.mxu0 %v2375
    %3047 = vmatprep.subr.mxu0 0.0
    %3048 = vmatpush1.msra.mxu0 %v2376
    %3049 = vmatprep.subr.mxu0 0.0
    %3050 = vmatpush1.msra.mxu0 0.0
    %3051 = vmatprep.subr.mxu0 0.0
    %3052 = vmatpush1.msra.mxu0 0.0
    %3053 = vmatprep.subr.mxu0 0.0
    %3054 = vmatpush1.msra.mxu0 0.0
    %3055 = vmatprep.subr.mxu0 0.0
    %3056 = vmatpush1.msra.mxu0 0.0
    %3057 = vmatprep.subr.mxu0 0.0
    %3058 = vmatpush1.msra.mxu0 0.0
    %3059 = vmatprep.subr.mxu0 0.0
    %3060 = vmatpush1.msra.mxu0 0.0
    %3061 = vmatprep.subr.mxu0 0.0
    %3062 = vmatpush1.msra.mxu0 0.0
    %3063 = vmatprep.subr.mxu0 0.0
    %3064 = vmatpush1.msra.mxu0 0.0
    %3065 = vmatprep.subr.mxu0 0.0
    %3066 = vmatpush1.msra.mxu0 0.0
    %3067 = vmatprep.subr.mxu0 0.0
    %3068 = vmatpush1.msra.mxu0 0.0
    %3069 = vmatprep.subr.mxu0 0.0
    %3070 = vmatpush1.msra.mxu0 0.0
    %3071 = vmatprep.subr.mxu0 0.0
    %3072 = vmatpush1.msra.mxu0 0.0
    %3073 = vmatprep.subr.mxu0 0.0
    %3074 = vmatpush1.msra.mxu0 0.0
    %3075 = vmatprep.subr.mxu0 0.0
    %3076 = vmatpush1.msra.mxu0 0.0
    %3077 = vmatprep.subr.mxu0 0.0
    %3078 = vmatpush1.msra.mxu0 0.0
    %3079 = vmatprep.subr.mxu0 0.0
    %3080 = vmatpush1.msra.mxu0 0.0
    %3081 = vmatprep.subr.mxu0 0.0
    %3082 = vmatpush1.msra.mxu0 0.0
    %3083 = vmatprep.subr.mxu0 0.0
    %3084 = vmatpush1.msra.mxu0 0.0
    %3085 = vmatprep.subr.mxu0 0.0
    %3086 = vmatpush1.msra.mxu0 0.0
    %3087 = vmatprep.subr.mxu0 0.0
    %3088 = vmatpush1.msra.mxu0 0.0
    %3089 = vmatprep.subr.mxu0 0.0
    %3090 = vmatpush1.msra.mxu0 0.0
    %3091 = vmatprep.subr.mxu0 0.0
    %3092 = vmatpush1.msra.mxu0 0.0
    %3093 = vmatprep.subr.mxu0 0.0
    %3094 = vmatpush1.msra.mxu0 0.0
    %3095 = vmatprep.subr.mxu0 0.0
    %3096 = vmatpush1.msra.mxu0 0.0
    %3097 = vmatprep.subr.mxu0 0.0
    %3098 = vmatpush1.msra.mxu0 0.0
    %3099 = vmatprep.subr.mxu0 0.0
    %3100 = vmatpush1.msra.mxu0 0.0
    %3101 = vmatprep.subr.mxu0 0.0
    %3102 = vmatpush1.msra.mxu0 0.0
    %3103 = vmatprep.subr.mxu0 0.0
    %3104 = vmatpush1.msra.mxu0 0.0
    %3105 = vmatprep.subr.mxu0 0.0
    %3106 = vmatpush1.msra.mxu0 0.0
    %3107 = vmatprep.subr.mxu0 0.0
    %3108 = vmatpush1.msra.mxu0 0.0
    %3109 = vmatprep.mubr.f32.mxu0 0.0
    %3110 = vmatmul.mubr.f32.gmra.mrb[0].mxu0 %v3040
    %v3111 = vpop.f32.mrb[0].mxu0
    %v3112 = vadd.f32 0.0, %v3111
    %v3113 = vpop.f32.mrb[0].mxu0
    %3114 = vmatprep.mubr.f32.mxu0 0.0
    %3115 = vmatmul.mubr.f32.gmra.mrb[0].mxu0 %v3043
    %v3116 = vpop.f32.mrb[0].mxu0
    %v3117 = vadd.f32 0.0, %v3116
    %v3118 = vpop.f32.mrb[0].mxu0
    %3119 = vdwg.mxu0
    %v3121 = vsel %vm254, %v2631, 0
    %v3124 = vsel %vm254, %v2704, 0
    %3126 = vmatprep.subr.mxu0 0.0
    %3127 = vmatpush1.msra.mxu0 %v2373
    %3128 = vmatprep.subr.mxu0 0.0
    %3129 = vmatpush1.msra.mxu0 %v2374
    %3130 = vmatprep.subr.mxu0 0.0
    %3131 = vmatpush1.msra.mxu0 0.0
    %3132 = vmatprep.subr.mxu0 0.0
    %3133 = vmatpush1.msra.mxu0 0.0
    %3134 = vmatprep.subr.mxu0 0.0
    %3135 = vmatpush1.msra.mxu0 0.0
    %3136 = vmatprep.subr.mxu0 0.0
    %3137 = vmatpush1.msra.mxu0 0.0
    %3138 = vmatprep.subr.mxu0 0.0
    %3139 = vmatpush1.msra.mxu0 0.0
    %3140 = vmatprep.subr.mxu0 0.0
    %3141 = vmatpush1.msra.mxu0 0.0
    %3142 = vmatprep.subr.mxu0 0.0
    %3143 = vmatpush1.msra.mxu0 0.0
    %3144 = vmatprep.subr.mxu0 0.0
    %3145 = vmatpush1.msra.mxu0 0.0
    %3146 = vmatprep.subr.mxu0 0.0
    %3147 = vmatpush1.msra.mxu0 0.0
    %3148 = vmatprep.subr.mxu0 0.0
    %3149 = vmatpush1.msra.mxu0 0.0
    %3150 = vmatprep.subr.mxu0 0.0
    %3151 = vmatpush1.msra.mxu0 0.0
    %3152 = vmatprep.subr.mxu0 0.0
    %3153 = vmatpush1.msra.mxu0 0.0
    %3154 = vmatprep.subr.mxu0 0.0
    %3155 = vmatpush1.msra.mxu0 0.0
    %3156 = vmatprep.subr.mxu0 0.0
    %3157 = vmatpush1.msra.mxu0 0.0
    %3158 = vmatprep.subr.mxu0 0.0
    %3159 = vmatpush1.msra.mxu0 0.0
    %3160 = vmatprep.subr.mxu0 0.0
    %3161 = vmatpush1.msra.mxu0 0.0
    %3162 = vmatprep.subr.mxu0 0.0
    %3163 = vmatpush1.msra.mxu0 0.0
    %3164 = vmatprep.subr.mxu0 0.0
    %3165 = vmatpush1.msra.mxu0 0.0
    %3166 = vmatprep.subr.mxu0 0.0
    %3167 = vmatpush1.msra.mxu0 0.0
    %3168 = vmatprep.subr.mxu0 0.0
    %3169 = vmatpush1.msra.mxu0 0.0
    %3170 = vmatprep.subr.mxu0 0.0
    %3171 = vmatpush1.msra.mxu0 0.0
    %3172 = vmatprep.subr.mxu0 0.0
    %3173 = vmatpush1.msra.mxu0 0.0
    %3174 = vmatprep.subr.mxu0 0.0
    %3175 = vmatpush1.msra.mxu0 0.0
    %3176 = vmatprep.subr.mxu0 0.0
    %3177 = vmatpush1.msra.mxu0 0.0
    %3178 = vmatprep.subr.mxu0 0.0
    %3179 = vmatpush1.msra.mxu0 0.0
    %3180 = vmatprep.subr.mxu0 0.0
    %3181 = vmatpush1.msra.mxu0 0.0
    %3182 = vmatprep.subr.mxu0 0.0
    %3183 = vmatpush1.msra.mxu0 0.0
    %3184 = vmatprep.subr.mxu0 0.0
    %3185 = vmatpush1.msra.mxu0 0.0
    %3186 = vmatprep.subr.mxu0 0.0
    %3187 = vmatpush1.msra.mxu0 0.0
    %3188 = vmatprep.subr.mxu0 0.0
    %3189 = vmatpush1.msra.mxu0 0.0
    %3190 = vmatprep.mubr.f32.mxu0 0.0
    %3191 = vmatmul.mubr.f32.gmra.mrb[0].mxu0 %v3121
    %v3192 = vpop.f32.mrb[0].mxu0
    %v3193 = vadd.f32 %v3112, %v3192
    %v3194 = vpop.f32.mrb[0].mxu0
    %3195 = vmatprep.mubr.f32.mxu0 0.0
    %3196 = vmatmul.mubr.f32.gmra.mrb[0].mxu0 %v3124
    %v3197 = vpop.f32.mrb[0].mxu0
    %v3198 = vadd.f32 %v3117, %v3197
    %v3199 = vpop.f32.mrb[0].mxu0
    %3200 = vdwg.mxu0
    %3201 = vrot.lane.b32.xlu0 %v2381, 96
    %v3202 = vpop.permute.xlu0 %3201
    %3203 = vrot.lane.b32.xlu0 %v2362, 32
    %v3204 = vpop.permute.xlu0 %3203
    %v3205 = vsel %vm254, %v3202, 0
    %v3207 = vsel %vm254, %v3204, 0
    %3209 = vmatprep.subr.mxu0 0.0
    %3210 = vmatpush1.xpose.msra.mxu0 %v3207
    %3211 = vmatprep.subr.mxu0 0.0
    %3212 = vmatpush1.xpose.msra.mxu0 0.0
    %3213 = vmatprep.subr.mxu0 0.0
    %3214 = vmatpush1.xpose.msra.mxu0 0.0
    %3215 = vmatprep.subr.mxu0 0.0
    %3216 = vmatpush1.xpose.msra.mxu0 0.0
    %3217 = vmatprep.subr.mxu0 0.0
    %3218 = vmatpush1.xpose.msra.mxu0 0.0
    %3219 = vmatprep.subr.mxu0 0.0
    %3220 = vmatpush1.xpose.msra.mxu0 0.0
    %3221 = vmatprep.subr.mxu0 0.0
    %3222 = vmatpush1.xpose.msra.mxu0 0.0
    %3223 = vmatprep.subr.mxu0 0.0
    %3224 = vmatpush1.xpose.msra.mxu0 0.0
    %3225 = vmatprep.subr.mxu0 0.0
    %3226 = vmatpush1.xpose.msra.mxu0 0.0
    %3227 = vmatprep.subr.mxu0 0.0
    %3228 = vmatpush1.xpose.msra.mxu0 0.0
    %3229 = vmatprep.subr.mxu0 0.0
    %3230 = vmatpush1.xpose.msra.mxu0 0.0
    %3231 = vmatprep.subr.mxu0 0.0
    %3232 = vmatpush1.xpose.msra.mxu0 0.0
    %3233 = vmatprep.subr.mxu0 0.0
    %3234 = vmatpush1.xpose.msra.mxu0 0.0
    %3235 = vmatprep.subr.mxu0 0.0
    %3236 = vmatpush1.xpose.msra.mxu0 0.0
    %3237 = vmatprep.subr.mxu0 0.0
    %3238 = vmatpush1.xpose.msra.mxu0 0.0
    %3239 = vmatprep.subr.mxu0 0.0
    %3240 = vmatpush1.xpose.msra.mxu0 0.0
    %3241 = vmatprep.subr.mxu0 0.0
    %3242 = vmatpush1.xpose.msra.mxu0 0.0
    %3243 = vmatprep.subr.mxu0 0.0
    %3244 = vmatpush1.xpose.msra.mxu0 0.0
    %3245 = vmatprep.subr.mxu0 0.0
    %3246 = vmatpush1.xpose.msra.mxu0 0.0
    %3247 = vmatprep.subr.mxu0 0.0
    %3248 = vmatpush1.xpose.msra.mxu0 0.0
    %3249 = vmatprep.subr.mxu0 0.0
    %3250 = vmatpush1.xpose.msra.mxu0 0.0
    %3251 = vmatprep.subr.mxu0 0.0
    %3252 = vmatpush1.xpose.msra.mxu0 0.0
    %3253 = vmatprep.subr.mxu0 0.0
    %3254 = vmatpush1.xpose.msra.mxu0 0.0
    %3255 = vmatprep.subr.mxu0 0.0
    %3256 = vmatpush1.xpose.msra.mxu0 0.0
    %3257 = vmatprep.subr.mxu0 0.0
    %3258 = vmatpush1.xpose.msra.mxu0 0.0
    %3259 = vmatprep.subr.mxu0 0.0
    %3260 = vmatpush1.xpose.msra.mxu0 0.0
    %3261 = vmatprep.subr.mxu0 0.0
    %3262 = vmatpush1.xpose.msra.mxu0 0.0
    %3263 = vmatprep.subr.mxu0 0.0
    %3264 = vmatpush1.xpose.msra.mxu0 0.0
    %3265 = vmatprep.subr.mxu0 0.0
    %3266 = vmatpush1.xpose.msra.mxu0 0.0
    %3267 = vmatprep.subr.mxu0 0.0
    %3268 = vmatpush1.xpose.msra.mxu0 0.0
    %3269 = vmatprep.subr.mxu0 0.0
    %3270 = vmatpush1.xpose.msra.mxu0 0.0
    %3271 = vmatprep.subr.mxu0 0.0
    %3272 = vmatpush1.xpose.msra.mxu0 0.0
    %3273 = vmatprep.mubr.f32.mxu0 0.0
    %3274 = vmatmul.mubr.f32.gmra.mrb[0].mxu0 %v3205
    %v3275 = vpop.f32.mrb[0].mxu0
    %v3276 = vadd.f32 %v83, %v3275
    %v3277 = vpop.f32.mrb[0].mxu0
    %3278 = vdwg.mxu0
    %3279 = vrot.lane.b32.xlu0 %v2382, 96
    %v3280 = vpop.permute.xlu0 %3279
    %3281 = vrot.lane.b32.xlu0 %v2368, 32
    %v3282 = vpop.permute.xlu0 %3281
    %v3283 = vsel %vm254, %v3280, 0
    %v3285 = vsel %vm254, %v3282, 0
    %3287 = vmatprep.subr.mxu0 0.0
    %3288 = vmatpush1.xpose.msra.mxu0 %v3285
    %3289 = vmatprep.subr.mxu0 0.0
    %3290 = vmatpush1.xpose.msra.mxu0 0.0
    %3291 = vmatprep.subr.mxu0 0.0
    %3292 = vmatpush1.xpose.msra.mxu0 0.0
    %3293 = vmatprep.subr.mxu0 0.0
    %3294 = vmatpush1.xpose.msra.mxu0 0.0
    %3295 = vmatprep.subr.mxu0 0.0
    %3296 = vmatpush1.xpose.msra.mxu0 0.0
    %3297 = vmatprep.subr.mxu0 0.0
    %3298 = vmatpush1.xpose.msra.mxu0 0.0
    %3299 = vmatprep.subr.mxu0 0.0
    %3300 = vmatpush1.xpose.msra.mxu0 0.0
    %3301 = vmatprep.subr.mxu0 0.0
    %3302 = vmatpush1.xpose.msra.mxu0 0.0
    %3303 = vmatprep.subr.mxu0 0.0
    %3304 = vmatpush1.xpose.msra.mxu0 0.0
    %3305 = vmatprep.subr.mxu0 0.0
    %3306 = vmatpush1.xpose.msra.mxu0 0.0
    %3307 = vmatprep.subr.mxu0 0.0
    %3308 = vmatpush1.xpose.msra.mxu0 0.0
    %3309 = vmatprep.subr.mxu0 0.0
    %3310 = vmatpush1.xpose.msra.mxu0 0.0
    %3311 = vmatprep.subr.mxu0 0.0
    %3312 = vmatpush1.xpose.msra.mxu0 0.0
    %3313 = vmatprep.subr.mxu0 0.0
    %3314 = vmatpush1.xpose.msra.mxu0 0.0
    %3315 = vmatprep.subr.mxu0 0.0
    %3316 = vmatpush1.xpose.msra.mxu0 0.0
    %3317 = vmatprep.subr.mxu0 0.0
    %3318 = vmatpush1.xpose.msra.mxu0 0.0
    %3319 = vmatprep.subr.mxu0 0.0
    %3320 = vmatpush1.xpose.msra.mxu0 0.0
    %3321 = vmatprep.subr.mxu0 0.0
    %3322 = vmatpush1.xpose.msra.mxu0 0.0
    %3323 = vmatprep.subr.mxu0 0.0
    %3324 = vmatpush1.xpose.msra.mxu0 0.0
    %3325 = vmatprep.subr.mxu0 0.0
    %3326 = vmatpush1.xpose.msra.mxu0 0.0
    %3327 = vmatprep.subr.mxu0 0.0
    %3328 = vmatpush1.xpose.msra.mxu0 0.0
    %3329 = vmatprep.subr.mxu0 0.0
    %3330 = vmatpush1.xpose.msra.mxu0 0.0
    %3331 = vmatprep.subr.mxu0 0.0
    %3332 = vmatpush1.xpose.msra.mxu0 0.0
    %3333 = vmatprep.subr.mxu0 0.0
    %3334 = vmatpush1.xpose.msra.mxu0 0.0
    %3335 = vmatprep.subr.mxu0 0.0
    %3336 = vmatpush1.xpose.msra.mxu0 0.0
    %3337 = vmatprep.subr.mxu0 0.0
    %3338 = vmatpush1.xpose.msra.mxu0 0.0
    %3339 = vmatprep.subr.mxu0 0.0
    %3340 = vmatpush1.xpose.msra.mxu0 0.0
    %3341 = vmatprep.subr.mxu0 0.0
    %3342 = vmatpush1.xpose.msra.mxu0 0.0
    %3343 = vmatprep.subr.mxu0 0.0
    %3344 = vmatpush1.xpose.msra.mxu0 0.0
    %3345 = vmatprep.subr.mxu0 0.0
    %3346 = vmatpush1.xpose.msra.mxu0 0.0
    %3347 = vmatprep.subr.mxu0 0.0
    %3348 = vmatpush1.xpose.msra.mxu0 0.0
    %3349 = vmatprep.subr.mxu0 0.0
    %3350 = vmatpush1.xpose.msra.mxu0 0.0
    %3351 = vmatprep.mubr.f32.mxu0 0.0
    %3352 = vmatmul.mubr.f32.gmra.mrb[0].mxu0 %v3283
    %v3353 = vpop.f32.mrb[0].mxu0
    %v3354 = vadd.f32 %v83, %v3353
    %v3355 = vpop.f32.mrb[0].mxu0
    %3356 = vdwg.mxu0
    %v3357 = vsel %vm408, %v3276, -inf
    %3358 = vmax.xlane.f32.xlu0 %v3357
    %v3359 = vpop.xlane.xlu0 %3358
    %v3360 = vsel %vm408, %v3354, -inf
    %3361 = vmax.xlane.f32.xlu0 %v3360
    %v3362 = vpop.xlane.xlu0 %3361
    %v3363 = vsub.f32 %v3276, %v3359
    %v3364 = vsub.f32 %v3354, %v3362
    %v3365 = vmul.f32 %v3363, 1.442695
    %v3366 = vpow.pop %v3365
    %v3367 = vmul.f32 %v3364, 1.442695
    %v3368 = vpow.pop %v3367
    %v3369 = vsel %vm408, %v3366, 0.0
    %3370 = vadd.xlane.f32.xlu0 %v3369
    %v3371 = vpop.xlane.xlu0 %3370
    %v3372 = vsel %vm408, %v3368, 0.0
    %3373 = vadd.xlane.f32.xlu0 %v3372
    %v3374 = vpop.xlane.xlu0 %3373
    %v3375 = vrcp.pop %v3371
    %v3376 = vrcp.pop %v3374
    %v3377 = vmul.f32 %v3366, %v3375
    %v3378 = vmul.f32 %v3368, %v3376
    %3379 = vrot.lane.b32.xlu0 %v2364, 96
    %v3380 = vpop.permute.xlu0 %3379
    %v3383 = vsel %vm408, %v3377, 0
    %3385 = vmatprep.subr.mxu0 0.0
    %3386 = vmatpush1.msra.mxu0 %v3380
    %3387 = vmatprep.subr.mxu0 0.0
    %3388 = vmatpush1.msra.mxu0 0.0
    %3389 = vmatprep.subr.mxu0 0.0
    %3390 = vmatpush1.msra.mxu0 0.0
    %3391 = vmatprep.subr.mxu0 0.0
    %3392 = vmatpush1.msra.mxu0 0.0
    %3393 = vmatprep.subr.mxu0 0.0
    %3394 = vmatpush1.msra.mxu0 0.0
    %3395 = vmatprep.subr.mxu0 0.0
    %3396 = vmatpush1.msra.mxu0 0.0
    %3397 = vmatprep.subr.mxu0 0.0
    %3398 = vmatpush1.msra.mxu0 0.0
    %3399 = vmatprep.subr.mxu0 0.0
    %3400 = vmatpush1.msra.mxu0 0.0
    %3401 = vmatprep.subr.mxu0 0.0
    %3402 = vmatpush1.msra.mxu0 0.0
    %3403 = vmatprep.subr.mxu0 0.0
    %3404 = vmatpush1.msra.mxu0 0.0
    %3405 = vmatprep.subr.mxu0 0.0
    %3406 = vmatpush1.msra.mxu0 0.0
    %3407 = vmatprep.subr.mxu0 0.0
    %3408 = vmatpush1.msra.mxu0 0.0
    %3409 = vmatprep.subr.mxu0 0.0
    %3410 = vmatpush1.msra.mxu0 0.0
    %3411 = vmatprep.subr.mxu0 0.0
    %3412 = vmatpush1.msra.mxu0 0.0
    %3413 = vmatprep.subr.mxu0 0.0
    %3414 = vmatpush1.msra.mxu0 0.0
    %3415 = vmatprep.subr.mxu0 0.0
    %3416 = vmatpush1.msra.mxu0 0.0
    %3417 = vmatprep.subr.mxu0 0.0
    %3418 = vmatpush1.msra.mxu0 0.0
    %3419 = vmatprep.subr.mxu0 0.0
    %3420 = vmatpush1.msra.mxu0 0.0
    %3421 = vmatprep.subr.mxu0 0.0
    %3422 = vmatpush1.msra.mxu0 0.0
    %3423 = vmatprep.subr.mxu0 0.0
    %3424 = vmatpush1.msra.mxu0 0.0
    %3425 = vmatprep.subr.mxu0 0.0
    %3426 = vmatpush1.msra.mxu0 0.0
    %3427 = vmatprep.subr.mxu0 0.0
    %3428 = vmatpush1.msra.mxu0 0.0
    %3429 = vmatprep.subr.mxu0 0.0
    %3430 = vmatpush1.msra.mxu0 0.0
    %3431 = vmatprep.subr.mxu0 0.0
    %3432 = vmatpush1.msra.mxu0 0.0
    %3433 = vmatprep.subr.mxu0 0.0
    %3434 = vmatpush1.msra.mxu0 0.0
    %3435 = vmatprep.subr.mxu0 0.0
    %3436 = vmatpush1.msra.mxu0 0.0
    %3437 = vmatprep.subr.mxu0 0.0
    %3438 = vmatpush1.msra.mxu0 0.0
    %3439 = vmatprep.subr.mxu0 0.0
    %3440 = vmatpush1.msra.mxu0 0.0
    %3441 = vmatprep.subr.mxu0 0.0
    %3442 = vmatpush1.msra.mxu0 0.0
    %3443 = vmatprep.subr.mxu0 0.0
    %3444 = vmatpush1.msra.mxu0 0.0
    %3445 = vmatprep.subr.mxu0 0.0
    %3446 = vmatpush1.msra.mxu0 0.0
    %3447 = vmatprep.subr.mxu0 0.0
    %3448 = vmatpush1.msra.mxu0 0.0
    %3449 = vmatprep.mubr.f32.mxu0 0.0
    %3450 = vmatmul.mubr.f32.gmra.mrb[0].mxu0 %v3383
    %v3451 = vpop.f32.mrb[0].mxu0
    %v3452 = vadd.f32 0.0, %v3451
    %v3453 = vpop.f32.mrb[0].mxu0
    %3454 = vdwg.mxu0
    %3455 = vrot.lane.b32.xlu0 %v2370, 96
    %v3456 = vpop.permute.xlu0 %3455
    %v3459 = vsel %vm408, %v3378, 0
    %3461 = vmatprep.subr.mxu0 0.0
    %3462 = vmatpush1.msra.mxu0 %v3456
    %3463 = vmatprep.subr.mxu0 0.0
    %3464 = vmatpush1.msra.mxu0 0.0
    %3465 = vmatprep.subr.mxu0 0.0
    %3466 = vmatpush1.msra.mxu0 0.0
    %3467 = vmatprep.subr.mxu0 0.0
    %3468 = vmatpush1.msra.mxu0 0.0
    %3469 = vmatprep.subr.mxu0 0.0
    %3470 = vmatpush1.msra.mxu0 0.0
    %3471 = vmatprep.subr.mxu0 0.0
    %3472 = vmatpush1.msra.mxu0 0.0
    %3473 = vmatprep.subr.mxu0 0.0
    %3474 = vmatpush1.msra.mxu0 0.0
    %3475 = vmatprep.subr.mxu0 0.0
    %3476 = vmatpush1.msra.mxu0 0.0
    %3477 = vmatprep.subr.mxu0 0.0
    %3478 = vmatpush1.msra.mxu0 0.0
    %3479 = vmatprep.subr.mxu0 0.0
    %3480 = vmatpush1.msra.mxu0 0.0
    %3481 = vmatprep.subr.mxu0 0.0
    %3482 = vmatpush1.msra.mxu0 0.0
    %3483 = vmatprep.subr.mxu0 0.0
    %3484 = vmatpush1.msra.mxu0 0.0
    %3485 = vmatprep.subr.mxu0 0.0
    %3486 = vmatpush1.msra.mxu0 0.0
    %3487 = vmatprep.subr.mxu0 0.0
    %3488 = vmatpush1.msra.mxu0 0.0
    %3489 = vmatprep.subr.mxu0 0.0
    %3490 = vmatpush1.msra.mxu0 0.0
    %3491 = vmatprep.subr.mxu0 0.0
    %3492 = vmatpush1.msra.mxu0 0.0
    %3493 = vmatprep.subr.mxu0 0.0
    %3494 = vmatpush1.msra.mxu0 0.0
    %3495 = vmatprep.subr.mxu0 0.0
    %3496 = vmatpush1.msra.mxu0 0.0
    %3497 = vmatprep.subr.mxu0 0.0
    %3498 = vmatpush1.msra.mxu0 0.0
    %3499 = vmatprep.subr.mxu0 0.0
    %3500 = vmatpush1.msra.mxu0 0.0
    %3501 = vmatprep.subr.mxu0 0.0
    %3502 = vmatpush1.msra.mxu0 0.0
    %3503 = vmatprep.subr.mxu0 0.0
    %3504 = vmatpush1.msra.mxu0 0.0
    %3505 = vmatprep.subr.mxu0 0.0
    %3506 = vmatpush1.msra.mxu0 0.0
    %3507 = vmatprep.subr.mxu0 0.0
    %3508 = vmatpush1.msra.mxu0 0.0
    %3509 = vmatprep.subr.mxu0 0.0
    %3510 = vmatpush1.msra.mxu0 0.0
    %3511 = vmatprep.subr.mxu0 0.0
    %3512 = vmatpush1.msra.mxu0 0.0
    %3513 = vmatprep.subr.mxu0 0.0
    %3514 = vmatpush1.msra.mxu0 0.0
    %3515 = vmatprep.subr.mxu0 0.0
    %3516 = vmatpush1.msra.mxu0 0.0
    %3517 = vmatprep.subr.mxu0 0.0
    %3518 = vmatpush1.msra.mxu0 0.0
    %3519 = vmatprep.subr.mxu0 0.0
    %3520 = vmatpush1.msra.mxu0 0.0
    %3521 = vmatprep.subr.mxu0 0.0
    %3522 = vmatpush1.msra.mxu0 0.0
    %3523 = vmatprep.subr.mxu0 0.0
    %3524 = vmatpush1.msra.mxu0 0.0
    %3525 = vmatprep.mubr.f32.mxu0 0.0
    %3526 = vmatmul.mubr.f32.gmra.mrb[0].mxu0 %v3459
    %v3527 = vpop.f32.mrb[0].mxu0
    %v3528 = vadd.f32 0.0, %v3527
    %v3529 = vpop.f32.mrb[0].mxu0
    %3530 = vdwg.mxu0
    %v3532 = vsel %vm254, %v3452, 0
    %v3535 = vsel %vm254, %v3528, 0
    %3537 = vmatprep.subr.mxu0 0.0
    %3538 = vmatpush1.msra.mxu0 %v2377
    %3539 = vmatprep.subr.mxu0 0.0
    %3540 = vmatpush1.msra.mxu0 %v2378
    %3541 = vmatprep.subr.mxu0 0.0
    %3542 = vmatpush1.msra.mxu0 0.0
    %3543 = vmatprep.subr.mxu0 0.0
    %3544 = vmatpush1.msra.mxu0 0.0
    %3545 = vmatprep.subr.mxu0 0.0
    %3546 = vmatpush1.msra.mxu0 0.0
    %3547 = vmatprep.subr.mxu0 0.0
    %3548 = vmatpush1.msra.mxu0 0.0
    %3549 = vmatprep.subr.mxu0 0.0
    %3550 = vmatpush1.msra.mxu0 0.0
    %3551 = vmatprep.subr.mxu0 0.0
    %3552 = vmatpush1.msra.mxu0 0.0
    %3553 = vmatprep.subr.mxu0 0.0
    %3554 = vmatpush1.msra.mxu0 0.0
    %3555 = vmatprep.subr.mxu0 0.0
    %3556 = vmatpush1.msra.mxu0 0.0
    %3557 = vmatprep.subr.mxu0 0.0
    %3558 = vmatpush1.msra.mxu0 0.0
    %3559 = vmatprep.subr.mxu0 0.0
    %3560 = vmatpush1.msra.mxu0 0.0
    %3561 = vmatprep.subr.mxu0 0.0
    %3562 = vmatpush1.msra.mxu0 0.0
    %3563 = vmatprep.subr.mxu0 0.0
    %3564 = vmatpush1.msra.mxu0 0.0
    %3565 = vmatprep.subr.mxu0 0.0
    %3566 = vmatpush1.msra.mxu0 0.0
    %3567 = vmatprep.subr.mxu0 0.0
    %3568 = vmatpush1.msra.mxu0 0.0
    %3569 = vmatprep.subr.mxu0 0.0
    %3570 = vmatpush1.msra.mxu0 0.0
    %3571 = vmatprep.subr.mxu0 0.0
    %3572 = vmatpush1.msra.mxu0 0.0
    %3573 = vmatprep.subr.mxu0 0.0
    %3574 = vmatpush1.msra.mxu0 0.0
    %3575 = vmatprep.subr.mxu0 0.0
    %3576 = vmatpush1.msra.mxu0 0.0
    %3577 = vmatprep.subr.mxu0 0.0
    %3578 = vmatpush1.msra.mxu0 0.0
    %3579 = vmatprep.subr.mxu0 0.0
    %3580 = vmatpush1.msra.mxu0 0.0
    %3581 = vmatprep.subr.mxu0 0.0
    %3582 = vmatpush1.msra.mxu0 0.0
    %3583 = vmatprep.subr.mxu0 0.0
    %3584 = vmatpush1.msra.mxu0 0.0
    %3585 = vmatprep.subr.mxu0 0.0
    %3586 = vmatpush1.msra.mxu0 0.0
    %3587 = vmatprep.subr.mxu0 0.0
    %3588 = vmatpush1.msra.mxu0 0.0
    %3589 = vmatprep.subr.mxu0 0.0
    %3590 = vmatpush1.msra.mxu0 0.0
    %3591 = vmatprep.subr.mxu0 0.0
    %3592 = vmatpush1.msra.mxu0 0.0
    %3593 = vmatprep.subr.mxu0 0.0
    %3594 = vmatpush1.msra.mxu0 0.0
    %3595 = vmatprep.subr.mxu0 0.0
    %3596 = vmatpush1.msra.mxu0 0.0
    %3597 = vmatprep.subr.mxu0 0.0
    %3598 = vmatpush1.msra.mxu0 0.0
    %3599 = vmatprep.subr.mxu0 0.0
    %3600 = vmatpush1.msra.mxu0 0.0
    %3601 = vmatprep.mubr.f32.mxu0 0.0
    %3602 = vmatmul.mubr.f32.gmra.mrb[0].mxu0 %v3532
    %v3603 = vpop.f32.mrb[0].mxu0
    %v3604 = vadd.f32 0.0, %v3603
    %v3605 = vpop.f32.mrb[0].mxu0
    %3606 = vmatprep.mubr.f32.mxu0 0.0
    %3607 = vmatmul.mubr.f32.gmra.mrb[0].mxu0 %v3535
    %v3608 = vpop.f32.mrb[0].mxu0
    %v3609 = vadd.f32 0.0, %v3608
    %v3610 = vpop.f32.mrb[0].mxu0
    %3611 = vdwg.mxu0
    %v3612 = vadd.f32 %v3193, %v3604
    %v3613 = vadd.f32 %v3198, %v3609
    %3614 = vrot.lane.b32.xlu0 %v2381, 80
    %v3615 = vpop.permute.xlu0 %3614
    %3616 = vrot.lane.b32.xlu0 %v2362, 16
    %v3617 = vpop.permute.xlu0 %3616
    %v3618 = vsel %vm254, %v3615, 0
    %v3620 = vsel %vm254, %v3617, 0
    %3622 = vmatprep.subr.mxu0 0.0
    %3623 = vmatpush1.xpose.msra.mxu0 %v3620
    %3624 = vmatprep.subr.mxu0 0.0
    %3625 = vmatpush1.xpose.msra.mxu0 0.0
    %3626 = vmatprep.subr.mxu0 0.0
    %3627 = vmatpush1.xpose.msra.mxu0 0.0
    %3628 = vmatprep.subr.mxu0 0.0
    %3629 = vmatpush1.xpose.msra.mxu0 0.0
    %3630 = vmatprep.subr.mxu0 0.0
    %3631 = vmatpush1.xpose.msra.mxu0 0.0
    %3632 = vmatprep.subr.mxu0 0.0
    %3633 = vmatpush1.xpose.msra.mxu0 0.0
    %3634 = vmatprep.subr.mxu0 0.0
    %3635 = vmatpush1.xpose.msra.mxu0 0.0
    %3636 = vmatprep.subr.mxu0 0.0
    %3637 = vmatpush1.xpose.msra.mxu0 0.0
    %3638 = vmatprep.subr.mxu0 0.0
    %3639 = vmatpush1.xpose.msra.mxu0 0.0
    %3640 = vmatprep.subr.mxu0 0.0
    %3641 = vmatpush1.xpose.msra.mxu0 0.0
    %3642 = vmatprep.subr.mxu0 0.0
    %3643 = vmatpush1.xpose.msra.mxu0 0.0
    %3644 = vmatprep.subr.mxu0 0.0
    %3645 = vmatpush1.xpose.msra.mxu0 0.0
    %3646 = vmatprep.subr.mxu0 0.0
    %3647 = vmatpush1.xpose.msra.mxu0 0.0
    %3648 = vmatprep.subr.mxu0 0.0
    %3649 = vmatpush1.xpose.msra.mxu0 0.0
    %3650 = vmatprep.subr.mxu0 0.0
    %3651 = vmatpush1.xpose.msra.mxu0 0.0
    %3652 = vmatprep.subr.mxu0 0.0
    %3653 = vmatpush1.xpose.msra.mxu0 0.0
    %3654 = vmatprep.subr.mxu0 0.0
    %3655 = vmatpush1.xpose.msra.mxu0 0.0
    %3656 = vmatprep.subr.mxu0 0.0
    %3657 = vmatpush1.xpose.msra.mxu0 0.0
    %3658 = vmatprep.subr.mxu0 0.0
    %3659 = vmatpush1.xpose.msra.mxu0 0.0
    %3660 = vmatprep.subr.mxu0 0.0
    %3661 = vmatpush1.xpose.msra.mxu0 0.0
    %3662 = vmatprep.subr.mxu0 0.0
    %3663 = vmatpush1.xpose.msra.mxu0 0.0
    %3664 = vmatprep.subr.mxu0 0.0
    %3665 = vmatpush1.xpose.msra.mxu0 0.0
    %3666 = vmatprep.subr.mxu0 0.0
    %3667 = vmatpush1.xpose.msra.mxu0 0.0
    %3668 = vmatprep.subr.mxu0 0.0
    %3669 = vmatpush1.xpose.msra.mxu0 0.0
    %3670 = vmatprep.subr.mxu0 0.0
    %3671 = vmatpush1.xpose.msra.mxu0 0.0
    %3672 = vmatprep.subr.mxu0 0.0
    %3673 = vmatpush1.xpose.msra.mxu0 0.0
    %3674 = vmatprep.subr.mxu0 0.0
    %3675 = vmatpush1.xpose.msra.mxu0 0.0
    %3676 = vmatprep.subr.mxu0 0.0
    %3677 = vmatpush1.xpose.msra.mxu0 0.0
    %3678 = vmatprep.subr.mxu0 0.0
    %3679 = vmatpush1.xpose.msra.mxu0 0.0
    %3680 = vmatprep.subr.mxu0 0.0
    %3681 = vmatpush1.xpose.msra.mxu0 0.0
    %3682 = vmatprep.subr.mxu0 0.0
    %3683 = vmatpush1.xpose.msra.mxu0 0.0
    %3684 = vmatprep.subr.mxu0 0.0
    %3685 = vmatpush1.xpose.msra.mxu0 0.0
    %3686 = vmatprep.mubr.f32.mxu0 0.0
    %3687 = vmatmul.mubr.f32.gmra.mrb[0].mxu0 %v3618
    %v3688 = vpop.f32.mrb[0].mxu0
    %v3689 = vadd.f32 %v83, %v3688
    %v3690 = vpop.f32.mrb[0].mxu0
    %3691 = vdwg.mxu0
    %3692 = vrot.lane.b32.xlu0 %v2382, 80
    %v3693 = vpop.permute.xlu0 %3692
    %3694 = vrot.lane.b32.xlu0 %v2368, 16
    %v3695 = vpop.permute.xlu0 %3694
    %v3696 = vsel %vm254, %v3693, 0
    %v3698 = vsel %vm254, %v3695, 0
    %3700 = vmatprep.subr.mxu0 0.0
    %3701 = vmatpush1.xpose.msra.mxu0 %v3698
    %3702 = vmatprep.subr.mxu0 0.0
    %3703 = vmatpush1.xpose.msra.mxu0 0.0
    %3704 = vmatprep.subr.mxu0 0.0
    %3705 = vmatpush1.xpose.msra.mxu0 0.0
    %3706 = vmatprep.subr.mxu0 0.0
    %3707 = vmatpush1.xpose.msra.mxu0 0.0
    %3708 = vmatprep.subr.mxu0 0.0
    %3709 = vmatpush1.xpose.msra.mxu0 0.0
    %3710 = vmatprep.subr.mxu0 0.0
    %3711 = vmatpush1.xpose.msra.mxu0 0.0
    %3712 = vmatprep.subr.mxu0 0.0
    %3713 = vmatpush1.xpose.msra.mxu0 0.0
    %3714 = vmatprep.subr.mxu0 0.0
    %3715 = vmatpush1.xpose.msra.mxu0 0.0
    %3716 = vmatprep.subr.mxu0 0.0
    %3717 = vmatpush1.xpose.msra.mxu0 0.0
    %3718 = vmatprep.subr.mxu0 0.0
    %3719 = vmatpush1.xpose.msra.mxu0 0.0
    %3720 = vmatprep.subr.mxu0 0.0
    %3721 = vmatpush1.xpose.msra.mxu0 0.0
    %3722 = vmatprep.subr.mxu0 0.0
    %3723 = vmatpush1.xpose.msra.mxu0 0.0
    %3724 = vmatprep.subr.mxu0 0.0
    %3725 = vmatpush1.xpose.msra.mxu0 0.0
    %3726 = vmatprep.subr.mxu0 0.0
    %3727 = vmatpush1.xpose.msra.mxu0 0.0
    %3728 = vmatprep.subr.mxu0 0.0
    %3729 = vmatpush1.xpose.msra.mxu0 0.0
    %3730 = vmatprep.subr.mxu0 0.0
    %3731 = vmatpush1.xpose.msra.mxu0 0.0
    %3732 = vmatprep.subr.mxu0 0.0
    %3733 = vmatpush1.xpose.msra.mxu0 0.0
    %3734 = vmatprep.subr.mxu0 0.0
    %3735 = vmatpush1.xpose.msra.mxu0 0.0
    %3736 = vmatprep.subr.mxu0 0.0
    %3737 = vmatpush1.xpose.msra.mxu0 0.0
    %3738 = vmatprep.subr.mxu0 0.0
    %3739 = vmatpush1.xpose.msra.mxu0 0.0
    %3740 = vmatprep.subr.mxu0 0.0
    %3741 = vmatpush1.xpose.msra.mxu0 0.0
    %3742 = vmatprep.subr.mxu0 0.0
    %3743 = vmatpush1.xpose.msra.mxu0 0.0
    %3744 = vmatprep.subr.mxu0 0.0
    %3745 = vmatpush1.xpose.msra.mxu0 0.0
    %3746 = vmatprep.subr.mxu0 0.0
    %3747 = vmatpush1.xpose.msra.mxu0 0.0
    %3748 = vmatprep.subr.mxu0 0.0
    %3749 = vmatpush1.xpose.msra.mxu0 0.0
    %3750 = vmatprep.subr.mxu0 0.0
    %3751 = vmatpush1.xpose.msra.mxu0 0.0
    %3752 = vmatprep.subr.mxu0 0.0
    %3753 = vmatpush1.xpose.msra.mxu0 0.0
    %3754 = vmatprep.subr.mxu0 0.0
    %3755 = vmatpush1.xpose.msra.mxu0 0.0
    %3756 = vmatprep.subr.mxu0 0.0
    %3757 = vmatpush1.xpose.msra.mxu0 0.0
    %3758 = vmatprep.subr.mxu0 0.0
    %3759 = vmatpush1.xpose.msra.mxu0 0.0
    %3760 = vmatprep.subr.mxu0 0.0
    %3761 = vmatpush1.xpose.msra.mxu0 0.0
    %3762 = vmatprep.subr.mxu0 0.0
    %3763 = vmatpush1.xpose.msra.mxu0 0.0
    %3764 = vmatprep.mubr.f32.mxu0 0.0
    %3765 = vmatmul.mubr.f32.gmra.mrb[0].mxu0 %v3696
    %v3766 = vpop.f32.mrb[0].mxu0
    %v3767 = vadd.f32 %v83, %v3766
    %v3768 = vpop.f32.mrb[0].mxu0
    %3769 = vdwg.mxu0
    %v3770 = vsel %vm408, %v3689, -inf
    %3771 = vmax.xlane.f32.xlu0 %v3770
    %v3772 = vpop.xlane.xlu0 %3771
    %v3773 = vsel %vm408, %v3767, -inf
    %3774 = vmax.xlane.f32.xlu0 %v3773
    %v3775 = vpop.xlane.xlu0 %3774
    %v3776 = vsub.f32 %v3689, %v3772
    %v3777 = vsub.f32 %v3767, %v3775
    %v3778 = vmul.f32 %v3776, 1.442695
    %v3779 = vpow.pop %v3778
    %v3780 = vmul.f32 %v3777, 1.442695
    %v3781 = vpow.pop %v3780
    %v3782 = vsel %vm408, %v3779, 0.0
    %3783 = vadd.xlane.f32.xlu0 %v3782
    %v3784 = vpop.xlane.xlu0 %3783
    %v3785 = vsel %vm408, %v3781, 0.0
    %3786 = vadd.xlane.f32.xlu0 %v3785
    %v3787 = vpop.xlane.xlu0 %3786
    %v3788 = vrcp.pop %v3784
    %v3789 = vrcp.pop %v3787
    %v3790 = vmul.f32 %v3779, %v3788
    %v3791 = vmul.f32 %v3781, %v3789
    %3792 = vrot.lane.b32.xlu0 %v2364, 80
    %v3793 = vpop.permute.xlu0 %3792
    %v3796 = vsel %vm408, %v3790, 0
    %3798 = vmatprep.subr.mxu0 0.0
    %3799 = vmatpush1.msra.mxu0 %v3793
    %3800 = vmatprep.subr.mxu0 0.0
    %3801 = vmatpush1.msra.mxu0 0.0
    %3802 = vmatprep.subr.mxu0 0.0
    %3803 = vmatpush1.msra.mxu0 0.0
    %3804 = vmatprep.subr.mxu0 0.0
    %3805 = vmatpush1.msra.mxu0 0.0
    %3806 = vmatprep.subr.mxu0 0.0
    %3807 = vmatpush1.msra.mxu0 0.0
    %3808 = vmatprep.subr.mxu0 0.0
    %3809 = vmatpush1.msra.mxu0 0.0
    %3810 = vmatprep.subr.mxu0 0.0
    %3811 = vmatpush1.msra.mxu0 0.0
    %3812 = vmatprep.subr.mxu0 0.0
    %3813 = vmatpush1.msra.mxu0 0.0
    %3814 = vmatprep.subr.mxu0 0.0
    %3815 = vmatpush1.msra.mxu0 0.0
    %3816 = vmatprep.subr.mxu0 0.0
    %3817 = vmatpush1.msra.mxu0 0.0
    %3818 = vmatprep.subr.mxu0 0.0
    %3819 = vmatpush1.msra.mxu0 0.0
    %3820 = vmatprep.subr.mxu0 0.0
    %3821 = vmatpush1.msra.mxu0 0.0
    %3822 = vmatprep.subr.mxu0 0.0
    %3823 = vmatpush1.msra.mxu0 0.0
    %3824 = vmatprep.subr.mxu0 0.0
    %3825 = vmatpush1.msra.mxu0 0.0
    %3826 = vmatprep.subr.mxu0 0.0
    %3827 = vmatpush1.msra.mxu0 0.0
    %3828 = vmatprep.subr.mxu0 0.0
    %3829 = vmatpush1.msra.mxu0 0.0
    %3830 = vmatprep.subr.mxu0 0.0
    %3831 = vmatpush1.msra.mxu0 0.0
    %3832 = vmatprep.subr.mxu0 0.0
    %3833 = vmatpush1.msra.mxu0 0.0
    %3834 = vmatprep.subr.mxu0 0.0
    %3835 = vmatpush1.msra.mxu0 0.0
    %3836 = vmatprep.subr.mxu0 0.0
    %3837 = vmatpush1.msra.mxu0 0.0
    %3838 = vmatprep.subr.mxu0 0.0
    %3839 = vmatpush1.msra.mxu0 0.0
    %3840 = vmatprep.subr.mxu0 0.0
    %3841 = vmatpush1.msra.mxu0 0.0
    %3842 = vmatprep.subr.mxu0 0.0
    %3843 = vmatpush1.msra.mxu0 0.0
    %3844 = vmatprep.subr.mxu0 0.0
    %3845 = vmatpush1.msra.mxu0 0.0
    %3846 = vmatprep.subr.mxu0 0.0
    %3847 = vmatpush1.msra.mxu0 0.0
    %3848 = vmatprep.subr.mxu0 0.0
    %3849 = vmatpush1.msra.mxu0 0.0
    %3850 = vmatprep.subr.mxu0 0.0
    %3851 = vmatpush1.msra.mxu0 0.0
    %3852 = vmatprep.subr.mxu0 0.0
    %3853 = vmatpush1.msra.mxu0 0.0
    %3854 = vmatprep.subr.mxu0 0.0
    %3855 = vmatpush1.msra.mxu0 0.0
    %3856 = vmatprep.subr.mxu0 0.0
    %3857 = vmatpush1.msra.mxu0 0.0
    %3858 = vmatprep.subr.mxu0 0.0
    %3859 = vmatpush1.msra.mxu0 0.0
    %3860 = vmatprep.subr.mxu0 0.0
    %3861 = vmatpush1.msra.mxu0 0.0
    %3862 = vmatprep.mubr.f32.mxu0 0.0
    %3863 = vmatmul.mubr.f32.gmra.mrb[0].mxu0 %v3796
    %v3864 = vpop.f32.mrb[0].mxu0
    %v3865 = vadd.f32 0.0, %v3864
    %v3866 = vpop.f32.mrb[0].mxu0
    %3867 = vdwg.mxu0
    %3868 = vrot.lane.b32.xlu0 %v2370, 80
    %v3869 = vpop.permute.xlu0 %3868
    %v3872 = vsel %vm408, %v3791, 0
    %3874 = vmatprep.subr.mxu0 0.0
    %3875 = vmatpush1.msra.mxu0 %v3869
    %3876 = vmatprep.subr.mxu0 0.0
    %3877 = vmatpush1.msra.mxu0 0.0
    %3878 = vmatprep.subr.mxu0 0.0
    %3879 = vmatpush1.msra.mxu0 0.0
    %3880 = vmatprep.subr.mxu0 0.0
    %3881 = vmatpush1.msra.mxu0 0.0
    %3882 = vmatprep.subr.mxu0 0.0
    %3883 = vmatpush1.msra.mxu0 0.0
    %3884 = vmatprep.subr.mxu0 0.0
    %3885 = vmatpush1.msra.mxu0 0.0
    %3886 = vmatprep.subr.mxu0 0.0
    %3887 = vmatpush1.msra.mxu0 0.0
    %3888 = vmatprep.subr.mxu0 0.0
    %3889 = vmatpush1.msra.mxu0 0.0
    %3890 = vmatprep.subr.mxu0 0.0
    %3891 = vmatpush1.msra.mxu0 0.0
    %3892 = vmatprep.subr.mxu0 0.0
    %3893 = vmatpush1.msra.mxu0 0.0
    %3894 = vmatprep.subr.mxu0 0.0
    %3895 = vmatpush1.msra.mxu0 0.0
    %3896 = vmatprep.subr.mxu0 0.0
    %3897 = vmatpush1.msra.mxu0 0.0
    %3898 = vmatprep.subr.mxu0 0.0
    %3899 = vmatpush1.msra.mxu0 0.0
    %3900 = vmatprep.subr.mxu0 0.0
    %3901 = vmatpush1.msra.mxu0 0.0
    %3902 = vmatprep.subr.mxu0 0.0
    %3903 = vmatpush1.msra.mxu0 0.0
    %3904 = vmatprep.subr.mxu0 0.0
    %3905 = vmatpush1.msra.mxu0 0.0
    %3906 = vmatprep.subr.mxu0 0.0
    %3907 = vmatpush1.msra.mxu0 0.0
    %3908 = vmatprep.subr.mxu0 0.0
    %3909 = vmatpush1.msra.mxu0 0.0
    %3910 = vmatprep.subr.mxu0 0.0
    %3911 = vmatpush1.msra.mxu0 0.0
    %3912 = vmatprep.subr.mxu0 0.0
    %3913 = vmatpush1.msra.mxu0 0.0
    %3914 = vmatprep.subr.mxu0 0.0
    %3915 = vmatpush1.msra.mxu0 0.0
    %3916 = vmatprep.subr.mxu0 0.0
    %3917 = vmatpush1.msra.mxu0 0.0
    %3918 = vmatprep.subr.mxu0 0.0
    %3919 = vmatpush1.msra.mxu0 0.0
    %3920 = vmatprep.subr.mxu0 0.0
    %3921 = vmatpush1.msra.mxu0 0.0
    %3922 = vmatprep.subr.mxu0 0.0
    %3923 = vmatpush1.msra.mxu0 0.0
    %3924 = vmatprep.subr.mxu0 0.0
    %3925 = vmatpush1.msra.mxu0 0.0
    %3926 = vmatprep.subr.mxu0 0.0
    %3927 = vmatpush1.msra.mxu0 0.0
    %3928 = vmatprep.subr.mxu0 0.0
    %3929 = vmatpush1.msra.mxu0 0.0
    %3930 = vmatprep.subr.mxu0 0.0
    %3931 = vmatpush1.msra.mxu0 0.0
    %3932 = vmatprep.subr.mxu0 0.0
    %3933 = vmatpush1.msra.mxu0 0.0
    %3934 = vmatprep.subr.mxu0 0.0
    %3935 = vmatpush1.msra.mxu0 0.0
    %3936 = vmatprep.subr.mxu0 0.0
    %3937 = vmatpush1.msra.mxu0 0.0
    %3938 = vmatprep.mubr.f32.mxu0 0.0
    %3939 = vmatmul.mubr.f32.gmra.mrb[0].mxu0 %v3872
    %v3940 = vpop.f32.mrb[0].mxu0
    %v3941 = vadd.f32 0.0, %v3940
    %v3942 = vpop.f32.mrb[0].mxu0
    %3943 = vdwg.mxu0
    %v3945 = vsel %vm254, %v3865, 0
    %v3948 = vsel %vm254, %v3941, 0
    %3950 = vmatprep.subr.mxu0 0.0
    %3951 = vmatpush1.msra.mxu0 %v2379
    %3952 = vmatprep.subr.mxu0 0.0
    %3953 = vmatpush1.msra.mxu0 %v2380
    %3954 = vmatprep.subr.mxu0 0.0
    %3955 = vmatpush1.msra.mxu0 0.0
    %3956 = vmatprep.subr.mxu0 0.0
    %3957 = vmatpush1.msra.mxu0 0.0
    %3958 = vmatprep.subr.mxu0 0.0
    %3959 = vmatpush1.msra.mxu0 0.0
    %3960 = vmatprep.subr.mxu0 0.0
    %3961 = vmatpush1.msra.mxu0 0.0
    %3962 = vmatprep.subr.mxu0 0.0
    %3963 = vmatpush1.msra.mxu0 0.0
    %3964 = vmatprep.subr.mxu0 0.0
    %3965 = vmatpush1.msra.mxu0 0.0
    %3966 = vmatprep.subr.mxu0 0.0
    %3967 = vmatpush1.msra.mxu0 0.0
    %3968 = vmatprep.subr.mxu0 0.0
    %3969 = vmatpush1.msra.mxu0 0.0
    %3970 = vmatprep.subr.mxu0 0.0
    %3971 = vmatpush1.msra.mxu0 0.0
    %3972 = vmatprep.subr.mxu0 0.0
    %3973 = vmatpush1.msra.mxu0 0.0
    %3974 = vmatprep.subr.mxu0 0.0
    %3975 = vmatpush1.msra.mxu0 0.0
    %3976 = vmatprep.subr.mxu0 0.0
    %3977 = vmatpush1.msra.mxu0 0.0
    %3978 = vmatprep.subr.mxu0 0.0
    %3979 = vmatpush1.msra.mxu0 0.0
    %3980 = vmatprep.subr.mxu0 0.0
    %3981 = vmatpush1.msra.mxu0 0.0
    %3982 = vmatprep.subr.mxu0 0.0
    %3983 = vmatpush1.msra.mxu0 0.0
    %3984 = vmatprep.subr.mxu0 0.0
    %3985 = vmatpush1.msra.mxu0 0.0
    %3986 = vmatprep.subr.mxu0 0.0
    %3987 = vmatpush1.msra.mxu0 0.0
    %3988 = vmatprep.subr.mxu0 0.0
    %3989 = vmatpush1.msra.mxu0 0.0
    %3990 = vmatprep.subr.mxu0 0.0
    %3991 = vmatpush1.msra.mxu0 0.0
    %3992 = vmatprep.subr.mxu0 0.0
    %3993 = vmatpush1.msra.mxu0 0.0
    %3994 = vmatprep.subr.mxu0 0.0
    %3995 = vmatpush1.msra.mxu0 0.0
    %3996 = vmatprep.subr.mxu0 0.0
    %3997 = vmatpush1.msra.mxu0 0.0
    %3998 = vmatprep.subr.mxu0 0.0
    %3999 = vmatpush1.msra.mxu0 0.0
    %4000 = vmatprep.subr.mxu0 0.0
    %4001 = vmatpush1.msra.mxu0 0.0
    %4002 = vmatprep.subr.mxu0 0.0
    %4003 = vmatpush1.msra.mxu0 0.0
    %4004 = vmatprep.subr.mxu0 0.0
    %4005 = vmatpush1.msra.mxu0 0.0
    %4006 = vmatprep.subr.mxu0 0.0
    %4007 = vmatpush1.msra.mxu0 0.0
    %4008 = vmatprep.subr.mxu0 0.0
    %4009 = vmatpush1.msra.mxu0 0.0
    %4010 = vmatprep.subr.mxu0 0.0
    %4011 = vmatpush1.msra.mxu0 0.0
    %4012 = vmatprep.subr.mxu0 0.0
    %4013 = vmatpush1.msra.mxu0 0.0
    %4014 = vmatprep.mubr.f32.mxu0 0.0
    %4015 = vmatmul.mubr.f32.gmra.mrb[0].mxu0 %v3945
    %v4016 = vpop.f32.mrb[0].mxu0
    %v4017 = vadd.f32 0.0, %v4016
    %v4018 = vpop.f32.mrb[0].mxu0
    %4019 = vmatprep.mubr.f32.mxu0 0.0
    %4020 = vmatmul.mubr.f32.gmra.mrb[0].mxu0 %v3948
    %v4021 = vpop.f32.mrb[0].mxu0
    %v4022 = vadd.f32 0.0, %v4021
    %v4023 = vpop.f32.mrb[0].mxu0
    %4024 = vdwg.mxu0
    %v4025 = vadd.f32 %v3612, %v4017
    %v4026 = vadd.f32 %v3613, %v4022
    %v4027 = vadd.f32 %v2211, %v4025
    %v4028 = vadd.f32 %v2212, %v4026
    %s4029 = scalar_lea.vmem %s8, 1
    %v4030 = vld [vmem:[%s4029] sm:$0x1]
    %v4032 = vlaneseq
    %v4033 = vshrl.u32 %v4032, 7
    %v4034 = vsub.s32 0, %v4033
    %v4035 = vrot.slane %v4030, %v4034
    %v4037 = vadd.f32 %v4027, %v4035
    %v4038 = vadd.f32 %v4028, %v4035
    %s4039 = scalar_lea.vmem %s9, 1
    %v4040 = vld [vmem:[%s4039] sm:$0x1]
    %s4041 = scalar_lea.vmem %s10, 1
    %v4042 = vld [vmem:[%s4041] sm:$0x1]
    %v4043 = vsel %vm86, %v4037, 0.0
    %4044 = vadd.xlane.f32.xlu0 %v4043
    %v4045 = vpop.xlane.xlu0 %4044
    %v4046 = vsel %vm86, %v4038, 0.0
    %4047 = vadd.xlane.f32.xlu0 %v4046
    %v4048 = vpop.xlane.xlu0 %4047
    %v4049 = vmul.f32 %v4045, %v93
    %v4050 = vmul.f32 %v4048, %v93
    %v4051 = vsub.f32 %v4037, %v4049
    %v4052 = vsub.f32 %v4038, %v4050
    %v4053 = vmul.f32 %v4051, %v4051
    %v4054 = vmul.f32 %v4052, %v4052
    %v4055 = vsel %vm86, %v4053, 0.0
    %4056 = vadd.xlane.f32.xlu0 %v4055
    %v4057 = vpop.xlane.xlu0 %4056
    %v4058 = vsel %vm86, %v4054, 0.0
    %4059 = vadd.xlane.f32.xlu0 %v4058
    %v4060 = vpop.xlane.xlu0 %4059
    %v4061 = vmul.f32 %v4057, %v93
    %v4062 = vmul.f32 %v4060, %v93
    %v4063 = vadd.f32 %v4061, 1e-05
    %v4064 = vadd.f32 %v4062, 1e-05
    %v4065 = vrsqrt.pop %v4063
    %v4066 = vrsqrt.pop %v4064
    %v4067 = vmul.f32 %v4051, %v4065
    %v4068 = vmul.f32 %v4052, %v4066
    %v4070 = vlaneseq
    %v4071 = vshrl.u32 %v4070, 7
    %v4072 = vsub.s32 0, %v4071
    %v4073 = vrot.slane %v4040, %v4072
    %v4075 = vmul.f32 %v4067, %v4073
    %v4076 = vmul.f32 %v4068, %v4073
    %v4078 = vlaneseq
    %v4079 = vshrl.u32 %v4078, 7
    %v4080 = vsub.s32 0, %v4079
    %v4081 = vrot.slane %v4042, %v4080
    %v4083 = vadd.f32 %v4075, %v4081
    %v4084 = vadd.f32 %v4076, %v4081
    %s4085 = scalar_lea.vmem %s11, 128
    %v4086 = vld [vmem:[%s4085] sm:$0xff]
    %v4087 = vld [vmem:[%s4085 + $0x8] sm:$0xff]
    %v4088 = vld [vmem:[%s4085 + $0x10] sm:$0xff]
    %v4089 = vld [vmem:[%s4085 + $0x18] sm:$0xff]
    %v4090 = vld [vmem:[%s4085 + $0x20] sm:$0xff]
    %v4091 = vld [vmem:[%s4085 + $0x28] sm:$0xff]
    %v4092 = vld [vmem:[%s4085 + $0x30] sm:$0xff]
    %v4093 = vld [vmem:[%s4085 + $0x38] sm:$0xff]
    %v4094 = vld [vmem:[%s4085 + $0x40] sm:$0xff]
    %v4095 = vld [vmem:[%s4085 + $0x48] sm:$0xff]
    %v4096 = vld [vmem:[%s4085 + $0x50] sm:$0xff]
    %v4097 = vld [vmem:[%s4085 + $0x58] sm:$0xff]
    %v4098 = vld [vmem:[%s4085 + $0x60] sm:$0xff]
    %v4099 = vld [vmem:[%s4085 + $0x68] sm:$0xff]
    %v4100 = vld [vmem:[%s4085 + $0x70] sm:$0xff]
    %v4101 = vld [vmem:[%s4085 + $0x78] sm:$0xff]
    %s4102 = scalar_lea.vmem %s12, 2
    %v4103 = vld [vmem:[%s4102] sm:$0x3]
    %v4105 = vlaneseq
    %v4106 = vshrl.u32 %v4105, 7
    %v4107 = vsub.s32 0, %v4106
    %v4108 = vrot.slane %v4103, %v4107
    %v4109 = vlaneseq
    %v4110 = vshrl.u32 %v4109, 7
    %v4111 = vsub.s32 1, %v4110
    %v4112 = vrot.slane %v4103, %v4111
    %v4116 = vsel %vm86, %v4083, 0
    %v4119 = vsel %vm86, %v4084, 0
    %4121 = vmatprep.subr.mxu0 %v4087
    %4122 = vmatpush1.msra.mxu0 %v4086
    %4123 = vmatprep.subr.mxu0 %v4089
    %4124 = vmatpush1.msra.mxu0 %v4088
    %4125 = vmatprep.subr.mxu0 %v4091
    %4126 = vmatpush1.msra.mxu0 %v4090
    %4127 = vmatprep.subr.mxu0 %v4093
    %4128 = vmatpush1.msra.mxu0 %v4092
    %4129 = vmatprep.subr.mxu0 %v4095
    %4130 = vmatpush1.msra.mxu0 %v4094
    %4131 = vmatprep.subr.mxu0 %v4097
    %4132 = vmatpush1.msra.mxu0 %v4096
    %4133 = vmatprep.subr.mxu0 %v4099
    %4134 = vmatpush1.msra.mxu0 %v4098
    %4135 = vmatprep.subr.mxu0 %v4101
    %4136 = vmatpush1.msra.mxu0 %v4100
    %4137 = vmatprep.subr.mxu0 0.0
    %4138 = vmatpush1.msra.mxu0 0.0
    %4139 = vmatprep.subr.mxu0 0.0
    %4140 = vmatpush1.msra.mxu0 0.0
    %4141 = vmatprep.subr.mxu0 0.0
    %4142 = vmatpush1.msra.mxu0 0.0
    %4143 = vmatprep.subr.mxu0 0.0
    %4144 = vmatpush1.msra.mxu0 0.0
    %4145 = vmatprep.subr.mxu0 0.0
    %4146 = vmatpush1.msra.mxu0 0.0
    %4147 = vmatprep.subr.mxu0 0.0
    %4148 = vmatpush1.msra.mxu0 0.0
    %4149 = vmatprep.subr.mxu0 0.0
    %4150 = vmatpush1.msra.mxu0 0.0
    %4151 = vmatprep.subr.mxu0 0.0
    %4152 = vmatpush1.msra.mxu0 0.0
    %4153 = vmatprep.subr.mxu0 0.0
    %4154 = vmatpush1.msra.mxu0 0.0
    %4155 = vmatprep.subr.mxu0 0.0
    %4156 = vmatpush1.msra.mxu0 0.0
    %4157 = vmatprep.subr.mxu0 0.0
    %4158 = vmatpush1.msra.mxu0 0.0
    %4159 = vmatprep.subr.mxu0 0.0
    %4160 = vmatpush1.msra.mxu0 0.0
    %4161 = vmatprep.subr.mxu0 0.0
    %4162 = vmatpush1.msra.mxu0 0.0
    %4163 = vmatprep.subr.mxu0 0.0
    %4164 = vmatpush1.msra.mxu0 0.0
    %4165 = vmatprep.subr.mxu0 0.0
    %4166 = vmatpush1.msra.mxu0 0.0
    %4167 = vmatprep.subr.mxu0 0.0
    %4168 = vmatpush1.msra.mxu0 0.0
    %4169 = vmatprep.subr.mxu0 0.0
    %4170 = vmatpush1.msra.mxu0 0.0
    %4171 = vmatprep.subr.mxu0 0.0
    %4172 = vmatpush1.msra.mxu0 0.0
    %4173 = vmatprep.subr.mxu0 0.0
    %4174 = vmatpush1.msra.mxu0 0.0
    %4175 = vmatprep.subr.mxu0 0.0
    %4176 = vmatpush1.msra.mxu0 0.0
    %4177 = vmatprep.subr.mxu0 0.0
    %4178 = vmatpush1.msra.mxu0 0.0
    %4179 = vmatprep.subr.mxu0 0.0
    %4180 = vmatpush1.msra.mxu0 0.0
    %4181 = vmatprep.subr.mxu0 0.0
    %4182 = vmatpush1.msra.mxu0 0.0
    %4183 = vmatprep.subr.mxu0 0.0
    %4184 = vmatpush1.msra.mxu0 0.0
    %4185 = vmatprep.mubr.f32.mxu0 0.0
    %4186 = vmatmul.mubr.f32.gmra.mrb[0].mxu0 %v4116
    %v4187 = vpop.f32.mrb[0].mxu0
    %v4188 = vadd.f32 %v4108, %v4187
    %v4189 = vpop.f32.mrb[0].mxu0
    %v4190 = vadd.f32 %v4112, %v4189
    %4191 = vmatprep.mubr.f32.mxu0 0.0
    %4192 = vmatmul.mubr.f32.gmra.mrb[0].mxu0 %v4119
    %v4193 = vpop.f32.mrb[0].mxu0
    %v4194 = vadd.f32 %v4108, %v4193
    %v4195 = vpop.f32.mrb[0].mxu0
    %v4196 = vadd.f32 %v4112, %v4195
    %4197 = vdwg.mxu0
    %v4198 = vmul.f32 %v4188, 1.702
    %v4199 = vmul.f32 %v4190, 1.702
    %v4200 = vmul.f32 %v4194, 1.702
    %v4201 = vmul.f32 %v4196, 1.702
    %v4202 = vxor.u32 %v4198, 2147483648
    %v4203 = vxor.u32 %v4199, 2147483648
    %v4204 = vxor.u32 %v4200, 2147483648
    %v4205 = vxor.u32 %v4201, 2147483648
    %v4206 = vmul.f32 %v4202, 1.442695
    %v4207 = vpow.pop %v4206
    %v4208 = vmul.f32 %v4203, 1.442695
    %v4209 = vpow.pop %v4208
    %v4210 = vmul.f32 %v4204, 1.442695
    %v4211 = vpow.pop %v4210
    %v4212 = vmul.f32 %v4205, 1.442695
    %v4213 = vpow.pop %v4212
    %v4214 = vadd.f32 %v4207, 1.0
    %v4215 = vadd.f32 %v4209, 1.0
    %v4216 = vadd.f32 %v4211, 1.0
    %v4217 = vadd.f32 %v4213, 1.0
    %v4218 = vrcp.pop %v4214
    %v4219 = vmul.f32 1.0, %v4218
    %v4220 = vrcp.pop %v4215
    %v4221 = vmul.f32 1.0, %v4220
    %v4222 = vrcp.pop %v4216
    %v4223 = vmul.f32 1.0, %v4222
    %v4224 = vrcp.pop %v4217
    %v4225 = vmul.f32 1.0, %v4224
    %v4226 = vmul.f32 %v4188, %v4219
    %v4227 = vmul.f32 %v4190, %v4221
    %v4228 = vmul.f32 %v4194, %v4223
    %v4229 = vmul.f32 %v4196, %v4225
    %s4230 = scalar_lea.vmem %s13, 256
    %v4231 = vld [vmem:[%s4230] sm:$0xff]
    %v4232 = vld [vmem:[%s4230 + $0x8] sm:$0xff]
    %v4233 = vld [vmem:[%s4230 + $0x10] sm:$0xff]
    %v4234 = vld [vmem:[%s4230 + $0x18] sm:$0xff]
    %v4235 = vld [vmem:[%s4230 + $0x20] sm:$0xff]
    %v4236 = vld [vmem:[%s4230 + $0x28] sm:$0xff]
    %v4237 = vld [vmem:[%s4230 + $0x30] sm:$0xff]
    %v4238 = vld [vmem:[%s4230 + $0x38] sm:$0xff]
    %v4239 = vld [vmem:[%s4230 + $0x40] sm:$0xff]
    %v4240 = vld [vmem:[%s4230 + $0x48] sm:$0xff]
    %v4241 = vld [vmem:[%s4230 + $0x50] sm:$0xff]
    %v4242 = vld [vmem:[%s4230 + $0x58] sm:$0xff]
    %v4243 = vld [vmem:[%s4230 + $0x60] sm:$0xff]
    %v4244 = vld [vmem:[%s4230 + $0x68] sm:$0xff]
    %v4245 = vld [vmem:[%s4230 + $0x70] sm:$0xff]
    %v4246 = vld [vmem:[%s4230 + $0x78] sm:$0xff]
    %v4247 = vld [vmem:[%s4230 + $0x80] sm:$0xff]
    %v4248 = vld [vmem:[%s4230 + $0x88] sm:$0xff]
    %v4249 = vld [vmem:[%s4230 + $0x90] sm:$0xff]
    %v4250 = vld [vmem:[%s4230 + $0x98] sm:$0xff]
    %v4251 = vld [vmem:[%s4230 + $0xa0] sm:$0xff]
    %v4252 = vld [vmem:[%s4230 + $0xa8] sm:$0xff]
    %v4253 = vld [vmem:[%s4230 + $0xb0] sm:$0xff]
    %v4254 = vld [vmem:[%s4230 + $0xb8] sm:$0xff]
    %v4255 = vld [vmem:[%s4230 + $0xc0] sm:$0xff]
    %v4256 = vld [vmem:[%s4230 + $0xc8] sm:$0xff]
    %v4257 = vld [vmem:[%s4230 + $0xd0] sm:$0xff]
    %v4258 = vld [vmem:[%s4230 + $0xd8] sm:$0xff]
    %v4259 = vld [vmem:[%s4230 + $0xe0] sm:$0xff]
    %v4260 = vld [vmem:[%s4230 + $0xe8] sm:$0xff]
    %v4261 = vld [vmem:[%s4230 + $0xf0] sm:$0xff]
    %v4262 = vld [vmem:[%s4230 + $0xf8] sm:$0xff]
    %4263 = vmatprep.subr.mxu0 0.0
    %4264 = vmatpush1.msra.mxu0 %v4231
    %4265 = vmatprep.subr.mxu0 0.0
    %4266 = vmatpush1.msra.mxu0 %v4232
    %4267 = vmatprep.subr.mxu0 0.0
    %4268 = vmatpush1.msra.mxu0 %v4233
    %4269 = vmatprep.subr.mxu0 0.0
    %4270 = vmatpush1.msra.mxu0 %v4234
    %4271 = vmatprep.subr.mxu0 0.0
    %4272 = vmatpush1.msra.mxu0 %v4235
    %4273 = vmatprep.subr.mxu0 0.0
    %4274 = vmatpush1.msra.mxu0 %v4236
    %4275 = vmatprep.subr.mxu0 0.0
    %4276 = vmatpush1.msra.mxu0 %v4237
    %4277 = vmatprep.subr.mxu0 0.0
    %4278 = vmatpush1.msra.mxu0 %v4238
    %4279 = vmatprep.subr.mxu0 0.0
    %4280 = vmatpush1.msra.mxu0 %v4239
    %4281 = vmatprep.subr.mxu0 0.0
    %4282 = vmatpush1.msra.mxu0 %v4240
    %4283 = vmatprep.subr.mxu0 0.0
    %4284 = vmatpush1.msra.mxu0 %v4241
    %4285 = vmatprep.subr.mxu0 0.0
    %4286 = vmatpush1.msra.mxu0 %v4242
    %4287 = vmatprep.subr.mxu0 0.0
    %4288 = vmatpush1.msra.mxu0 %v4243
    %4289 = vmatprep.subr.mxu0 0.0
    %4290 = vmatpush1.msra.mxu0 %v4244
    %4291 = vmatprep.subr.mxu0 0.0
    %4292 = vmatpush1.msra.mxu0 %v4245
    %4293 = vmatprep.subr.mxu0 0.0
    %4294 = vmatpush1.msra.mxu0 %v4246
    %4295 = vmatprep.subr.mxu0 0.0
    %4296 = vmatpush1.msra.mxu0 %v4247
    %4297 = vmatprep.subr.mxu0 0.0
    %4298 = vmatpush1.msra.mxu0 %v4248
    %4299 = vmatprep.subr.mxu0 0.0
    %4300 = vmatpush1.msra.mxu0 %v4249
    %4301 = vmatprep.subr.mxu0 0.0
    %4302 = vmatpush1.msra.mxu0 %v4250
    %4303 = vmatprep.subr.mxu0 0.0
    %4304 = vmatpush1.msra.mxu0 %v4251
    %4305 = vmatprep.subr.mxu0 0.0
    %4306 = vmatpush1.msra.mxu0 %v4252
    %4307 = vmatprep.subr.mxu0 0.0
    %4308 = vmatpush1.msra.mxu0 %v4253
    %4309 = vmatprep.subr.mxu0 0.0
    %4310 = vmatpush1.msra.mxu0 %v4254
    %4311 = vmatprep.subr.mxu0 0.0
    %4312 = vmatpush1.msra.mxu0 %v4255
    %4313 = vmatprep.subr.mxu0 0.0
    %4314 = vmatpush1.msra.mxu0 %v4256
    %4315 = vmatprep.subr.mxu0 0.0
    %4316 = vmatpush1.msra.mxu0 %v4257
    %4317 = vmatprep.subr.mxu0 0.0
    %4318 = vmatpush1.msra.mxu0 %v4258
    %4319 = vmatprep.subr.mxu0 0.0
    %4320 = vmatpush1.msra.mxu0 %v4259
    %4321 = vmatprep.subr.mxu0 0.0
    %4322 = vmatpush1.msra.mxu0 %v4260
    %4323 = vmatprep.subr.mxu0 0.0
    %4324 = vmatpush1.msra.mxu0 %v4261
    %4325 = vmatprep.subr.mxu0 0.0
    %4326 = vmatpush1.msra.mxu0 %v4262
    %4327 = vmatprep.mubr.f32.mxu0 %v4227
    %4328 = vmatmul.mubr.f32.gmra.mrb[0].mxu0 %v4226
    %v4329 = vpop.f32.mrb[0].mxu0
    %v4330 = vadd.f32 0.0, %v4329
    %v4331 = vpop.f32.mrb[0].mxu0
    %4332 = vmatprep.mubr.f32.mxu0 %v4229
    %4333 = vmatmul.mubr.f32.gmra.mrb[0].mxu0 %v4228
    %v4334 = vpop.f32.mrb[0].mxu0
    %v4335 = vadd.f32 0.0, %v4334
    %v4336 = vpop.f32.mrb[0].mxu0
    %4337 = vdwg.mxu0
    %v4338 = vadd.f32 %v4037, %v4330
    %v4339 = vadd.f32 %v4038, %v4335
    %s4340 = scalar_lea.vmem %s14, 1
    %v4341 = vld [vmem:[%s4340] sm:$0x1]
    %v4343 = vlaneseq
    %v4344 = vshrl.u32 %v4343, 7
    %v4345 = vsub.s32 0, %v4344
    %v4346 = vrot.slane %v4341, %v4345
    %v4348 = vadd.f32 %v4338, %v4346
    %v4349 = vadd.f32 %v4339, %v4346
    %4350 = vst.msk [vmem:[#allocation2] sm:$0xff] %vm86, %v4348
    %4351 = vst.msk [vmem:[#allocation2 + $0x8] sm:$0xff] %vm86, %v4349
    %s4352 = sld [smem:[#allocation3]]
    %s4353 = scalar_lea.vmem [#allocation2], %s4352
    %v4354 = vld [vmem:[%s4353] sm:$0x1]
    %v4355 = vld [vmem:[%s15] sm:$0x1]
    %v4356 = vld [vmem:[%s16] sm:$0x1]
    %vm4357 = vcmask 516096
    %v4358 = vsel %vm4357, %v4354, 0.0
    %4359 = vadd.xlane.f32.xlu0 %v4358
    %v4360 = vpop.xlane.xlu0 %4359
    %v4361 = vmul.f32 %v4360, %v93
    %v4362 = vsub.f32 %v4354, %v4361
    %v4363 = vmul.f32 %v4362, %v4362
    %v4364 = vsel %vm4357, %v4363, 0.0
    %4365 = vadd.xlane.f32.xlu0 %v4364
    %v4366 = vpop.xlane.xlu0 %4365
    %v4367 = vmul.f32 %v4366, %v93
    %v4368 = vadd.f32 %v4367, 1e-05
    %v4369 = vrsqrt.pop %v4368
    %v4370 = vmul.f32 %v4362, %v4369
    %v4371 = vmul.f32 %v4370, %v4355
    %v4372 = vadd.f32 %v4371, %v4356
    %v4373 = vld [vmem:[%s17] sm:$0xff]
    %v4374 = vld [vmem:[%s17 + $0x8] sm:$0xff]
    %v4375 = vld [vmem:[%s17 + $0x10] sm:$0xff]
    %v4376 = vld [vmem:[%s17 + $0x18] sm:$0xff]
    %v4377 = vld [vmem:[%s17 + $0x20] sm:$0xff]
    %v4378 = vld [vmem:[%s17 + $0x28] sm:$0xff]
    %v4379 = vld [vmem:[%s17 + $0x30] sm:$0xff]
    %v4380 = vld [vmem:[%s17 + $0x38] sm:$0xff]
    %v4382 = vsel %vm86, %v4372, 0
    %4384 = vmatprep.subr.mxu0 0.0
    %4385 = vmatpush1.msra.mxu0 %v4373
    %4386 = vmatprep.subr.mxu0 0.0
    %4387 = vmatpush1.msra.mxu0 %v4374
    %4388 = vmatprep.subr.mxu0 0.0
    %4389 = vmatpush1.msra.mxu0 %v4375
    %4390 = vmatprep.subr.mxu0 0.0
    %4391 = vmatpush1.msra.mxu0 %v4376
    %4392 = vmatprep.subr.mxu0 0.0
    %4393 = vmatpush1.msra.mxu0 %v4377
    %4394 = vmatprep.subr.mxu0 0.0
    %4395 = vmatpush1.msra.mxu0 %v4378
    %4396 = vmatprep.subr.mxu0 0.0
    %4397 = vmatpush1.msra.mxu0 %v4379
    %4398 = vmatprep.subr.mxu0 0.0
    %4399 = vmatpush1.msra.mxu0 %v4380
    %4400 = vmatprep.subr.mxu0 0.0
    %4401 = vmatpush1.msra.mxu0 0.0
    %4402 = vmatprep.subr.mxu0 0.0
    %4403 = vmatpush1.msra.mxu0 0.0
    %4404 = vmatprep.subr.mxu0 0.0
    %4405 = vmatpush1.msra.mxu0 0.0
    %4406 = vmatprep.subr.mxu0 0.0
    %4407 = vmatpush1.msra.mxu0 0.0
    %4408 = vmatprep.subr.mxu0 0.0
    %4409 = vmatpush1.msra.mxu0 0.0
    %4410 = vmatprep.subr.mxu0 0.0
    %4411 = vmatpush1.msra.mxu0 0.0
    %4412 = vmatprep.subr.mxu0 0.0
    %4413 = vmatpush1.msra.mxu0 0.0
    %4414 = vmatprep.subr.mxu0 0.0
    %4415 = vmatpush1.msra.mxu0 0.0
    %4416 = vmatprep.subr.mxu0 0.0
    %4417 = vmatpush1.msra.mxu0 0.0
    %4418 = vmatprep.subr.mxu0 0.0
    %4419 = vmatpush1.msra.mxu0 0.0
    %4420 = vmatprep.subr.mxu0 0.0
    %4421 = vmatpush1.msra.mxu0 0.0
    %4422 = vmatprep.subr.mxu0 0.0
    %4423 = vmatpush1.msra.mxu0 0.0
    %4424 = vmatprep.subr.mxu0 0.0
    %4425 = vmatpush1.msra.mxu0 0.0
    %4426 = vmatprep.subr.mxu0 0.0
    %4427 = vmatpush1.msra.mxu0 0.0
    %4428 = vmatprep.subr.mxu0 0.0
    %4429 = vmatpush1.msra.mxu0 0.0
    %4430 = vmatprep.subr.mxu0 0.0
    %4431 = vmatpush1.msra.mxu0 0.0
    %4432 = vmatprep.subr.mxu0 0.0
    %4433 = vmatpush1.msra.mxu0 0.0
    %4434 = vmatprep.subr.mxu0 0.0
    %4435 = vmatpush1.msra.mxu0 0.0
    %4436 = vmatprep.subr.mxu0 0.0
    %4437 = vmatpush1.msra.mxu0 0.0
    %4438 = vmatprep.subr.mxu0 0.0
    %4439 = vmatpush1.msra.mxu0 0.0
    %4440 = vmatprep.subr.mxu0 0.0
    %4441 = vmatpush1.msra.mxu0 0.0
    %4442 = vmatprep.subr.mxu0 0.0
    %4443 = vmatpush1.msra.mxu0 0.0
    %4444 = vmatprep.subr.mxu0 0.0
    %4445 = vmatpush1.msra.mxu0 0.0
    %4446 = vmatprep.subr.mxu0 0.0
    %4447 = vmatpush1.msra.mxu0 0.0
    %4448 = vmatprep.mubr.f32.mxu0 0.0
    %4449 = vmatmul.mubr.f32.gmra.mrb[0].mxu0 %v4382
    %v4450 = vpop.f32.mrb[0].mxu0
    %v4451 = vadd.f32 0.0, %v4450
    %v4452 = vpop.f32.mrb[0].mxu0
    %4453 = vdwg.mxu0
    %4454 = vst [vmem:[#allocation6] sm:$0x1] %v4451
    %s4455 = sld [smem:[#allocation3 + $0x1]]
    %s4456 = sadd.s32 %s4455, 8
    %s4457 = scalar_lea.vmem [#allocation2], %s4456
    %v4458 = vld [vmem:[%s4457] sm:$0x1]
    %v4459 = vld [vmem:[%s15] sm:$0x1]
    %v4460 = vld [vmem:[%s16] sm:$0x1]
    %v4461 = vsel %vm4357, %v4458, 0.0
    %4462 = vadd.xlane.f32.xlu0 %v4461
    %v4463 = vpop.xlane.xlu0 %4462
    %v4464 = vmul.f32 %v4463, %v93
    %v4465 = vsub.f32 %v4458, %v4464
    %v4466 = vmul.f32 %v4465, %v4465
    %v4467 = vsel %vm4357, %v4466, 0.0
    %4468 = vadd.xlane.f32.xlu0 %v4467
    %v4469 = vpop.xlane.xlu0 %4468
    %v4470 = vmul.f32 %v4469, %v93
    %v4471 = vadd.f32 %v4470, 1e-05
    %v4472 = vrsqrt.pop %v4471
    %v4473 = vmul.f32 %v4465, %v4472
    %v4474 = vmul.f32 %v4473, %v4459
    %v4475 = vadd.f32 %v4474, %v4460
    %v4476 = vld [vmem:[%s17] sm:$0xff]
    %v4477 = vld [vmem:[%s17 + $0x8] sm:$0xff]
    %v4478 = vld [vmem:[%s17 + $0x10] sm:$0xff]
    %v4479 = vld [vmem:[%s17 + $0x18] sm:$0xff]
    %v4480 = vld [vmem:[%s17 + $0x20] sm:$0xff]
    %v4481 = vld [vmem:[%s17 + $0x28] sm:$0xff]
    %v4482 = vld [vmem:[%s17 + $0x30] sm:$0xff]
    %v4483 = vld [vmem:[%s17 + $0x38] sm:$0xff]
    %v4485 = vsel %vm86, %v4475, 0
    %4487 = vmatprep.subr.mxu0 0.0
    %4488 = vmatpush1.msra.mxu0 %v4476
    %4489 = vmatprep.subr.mxu0 0.0
    %4490 = vmatpush1.msra.mxu0 %v4477
    %4491 = vmatprep.subr.mxu0 0.0
    %4492 = vmatpush1.msra.mxu0 %v4478
    %4493 = vmatprep.subr.mxu0 0.0
    %4494 = vmatpush1.msra.mxu0 %v4479
    %4495 = vmatprep.subr.mxu0 0.0
    %4496 = vmatpush1.msra.mxu0 %v4480
    %4497 = vmatprep.subr.mxu0 0.0
    %4498 = vmatpush1.msra.mxu0 %v4481
    %4499 = vmatprep.subr.mxu0 0.0
    %4500 = vmatpush1.msra.mxu0 %v4482
    %4501 = vmatprep.subr.mxu0 0.0
    %4502 = vmatpush1.msra.mxu0 %v4483
    %4503 = vmatprep.subr.mxu0 0.0
    %4504 = vmatpush1.msra.mxu0 0.0
    %4505 = vmatprep.subr.mxu0 0.0
    %4506 = vmatpush1.msra.mxu0 0.0
    %4507 = vmatprep.subr.mxu0 0.0
    %4508 = vmatpush1.msra.mxu0 0.0
    %4509 = vmatprep.subr.mxu0 0.0
    %4510 = vmatpush1.msra.mxu0 0.0
    %4511 = vmatprep.subr.mxu0 0.0
    %4512 = vmatpush1.msra.mxu0 0.0
    %4513 = vmatprep.subr.mxu0 0.0
    %4514 = vmatpush1.msra.mxu0 0.0
    %4515 = vmatprep.subr.mxu0 0.0
    %4516 = vmatpush1.msra.mxu0 0.0
    %4517 = vmatprep.subr.mxu0 0.0
    %4518 = vmatpush1.msra.mxu0 0.0
    %4519 = vmatprep.subr.mxu0 0.0
    %4520 = vmatpush1.msra.mxu0 0.0
    %4521 = vmatprep.subr.mxu0 0.0
    %4522 = vmatpush1.msra.mxu0 0.0
    %4523 = vmatprep.subr.mxu0 0.0
    %4524 = vmatpush1.msra.mxu0 0.0
    %4525 = vmatprep.subr.mxu0 0.0
    %4526 = vmatpush1.msra.mxu0 0.0
    %4527 = vmatprep.subr.mxu0 0.0
    %4528 = vmatpush1.msra.mxu0 0.0
    %4529 = vmatprep.subr.mxu0 0.0
    %4530 = vmatpush1.msra.mxu0 0.0
    %4531 = vmatprep.subr.mxu0 0.0
    %4532 = vmatpush1.msra.mxu0 0.0
    %4533 = vmatprep.subr.mxu0 0.0
    %4534 = vmatpush1.msra.mxu0 0.0
    %4535 = vmatprep.subr.mxu0 0.0
    %4536 = vmatpush1.msra.mxu0 0.0
    %4537 = vmatprep.subr.mxu0 0.0
    %4538 = vmatpush1.msra.mxu0 0.0
    %4539 = vmatprep.subr.mxu0 0.0
    %4540 = vmatpush1.msra.mxu0 0.0
    %4541 = vmatprep.subr.mxu0 0.0
    %4542 = vmatpush1.msra.mxu0 0.0
    %4543 = vmatprep.subr.mxu0 0.0
    %4544 = vmatpush1.msra.mxu0 0.0
    %4545 = vmatprep.subr.mxu0 0.0
    %4546 = vmatpush1.msra.mxu0 0.0
    %4547 = vmatprep.subr.mxu0 0.0
    %4548 = vmatpush1.msra.mxu0 0.0
    %4549 = vmatprep.subr.mxu0 0.0
    %4550 = vmatpush1.msra.mxu0 0.0
    %4551 = vmatprep.mubr.f32.mxu0 0.0
    %4552 = vmatmul.mubr.f32.gmra.mrb[0].mxu0 %v4485
    %v4553 = vpop.f32.mrb[0].mxu0
    %v4554 = vadd.f32 0.0, %v4553
    %v4555 = vpop.f32.mrb[0].mxu0
    %4556 = vdwg.mxu0
    %4557 = vst [vmem:[#allocation6 + $0x1] sm:$0x1] %v4554
    // Predicated region
    $region78: #{tpu_custom_call.1} parent=1 // pred_check
      _
    $region79: #{tpu_custom_call.1} parent=1 // pred_check_branch
      %4559 = sbr.rel (0) target = $region81
    $region80: #{tpu_custom_call.1} parent=1 // pred_region
      %s4561 = ssub.s32 32, 32
      %4562 = vsyncadd [#allocation4], %s4561
      %s4564 = sshll.u32 [#allocation6], 4
      %s4565 = int_to_ptr.vmem [resolvable:$true] %s4564
      %4567 = dma.vmem_to_hbm [thread:$0]  %s4565, 32, %s18, [#allocation4]
    $region81: #{tpu_custom_call.1} parent=1 // pred_fallthru
      _
    // Predicated region
    $region82: #{tpu_custom_call.1} parent=1 // pred_check
      _
    $region83: #{tpu_custom_call.1} parent=1 // pred_check_branch
      %4569 = sbr.rel (0) target = $region85
    $region84: #{tpu_custom_call.1} parent=1 // pred_region
      %4570 = dma.done [#allocation4], 32
    $region85: #{tpu_custom_call.1} parent=1 // pred_fallthru
      _
    %4571 = vsyncpa [#allocation4], 1
    %4572 = vsyncpa [#allocation5], 1

</llo_original>
